<compile_context>
chip_gen: v7x
topology: tpu7x:2x2x1
jax: 0.10.0
libtpu: 0.0.40
codegen_flags: <defaults>
</compile_context>

<pallas_src>
import functools

import jax
import jax.numpy as jnp
from jax.experimental import pallas as pl
from jax.experimental.pallas import tpu as pltpu


def _temporal_attention_kernel(
    q_raw_ref,       # [TB, Dq]    bf16  cat(node_features, node_time_features)
    kv_raw_ref,      # [TB, N, A]  bf16  cat(neighbor_feat, neighbor_time_feat, edge_feat)
    mask_ref,        # [TB, N]     f32   1 = valid neighbor, 0 = padding
    head_mask_ref,   # [H, A]      f32   block-diagonal head selector
    w_qf_ref,        # [Dq, A]     bf16  fused query_projection @ W_q_in
    b_qf_ref,        # [1, A]      f32
    w_kv_ref,        # [A, 2A]     bf16  [W_k_in | W_v_in]
    b_kv_ref,        # [1, 2A]     f32
    w_of_ref,        # [A, Opad]   bf16  fused W_out_proj @ W_output_layer (zero-padded)
    b_of_ref,        # [1, Opad]   f32
    out_ref,         # [TB, Opad]  f32
    *,
    n_heads: int,
):
    TB, N, A = kv_raw_ref.shape
    head_dim = A // n_heads
    scale = 1.0 / (head_dim ** 0.5)

    # ---- fused (query_projection ∘ MHA q in-proj): one GEMM --------------------
    q = (jnp.dot(q_raw_ref[...], w_qf_ref[...],
                 preferred_element_type=jnp.float32) + b_qf_ref[...])          # [TB, A] f32

    # ---- fused k/v in-projections: one GEMM over [TB*N, A] ---------------------
    kv2 = kv_raw_ref[...].reshape(TB * N, A)
    kvp = (jnp.dot(kv2, w_kv_ref[...],
                   preferred_element_type=jnp.float32) + b_kv_ref[...])        # [TB*N, 2A] f32
    k_in = kvp[:, :A].reshape(TB, N, A)
    v_in = kvp[:, A:].reshape(TB, N, A)

    # ---- multi-head attention, head-batched (no per-head lane slicing) ---------
    # q_bd[b, h, :] keeps only head h's feature block of q (block-diagonal trick),
    # so a single batched MXU einsum yields every head's scores at once.
    head_mask = head_mask_ref[...]                                             # [H, A]
    q_bd = (q * scale)[:, None, :] * head_mask[None, :, :]                     # [TB, H, A]
    scores = jnp.einsum('bha,bna->bhn', q_bd, k_in,
                        preferred_element_type=jnp.float32)                    # [TB, H, N]

    # key_padding_mask semantics: padded neighbors get -inf before softmax.
    # NOTE: a row whose mask is all zero softmaxes into a uniform distribution over
    # padding (PyTorch would produce NaN); callers guarantee >= 1 valid neighbor.
    valid = mask_ref[...][:, None, :] > 0.5                                    # [TB, 1, N]
    scores = jnp.where(valid, scores, jnp.float32(-1e30))

    m = jnp.max(scores, axis=-1, keepdims=True)
    p = jnp.exp(scores - m)
    denom = jnp.sum(p, axis=-1, keepdims=True)
    p = p * pl.reciprocal(denom, approx=True)                                  # softmax over N
    # TODO(synk): attention-weight dropout omitted (eval-mode semantics).

    # Weighted value sum for every (head, feature) pair, then keep each head's own
    # feature block via the same head mask -> exact per-head attention + concat.
    ctx = jnp.einsum('bhn,bna->bha', p, v_in,
                     preferred_element_type=jnp.float32)                       # [TB, H, A]
    attn = jnp.sum(ctx * head_mask[None, :, :], axis=1)                        # [TB, A]

    # ---- fused (MHA out-proj ∘ output_layer): one lane-dense GEMM --------------
    out = (jnp.dot(attn.astype(w_of_ref.dtype), w_of_ref[...],
                   preferred_element_type=jnp.float32) + b_of_ref[...])        # [TB, Opad]
    out_ref[...] = out.astype(out_ref.dtype)


def _default_tb_max():
    # v7x has 64 MiB VMEM per TensorCore (vs 128 MiB on v5e/v6e) -> smaller tiles.
    try:
        kind = jax.devices()[0].device_kind.lower()
        if "v7" in kind or "7x" in kind:
            return 128
    except Exception:
        pass
    return 256


def _pick_batch_tile(B, tb_max=None):
    if tb_max is None:
        tb_max = _default_tb_max()
    if B <= tb_max:
        return B
    start = tb_max - (tb_max % 8)
    for tb in range(start, 7, -8):   # multiple of 8, exact divisor of B
        if B % tb == 0:
            return tb
    return B                          # fallback: single tile


def temporal_attention_forward(
    node_features,            # [B, node_feat_dim]
    node_time_features,       # [B, time_feat_dim]
    neighbor_features,        # [B, N, node_feat_dim]
    neighbor_time_features,   # [B, N, time_feat_dim]
    edge_features,            # [B, N, edge_feat_dim]
    attention_mask,           # [B, N] float (1 valid, 0 pad)
    params,                   # dict of weights (pre-transposed to (in, out))
    n_heads=2,
    *,
    matmul_dtype=jnp.bfloat16,
    tb_max=None,
):
    B, N, _ = neighbor_features.shape

    # Glue: concatenations (same order as the PyTorch module).
    q_raw = jnp.concatenate([node_features, node_time_features], axis=1)            # [B, Dq]
    kv_raw = jnp.concatenate(
        [neighbor_features, neighbor_time_features, edge_features], axis=-1)        # [B, N, A]

    Dq = q_raw.shape[-1]
    A = kv_raw.shape[-1]
    O = params["w_out"].shape[-1]
    assert A % n_heads == 0
    head_dim = A // n_heads

    # ---- algebraic fusions (exact: no nonlinearity between the linear layers) ----
    w_qf = params["w_qproj"] @ params["w_q"]                                   # [Dq, A]
    b_qf = params["b_qproj"] @ params["w_q"] + params["b_q"]                   # [A]
    w_kv = jnp.concatenate([params["w_k"], params["w_v"]], axis=1)             # [A, 2A]
    b_kv = jnp.concatenate([params["b_k"], params["b_v"]], axis=0)             # [2A]
    w_of = params["w_o"] @ params["w_out"]                                     # [A, O]
    b_of = params["b_o"] @ params["w_out"] + params["b_out"]                   # [O]

    # Lane-dense output: pad O up to a multiple of 128; slice the padding off after.
    Opad = ((O + 127) // 128) * 128
    w_of = jnp.pad(w_of, ((0, 0), (0, Opad - O)))
    b_of = jnp.pad(b_of, (0, Opad - O))

    # Block-diagonal head selector [H, A].
    head_mask = (jnp.arange(A)[None, :] // head_dim
                 == jnp.arange(n_heads)[:, None]).astype(jnp.float32)

    # Dtypes: MXU operands in bf16 (f32 accumulation); masks / biases stay f32.
    q_raw = q_raw.astype(matmul_dtype)
    kv_raw = kv_raw.astype(matmul_dtype)
    mask = attention_mask.astype(jnp.float32)
    w_qf = w_qf.astype(matmul_dtype)
    w_kv = w_kv.astype(matmul_dtype)
    w_of = w_of.astype(matmul_dtype)
    b_qf = b_qf.reshape(1, A).astype(jnp.float32)
    b_kv = b_kv.reshape(1, 2 * A).astype(jnp.float32)
    b_of = b_of.reshape(1, Opad).astype(jnp.float32)

    # ---- batch-tiled grid ----
    tb = _pick_batch_tile(B, tb_max)
    grid = (B // tb,) if B % tb == 0 else (1,)
    if grid == (1,):
        tb = B

    def const(shape):
        nd = len(shape)
        return pl.BlockSpec(shape, lambda i, _nd=nd: (0,) * _nd)

    kernel = functools.partial(_temporal_attention_kernel, n_heads=n_heads)

    out_padded = pl.pallas_call(
        kernel,
        out_shape=jax.ShapeDtypeStruct((B, Opad), jnp.float32),
        grid=grid,
        in_specs=[
            pl.BlockSpec((tb, Dq), lambda i: (i, 0)),        # q_raw
            pl.BlockSpec((tb, N, A), lambda i: (i, 0, 0)),   # kv_raw
            pl.BlockSpec((tb, N), lambda i: (i, 0)),         # mask
            const((n_heads, A)),                             # head_mask (VMEM-resident)
            const((Dq, A)), const((1, A)),                   # fused q weights
            const((A, 2 * A)), const((1, 2 * A)),            # fused k/v weights
            const((A, Opad)), const((1, Opad)),              # fused output weights
        ],
        out_specs=pl.BlockSpec((tb, Opad), lambda i: (i, 0)),
        compiler_params=pltpu.CompilerParams(
            dimension_semantics=("parallel",),               # megacore split on v7x
            vmem_limit_bytes=64 * 1024 * 1024,               # raise v5e's 16 MiB default
        ),
    )(q_raw, kv_raw, mask, head_mask, w_qf, b_qf, w_kv, b_kv, w_of, b_of)

    return out_padded[:, :O]


def init_params(key, node_feat_dim, edge_feat_dim, time_feat_dim, output_dim):
    query_dim = node_feat_dim + time_feat_dim
    key_dim = node_feat_dim + edge_feat_dim + time_feat_dim
    attention_dim = max(query_dim, key_dim)
    assert key_dim == attention_dim, "synthetic config keeps key/value projections as Identity"

    ks = jax.random.split(key, 12)
    s = 0.05

    def w(k, shape):
        return jax.random.normal(k, shape, dtype=jnp.float32) * s

    return {
        # query_projection: Linear(query_dim -> attention_dim)
        "w_qproj": w(ks[0], (query_dim, attention_dim)),
        "b_qproj": w(ks[1], (attention_dim,)),
        # nn.MultiheadAttention in_proj (split q/k/v) and out_proj
        "w_q": w(ks[2], (attention_dim, attention_dim)),
        "b_q": w(ks[3], (attention_dim,)),
        "w_k": w(ks[4], (attention_dim, attention_dim)),
        "b_k": w(ks[5], (attention_dim,)),
        "w_v": w(ks[6], (attention_dim, attention_dim)),
        "b_v": w(ks[7], (attention_dim,)),
        "w_o": w(ks[8], (attention_dim, attention_dim)),
        "b_o": w(ks[9], (attention_dim,)),
        # output_layer: Linear(attention_dim -> output_dim)
        "w_out": w(ks[10], (attention_dim, output_dim)),
        "b_out": w(ks[11], (output_dim,)),
    }


if __name__ == "__main__":
    # Small, module-consistent shapes (exercises a 2-step batch grid).
    B, N = 32, 8
    node_feat_dim, edge_feat_dim, time_feat_dim = 16, 8, 8
    output_dim = 32
    n_heads = 2

    root = jax.random.PRNGKey(0)
    kp, k1, k2, k3, k4, k5, k6 = jax.random.split(root, 7)

    params = init_params(kp, node_feat_dim, edge_feat_dim, time_feat_dim, output_dim)

    node_features = jax.random.normal(k1, (B, node_feat_dim), dtype=jnp.float32)
    node_time_features = jax.random.normal(k2, (B, time_feat_dim), dtype=jnp.float32)
    neighbor_features = jax.random.normal(k3, (B, N, node_feat_dim), dtype=jnp.float32)
    neighbor_time_features = jax.random.normal(k4, (B, N, time_feat_dim), dtype=jnp.float32)
    edge_features = jax.random.normal(k5, (B, N, edge_feat_dim), dtype=jnp.float32)

    # attention_mask: 1 = valid neighbor, 0 = padding; guarantee >= 1 valid per row.
    attention_mask = (jax.random.uniform(k6, (B, N)) > 0.3).astype(jnp.float32)
    attention_mask = attention_mask.at[:, 0].set(1.0)

    out = temporal_attention_forward(
        node_features, node_time_features,
        neighbor_features, neighbor_time_features, edge_features,
        attention_mask, params, n_heads=n_heads,
        tb_max=16,   # forces a 2-step grid at this small demo batch
    )
    out = jax.block_until_ready(out)
    assert out.shape == (B, output_dim)
    print("KERNEL_OK")
</pallas_src>

<mosaic_0001>
module attributes {stable_mosaic.version = 11 : i64} {
  func.func @_temporal_attention_kernel(%arg0: i32, %arg1: memref<16x24xbf16, #tpu.memory_space<vmem>>, %arg2: memref<16x8x32xbf16, #tpu.memory_space<vmem>>, %arg3: memref<16x8xf32, #tpu.memory_space<vmem>>, %arg4: memref<2x32xf32, #tpu.memory_space<vmem>>, %arg5: memref<24x32xbf16, #tpu.memory_space<vmem>>, %arg6: memref<1x32xf32, #tpu.memory_space<vmem>>, %arg7: memref<32x64xbf16, #tpu.memory_space<vmem>>, %arg8: memref<1x64xf32, #tpu.memory_space<vmem>>, %arg9: memref<32x128xbf16, #tpu.memory_space<vmem>>, %arg10: memref<1x128xf32, #tpu.memory_space<vmem>>, %arg11: memref<16x128xf32, #tpu.memory_space<vmem>>) attributes {dimension_semantics = [#tpu.dimension_semantics<parallel>], iteration_bounds = array<i64: 2>, scalar_prefetch = 0 : i64, scratch_operands = 0 : i64, tpu.core_type = #tpu.core_type<tc>, window_params = [{transform_indices = @transform_0, window_bounds = array<i64: 16, 24>}, {transform_indices = @transform_1, window_bounds = array<i64: 16, 8, 32>}, {transform_indices = @transform_2, window_bounds = array<i64: 16, 8>}, {pipeline_mode = #tpu.pipeline_mode<synchronous>, transform_indices = @transform_3, window_bounds = array<i64: 2, 32>}, {pipeline_mode = #tpu.pipeline_mode<synchronous>, transform_indices = @transform_4, window_bounds = array<i64: 24, 32>}, {pipeline_mode = #tpu.pipeline_mode<synchronous>, transform_indices = @transform_5, window_bounds = array<i64: 1, 32>}, {pipeline_mode = #tpu.pipeline_mode<synchronous>, transform_indices = @transform_6, window_bounds = array<i64: 32, 64>}, {pipeline_mode = #tpu.pipeline_mode<synchronous>, transform_indices = @transform_7, window_bounds = array<i64: 1, 64>}, {pipeline_mode = #tpu.pipeline_mode<synchronous>, transform_indices = @transform_8, window_bounds = array<i64: 32, 128>}, {pipeline_mode = #tpu.pipeline_mode<synchronous>, transform_indices = @transform_9, window_bounds = array<i64: 1, 128>}, {transform_indices = @transform_10, window_bounds = array<i64: 16, 128>}]} {
    %c0 = arith.constant 0 : index
    %c0_0 = arith.constant 0 : index
    %0 = vector.load %arg1[%c0, %c0_0] : memref<16x24xbf16, #tpu.memory_space<vmem>>, vector<16x24xbf16>
    %c0_1 = arith.constant 0 : index
    %c0_2 = arith.constant 0 : index
    %1 = vector.load %arg5[%c0_1, %c0_2] : memref<24x32xbf16, #tpu.memory_space<vmem>>, vector<24x32xbf16>
    %cst = arith.constant dense<0.000000e+00> : vector<16x32xf32>
    %2 = tpu.matmul %0, %1, %cst {dimension_numbers = #tpu.dot_dimension_numbers<[1], [0], [0], [1], [0, 0, 1, 1], [], []>} : vector<16x24xbf16>, vector<24x32xbf16>, vector<16x32xf32> -> vector<16x32xf32>
    %c0_3 = arith.constant 0 : index
    %c0_4 = arith.constant 0 : index
    %3 = vector.load %arg6[%c0_3, %c0_4] : memref<1x32xf32, #tpu.memory_space<vmem>>, vector<1x32xf32>
    %4 = vector.broadcast %3 : vector<1x32xf32> to vector<16x32xf32>
    %5 = arith.addf %2, %4 : vector<16x32xf32>
    %c0_5 = arith.constant 0 : index
    %c0_6 = arith.constant 0 : index
    %c0_7 = arith.constant 0 : index
    %6 = vector.load %arg2[%c0_5, %c0_6, %c0_7] : memref<16x8x32xbf16, #tpu.memory_space<vmem>>, vector<16x8x32xbf16>
    %7 = vector.shape_cast %6 : vector<16x8x32xbf16> to vector<128x32xbf16>
    %c0_8 = arith.constant 0 : index
    %c0_9 = arith.constant 0 : index
    %8 = vector.load %arg7[%c0_8, %c0_9] : memref<32x64xbf16, #tpu.memory_space<vmem>>, vector<32x64xbf16>
    %cst_10 = arith.constant dense<0.000000e+00> : vector<128x64xf32>
    %9 = tpu.matmul %7, %8, %cst_10 {dimension_numbers = #tpu.dot_dimension_numbers<[1], [0], [0], [1], [0, 0, 1, 1], [], []>} : vector<128x32xbf16>, vector<32x64xbf16>, vector<128x64xf32> -> vector<128x64xf32>
    %c0_11 = arith.constant 0 : index
    %c0_12 = arith.constant 0 : index
    %10 = vector.load %arg8[%c0_11, %c0_12] : memref<1x64xf32, #tpu.memory_space<vmem>>, vector<1x64xf32>
    %11 = vector.broadcast %10 : vector<1x64xf32> to vector<128x64xf32>
    %12 = arith.addf %9, %11 : vector<128x64xf32>
    %13 = vector.extract_strided_slice %12 {offsets = [0, 0], sizes = [128, 32], strides = [1, 1]} : vector<128x64xf32> to vector<128x32xf32>
    %14 = vector.shape_cast %13 : vector<128x32xf32> to vector<16x8x32xf32>
    %15 = vector.extract_strided_slice %12 {offsets = [0, 32], sizes = [128, 32], strides = [1, 1]} : vector<128x64xf32> to vector<128x32xf32>
    %16 = vector.shape_cast %15 : vector<128x32xf32> to vector<16x8x32xf32>
    %c0_13 = arith.constant 0 : index
    %c0_14 = arith.constant 0 : index
    %17 = vector.load %arg4[%c0_13, %c0_14] : memref<2x32xf32, #tpu.memory_space<vmem>>, vector<2x32xf32>
    %cst_15 = arith.constant 2.500000e-01 : f32
    %18 = vector.broadcast %cst_15 : f32 to vector<16x32xf32>
    %19 = arith.mulf %5, %18 : vector<16x32xf32>
    %20 = vector.shape_cast %19 : vector<16x32xf32> to vector<16x1x32xf32>
    %21 = vector.shape_cast %17 : vector<2x32xf32> to vector<1x2x32xf32>
    %22 = vector.broadcast %20 : vector<16x1x32xf32> to vector<16x2x32xf32>
    %23 = vector.broadcast %21 : vector<1x2x32xf32> to vector<16x2x32xf32>
    %24 = arith.mulf %22, %23 : vector<16x2x32xf32>
    "tpu.trace_start"() <{level = 10 : i32, message = "bha,bna->bhn"}> : () -> ()
    %cst_16 = arith.constant dense<0.000000e+00> : vector<16x2x8xf32>
    %25 = tpu.matmul %24, %14, %cst_16 {dimension_numbers = #tpu.dot_dimension_numbers<[2], [2], [1], [1], [0, 0, 0, 1, 1, 1], [0], [0]>} : vector<16x2x32xf32>, vector<16x8x32xf32>, vector<16x2x8xf32> -> vector<16x2x8xf32>
    "tpu.trace_stop"() : () -> ()
    %c0_17 = arith.constant 0 : index
    %c0_18 = arith.constant 0 : index
    %26 = vector.load %arg3[%c0_17, %c0_18] : memref<16x8xf32, #tpu.memory_space<vmem>>, vector<16x8xf32>
    %27 = vector.shape_cast %26 : vector<16x8xf32> to vector<16x1x8xf32>
    %cst_19 = arith.constant 5.000000e-01 : f32
    %28 = vector.broadcast %cst_19 : f32 to vector<16x1x8xf32>
    %29 = arith.cmpf ogt, %27, %28 : vector<16x1x8xf32>
    %cst_20 = arith.constant -1.000000e+30 : f32
    %30 = vector.shape_cast %29 : vector<16x1x8xi1> to vector<16x1x8xi1>
    %31 = vector.broadcast %30 : vector<16x1x8xi1> to vector<16x2x8xi1>
    %32 = vector.broadcast %cst_20 : f32 to vector<16x2x8xf32>
    %33 = arith.select %31, %25, %32 : vector<16x2x8xi1>, vector<16x2x8xf32>
    %cst_21 = arith.constant dense<0xFF800000> : vector<16x2xf32>
    %34 = vector.multi_reduction <maximumf>, %33, %cst_21 [2] : vector<16x2x8xf32> to vector<16x2xf32>
    %35 = vector.shape_cast %34 : vector<16x2xf32> to vector<16x2x1xf32>
    %36 = vector.broadcast %35 : vector<16x2x1xf32> to vector<16x2x8xf32>
    %37 = arith.subf %33, %36 : vector<16x2x8xf32>
    %38 = math.exp %37 : vector<16x2x8xf32>
    %cst_22 = arith.constant dense<0.000000e+00> : vector<16x2xf32>
    %39 = vector.multi_reduction <add>, %38, %cst_22 [2] : vector<16x2x8xf32> to vector<16x2xf32>
    %40 = vector.shape_cast %39 : vector<16x2xf32> to vector<16x2x1xf32>
    %41 = tpu.reciprocal %40 {approx = true} : vector<16x2x1xf32> -> vector<16x2x1xf32>
    %42 = vector.broadcast %41 : vector<16x2x1xf32> to vector<16x2x8xf32>
    %43 = arith.mulf %38, %42 : vector<16x2x8xf32>
    "tpu.trace_start"() <{level = 10 : i32, message = "bhn,bna->bha"}> : () -> ()
    %cst_23 = arith.constant dense<0.000000e+00> : vector<16x2x32xf32>
    %44 = tpu.matmul %43, %16, %cst_23 {dimension_numbers = #tpu.dot_dimension_numbers<[2], [1], [1], [2], [0, 0, 0, 1, 1, 2], [0], [0]>} : vector<16x2x8xf32>, vector<16x8x32xf32>, vector<16x2x32xf32> -> vector<16x2x32xf32>
    "tpu.trace_stop"() : () -> ()
    %45 = vector.shape_cast %17 : vector<2x32xf32> to vector<1x2x32xf32>
    %46 = vector.broadcast %45 : vector<1x2x32xf32> to vector<16x2x32xf32>
    %47 = arith.mulf %44, %46 : vector<16x2x32xf32>
    %cst_24 = arith.constant dense<0.000000e+00> : vector<16x32xf32>
    %48 = vector.multi_reduction <add>, %47, %cst_24 [1] : vector<16x2x32xf32> to vector<16x32xf32>
    %49 = arith.truncf %48 : vector<16x32xf32> to vector<16x32xbf16>
    %c0_25 = arith.constant 0 : index
    %c0_26 = arith.constant 0 : index
    %50 = vector.load %arg9[%c0_25, %c0_26] : memref<32x128xbf16, #tpu.memory_space<vmem>>, vector<32x128xbf16>
    %cst_27 = arith.constant dense<0.000000e+00> : vector<16x128xf32>
    %51 = tpu.matmul %49, %50, %cst_27 {dimension_numbers = #tpu.dot_dimension_numbers<[1], [0], [0], [1], [0, 0, 1, 1], [], []>} : vector<16x32xbf16>, vector<32x128xbf16>, vector<16x128xf32> -> vector<16x128xf32>
    %c0_28 = arith.constant 0 : index
    %c0_29 = arith.constant 0 : index
    %52 = vector.load %arg10[%c0_28, %c0_29] : memref<1x128xf32, #tpu.memory_space<vmem>>, vector<1x128xf32>
    %53 = vector.broadcast %52 : vector<1x128xf32> to vector<16x128xf32>
    %54 = arith.addf %51, %53 : vector<16x128xf32>
    %c0_30 = arith.constant 0 : index
    %c0_31 = arith.constant 0 : index
    %55 = vector.load %arg11[%c0_30, %c0_31] : memref<16x128xf32, #tpu.memory_space<vmem>>, vector<16x128xf32>
    tpu.vector_store %arg11[%c0_30, %c0_31], %54 {strides = array<i32>} : memref<16x128xf32, #tpu.memory_space<vmem>>, vector<16x128xf32>,
    return
  }
  func.func @transform_0(%arg0: i32) -> (i32, i32) {
    %c0_i32 = arith.constant 0 : i32
    %c0_i32_0 = arith.constant 0 : i32
    return %arg0, %c0_i32 : i32, i32
  }
  func.func @transform_1(%arg0: i32) -> (i32, i32, i32) {
    %c0_i32 = arith.constant 0 : i32
    %c0_i32_0 = arith.constant 0 : i32
    %c0_i32_1 = arith.constant 0 : i32
    return %arg0, %c0_i32, %c0_i32_0 : i32, i32, i32
  }
  func.func @transform_2(%arg0: i32) -> (i32, i32) {
    %c0_i32 = arith.constant 0 : i32
    %c0_i32_0 = arith.constant 0 : i32
    return %arg0, %c0_i32 : i32, i32
  }
  func.func @transform_3(%arg0: i32) -> (i32, i32) {
    %c0_i32 = arith.constant 0 : i32
    %c0_i32_0 = arith.constant 0 : i32
    %c0_i32_1 = arith.constant 0 : i32
    return %c0_i32, %c0_i32_0 : i32, i32
  }
  func.func @transform_4(%arg0: i32) -> (i32, i32) {
    %c0_i32 = arith.constant 0 : i32
    %c0_i32_0 = arith.constant 0 : i32
    %c0_i32_1 = arith.constant 0 : i32
    return %c0_i32, %c0_i32_0 : i32, i32
  }
  func.func @transform_5(%arg0: i32) -> (i32, i32) {
    %c0_i32 = arith.constant 0 : i32
    %c0_i32_0 = arith.constant 0 : i32
    %c0_i32_1 = arith.constant 0 : i32
    return %c0_i32, %c0_i32_0 : i32, i32
  }
  func.func @transform_6(%arg0: i32) -> (i32, i32) {
    %c0_i32 = arith.constant 0 : i32
    %c0_i32_0 = arith.constant 0 : i32
    %c0_i32_1 = arith.constant 0 : i32
    return %c0_i32, %c0_i32_0 : i32, i32
  }
  func.func @transform_7(%arg0: i32) -> (i32, i32) {
    %c0_i32 = arith.constant 0 : i32
    %c0_i32_0 = arith.constant 0 : i32
    %c0_i32_1 = arith.constant 0 : i32
    return %c0_i32, %c0_i32_0 : i32, i32
  }
  func.func @transform_8(%arg0: i32) -> (i32, i32) {
    %c0_i32 = arith.constant 0 : i32
    %c0_i32_0 = arith.constant 0 : i32
    %c0_i32_1 = arith.constant 0 : i32
    return %c0_i32, %c0_i32_0 : i32, i32
  }
  func.func @transform_9(%arg0: i32) -> (i32, i32) {
    %c0_i32 = arith.constant 0 : i32
    %c0_i32_0 = arith.constant 0 : i32
    %c0_i32_1 = arith.constant 0 : i32
    return %c0_i32, %c0_i32_0 : i32, i32
  }
  func.func @transform_10(%arg0: i32) -> (i32, i32) {
    %c0_i32 = arith.constant 0 : i32
    %c0_i32_0 = arith.constant 0 : i32
    return %arg0, %c0_i32 : i32, i32
  }
}

</mosaic_0001>

<llo_original>
// kernel: tpu_custom_call.1
$region0: #{tpu_custom_call.1}
  #allocation0 [shape = 'u32[]', space=smem, size = 0x4, offset = 0x4, fixed_abs, tag = 'smem constant byte address 0x4 - core index']
  #allocation1 [shape = 'u32[144,128]{1,0:T(1,128)}', space=vmem, size = 0x12000, scoped, tag = 'internal scratch']
  %s0 = inlined_call_operand.hbm [shape: bf16[32,24], index: 0, kind: input, shape index: {}]
  %s1 = inlined_call_operand.hbm [shape: bf16[32,8,32], index: 1, kind: input, shape index: {}]
  %s2 = inlined_call_operand.hbm [shape: f32[32,8], index: 2, kind: input, shape index: {}]
  %s3 = inlined_call_operand.hbm [shape: f32[2,32], index: 3, kind: input, shape index: {}]
  %s4 = inlined_call_operand.hbm [shape: bf16[24,32], index: 4, kind: input, shape index: {}]
  %s5 = inlined_call_operand.hbm [shape: f32[1,32], index: 5, kind: input, shape index: {}]
  %s6 = inlined_call_operand.hbm [shape: bf16[32,64], index: 6, kind: input, shape index: {}]
  %s7 = inlined_call_operand.hbm [shape: f32[1,64], index: 7, kind: input, shape index: {}]
  %s8 = inlined_call_operand.hbm [shape: bf16[32,128], index: 8, kind: input, shape index: {}]
  %s9 = inlined_call_operand.hbm [shape: f32[1,128], index: 9, kind: input, shape index: {}]
  %s10 = inlined_call_operand.hbm [shape: f32[32,128], index: 10, kind: output, shape index: {}]
  %s11 = sld [smem:[#allocation0]]
  $region113: #{tpu_custom_call.1} parent=0
    _
  %s13 = ssub.s32 1, %s11
  %s14 = scalar_select 0, %s13, %s11
  $region1: #{tpu_custom_call.1} parent=0
    #allocation2 [shape = 'u8[8192]{0}', space=vmem, size = 0x2000, scoped, tag = 'input window, operand 0']
    #allocation3 [shape = 's32[2]{0}', space=sflag, size = 0x8, scoped, tag = 'scoped memory for tpu_custom_call.1']
    #allocation4 [shape = 's32[2]{0}', space=sflag, size = 0x8, scoped, tag = 'scoped memory for tpu_custom_call.1']
    #allocation5 [shape = 'u8[65536]{0}', space=vmem, size = 0x10000, scoped, tag = 'input window, operand 1']
    #allocation6 [shape = 's32[2]{0}', space=sflag, size = 0x8, scoped, tag = 'scoped memory for tpu_custom_call.1']
    #allocation7 [shape = 'u8[16384]{0}', space=vmem, size = 0x4000, scoped, tag = 'input window, operand 2']
    #allocation8 [shape = 'u8[1024]{0}', space=vmem, size = 0x400, scoped, tag = 'input window, operand 3, single buffered']
    #allocation9 [shape = 's32[1]{0}', space=sflag, size = 0x4, scoped, tag = 'scoped memory for tpu_custom_call.1']
    #allocation10 [shape = 'u8[6144]{0}', space=vmem, size = 0x1800, scoped, tag = 'input window, operand 4, single buffered']
    #allocation11 [shape = 'u8[512]{0}', space=vmem, size = 0x400, scoped, tag = 'input window, operand 5, single buffered']
    #allocation12 [shape = 's32[1]{0}', space=sflag, size = 0x4, scoped, tag = 'scoped memory for tpu_custom_call.1']
    #allocation13 [shape = 'u8[8192]{0}', space=vmem, size = 0x2000, scoped, tag = 'input window, operand 6, single buffered']
    #allocation14 [shape = 'u8[512]{0}', space=vmem, size = 0x400, scoped, tag = 'input window, operand 7, single buffered']
    #allocation15 [shape = 's32[1]{0}', space=sflag, size = 0x4, scoped, tag = 'scoped memory for tpu_custom_call.1']
    #allocation16 [shape = 'u8[8192]{0}', space=vmem, size = 0x2000, scoped, tag = 'input window, operand 8, single buffered']
    #allocation17 [shape = 'u8[512]{0}', space=vmem, size = 0x400, scoped, tag = 'input window, operand 9, single buffered']
    #allocation18 [shape = 's32[1]{0}', space=sflag, size = 0x4, scoped, tag = 'scoped memory for tpu_custom_call.1']
    #allocation19 [shape = 'u8[16384]{0}', space=vmem, size = 0x4000, scoped, tag = 'output window, operand 0']
    %15 = vsyncpa [#allocation3], 0
    %s16 = scalar_lea.sflag [#allocation3], 1
    %17 = vsyncpa %s16, 0
    %18 = vsyncpa [#allocation6], 0
    %s19 = scalar_lea.sflag [#allocation6], 1
    %20 = vsyncpa %s19, 0
    %21 = vsyncpa [#allocation9], 0
    %22 = vsyncpa [#allocation12], 0
    %23 = vsyncpa [#allocation15], 0
    %24 = vsyncpa [#allocation18], 0
    %25 = vsyncpa [#allocation4], 0
    %s26 = scalar_lea.sflag [#allocation4], 1
    %27 = vsyncpa %s26, 0
    loop: start=0, step=1, limit=4
    $region2: #{tpu_custom_call.1} parent=1 // loop_pre_header
      _
    $region3: #{tpu_custom_call.1} parent=1 // loop_header
      %s29 = sphi 0, %s33
      %p30 = scmp.ge.s32.totalorder %s29, 4
      %s39 = sphi 0, %s41
      %s42 = sphi 0, %s39
      %s43 = sphi 0, %s42
      %s59 = sphi 0, %s43
      %s65 = sphi 0, %s67
      %s68 = sphi 0, %s65
      %s69 = sphi 0, %s68
      %s85 = sphi 0, %s69
      %s91 = sphi 0, %s93
      %s94 = sphi 0, %s91
      %s95 = sphi 0, %s94
      %s111 = sphi 0, %s95
      %s115 = sphi 0, %s115
      %s117 = sphi 0, %s115
      %s118 = sphi 0, %s117
      %s132 = sphi 0, %s118
      %s136 = sphi 0, %s136
      %s138 = sphi 0, %s136
      %s139 = sphi 0, %s138
      %s153 = sphi 0, %s139
      %s157 = sphi 0, %s157
      %s159 = sphi 0, %s157
      %s160 = sphi 0, %s159
      %s174 = sphi 0, %s160
      %s178 = sphi 0, %s178
      %s180 = sphi 0, %s178
      %s181 = sphi 0, %s180
      %s195 = sphi 0, %s181
      %s199 = sphi 0, %s199
      %s201 = sphi 0, %s199
      %s202 = sphi 0, %s201
      %s216 = sphi 0, %s202
      %s220 = sphi 0, %s220
      %s222 = sphi 0, %s220
      %s223 = sphi 0, %s222
      %s237 = sphi 0, %s223
      %s241 = sphi 0, %s241
      %s243 = sphi 0, %s241
      %s244 = sphi 0, %s243
      %s258 = sphi 0, %s244
      %s264 = sphi 0, %s266
      %s267 = sphi 0, %s264
      %s268 = sphi 0, %s267
      %s284 = sphi 0, %s268
    $region4: #{tpu_custom_call.1} parent=1 // loop_header_branch
      %32 = sbr.rel (%p30) target = $region8
    $region5: #{tpu_custom_call.1} parent=1 // loop_body
      %s34 = ssub.s32 %s29, 1
      %s35 = ssub.s32 %s29, 2
      %s36 = sadd.s32 %s29, 1
      %s37 = ssub.s32 %s29, %s36
      %p38 = scmp.eq.s32.totalorder %s37, 0
      %s40 = sadd.s32 %s39, 1
      %s41 = scalar_select %p38, %s39, %s40
      %p44 = pneg %p38
      %p45 = scmp.eq.s32.totalorder %s29, 1
      %p46 = por %p44, %p45
      %p47 = scmp.ne.s32.totalorder %s39, %s42
      %p48 = scmp.eq.s32.totalorder %s29, 0
      %p49 = por %p47, %p48
      %p50 = scmp.ne.s32.totalorder %s39, %s42
      %p51 = scmp.eq.s32.totalorder %s34, 1
      %p52 = por %p50, %p51
      %p53 = scmp.ne.s32.totalorder %s42, %s43
      %p54 = scmp.eq.s32.totalorder %s34, 0
      %p55 = por %p53, %p54
      %p56 = scmp.ne.s32.totalorder %s42, %s43
      %p57 = scmp.eq.s32.totalorder %s35, 1
      %p58 = por %p56, %p57
      %p60 = scmp.ne.s32.totalorder %s43, %s59
      %p61 = scmp.eq.s32.totalorder %s35, 0
      %p62 = por %p60, %p61
      %s63 = ssub.s32 %s29, %s36
      %p64 = scmp.eq.s32.totalorder %s63, 0
      %s66 = sadd.s32 %s65, 1
      %s67 = scalar_select %p64, %s65, %s66
      %p70 = pneg %p64
      %p71 = scmp.eq.s32.totalorder %s29, 1
      %p72 = por %p70, %p71
      %p73 = scmp.ne.s32.totalorder %s65, %s68
      %p74 = scmp.eq.s32.totalorder %s29, 0
      %p75 = por %p73, %p74
      %p76 = scmp.ne.s32.totalorder %s65, %s68
      %p77 = scmp.eq.s32.totalorder %s34, 1
      %p78 = por %p76, %p77
      %p79 = scmp.ne.s32.totalorder %s68, %s69
      %p80 = scmp.eq.s32.totalorder %s34, 0
      %p81 = por %p79, %p80
      %p82 = scmp.ne.s32.totalorder %s68, %s69
      %p83 = scmp.eq.s32.totalorder %s35, 1
      %p84 = por %p82, %p83
      %p86 = scmp.ne.s32.totalorder %s69, %s85
      %p87 = scmp.eq.s32.totalorder %s35, 0
      %p88 = por %p86, %p87
      %s89 = ssub.s32 %s29, %s36
      %p90 = scmp.eq.s32.totalorder %s89, 0
      %s92 = sadd.s32 %s91, 1
      %s93 = scalar_select %p90, %s91, %s92
      %p96 = pneg %p90
      %p97 = scmp.eq.s32.totalorder %s29, 1
      %p98 = por %p96, %p97
      %p99 = scmp.ne.s32.totalorder %s91, %s94
      %p100 = scmp.eq.s32.totalorder %s29, 0
      %p101 = por %p99, %p100
      %p102 = scmp.ne.s32.totalorder %s91, %s94
      %p103 = scmp.eq.s32.totalorder %s34, 1
      %p104 = por %p102, %p103
      %p105 = scmp.ne.s32.totalorder %s94, %s95
      %p106 = scmp.eq.s32.totalorder %s34, 0
      %p107 = por %p105, %p106
      %p108 = scmp.ne.s32.totalorder %s94, %s95
      %p109 = scmp.eq.s32.totalorder %s35, 1
      %p110 = por %p108, %p109
      %p112 = scmp.ne.s32.totalorder %s95, %s111
      %p113 = scmp.eq.s32.totalorder %s35, 0
      %p114 = por %p112, %p113
      %s116 = sadd.s32 %s115, 1
      %p119 = scmp.eq.s32.totalorder %s29, 1
      %p120 = scmp.ne.s32.totalorder %s115, %s117
      %p121 = scmp.eq.s32.totalorder %s29, 0
      %p122 = por %p120, %p121
      %p123 = scmp.ne.s32.totalorder %s115, %s117
      %p124 = scmp.eq.s32.totalorder %s34, 1
      %p125 = por %p123, %p124
      %p126 = scmp.ne.s32.totalorder %s117, %s118
      %p127 = scmp.eq.s32.totalorder %s34, 0
      %p128 = por %p126, %p127
      %p129 = scmp.ne.s32.totalorder %s117, %s118
      %p130 = scmp.eq.s32.totalorder %s35, 1
      %p131 = por %p129, %p130
      %p133 = scmp.ne.s32.totalorder %s118, %s132
      %p134 = scmp.eq.s32.totalorder %s35, 0
      %p135 = por %p133, %p134
      %s137 = sadd.s32 %s136, 1
      %p140 = scmp.eq.s32.totalorder %s29, 1
      %p141 = scmp.ne.s32.totalorder %s136, %s138
      %p142 = scmp.eq.s32.totalorder %s29, 0
      %p143 = por %p141, %p142
      %p144 = scmp.ne.s32.totalorder %s136, %s138
      %p145 = scmp.eq.s32.totalorder %s34, 1
      %p146 = por %p144, %p145
      %p147 = scmp.ne.s32.totalorder %s138, %s139
      %p148 = scmp.eq.s32.totalorder %s34, 0
      %p149 = por %p147, %p148
      %p150 = scmp.ne.s32.totalorder %s138, %s139
      %p151 = scmp.eq.s32.totalorder %s35, 1
      %p152 = por %p150, %p151
      %p154 = scmp.ne.s32.totalorder %s139, %s153
      %p155 = scmp.eq.s32.totalorder %s35, 0
      %p156 = por %p154, %p155
      %s158 = sadd.s32 %s157, 1
      %p161 = scmp.eq.s32.totalorder %s29, 1
      %p162 = scmp.ne.s32.totalorder %s157, %s159
      %p163 = scmp.eq.s32.totalorder %s29, 0
      %p164 = por %p162, %p163
      %p165 = scmp.ne.s32.totalorder %s157, %s159
      %p166 = scmp.eq.s32.totalorder %s34, 1
      %p167 = por %p165, %p166
      %p168 = scmp.ne.s32.totalorder %s159, %s160
      %p169 = scmp.eq.s32.totalorder %s34, 0
      %p170 = por %p168, %p169
      %p171 = scmp.ne.s32.totalorder %s159, %s160
      %p172 = scmp.eq.s32.totalorder %s35, 1
      %p173 = por %p171, %p172
      %p175 = scmp.ne.s32.totalorder %s160, %s174
      %p176 = scmp.eq.s32.totalorder %s35, 0
      %p177 = por %p175, %p176
      %s179 = sadd.s32 %s178, 1
      %p182 = scmp.eq.s32.totalorder %s29, 1
      %p183 = scmp.ne.s32.totalorder %s178, %s180
      %p184 = scmp.eq.s32.totalorder %s29, 0
      %p185 = por %p183, %p184
      %p186 = scmp.ne.s32.totalorder %s178, %s180
      %p187 = scmp.eq.s32.totalorder %s34, 1
      %p188 = por %p186, %p187
      %p189 = scmp.ne.s32.totalorder %s180, %s181
      %p190 = scmp.eq.s32.totalorder %s34, 0
      %p191 = por %p189, %p190
      %p192 = scmp.ne.s32.totalorder %s180, %s181
      %p193 = scmp.eq.s32.totalorder %s35, 1
      %p194 = por %p192, %p193
      %p196 = scmp.ne.s32.totalorder %s181, %s195
      %p197 = scmp.eq.s32.totalorder %s35, 0
      %p198 = por %p196, %p197
      %s200 = sadd.s32 %s199, 1
      %p203 = scmp.eq.s32.totalorder %s29, 1
      %p204 = scmp.ne.s32.totalorder %s199, %s201
      %p205 = scmp.eq.s32.totalorder %s29, 0
      %p206 = por %p204, %p205
      %p207 = scmp.ne.s32.totalorder %s199, %s201
      %p208 = scmp.eq.s32.totalorder %s34, 1
      %p209 = por %p207, %p208
      %p210 = scmp.ne.s32.totalorder %s201, %s202
      %p211 = scmp.eq.s32.totalorder %s34, 0
      %p212 = por %p210, %p211
      %p213 = scmp.ne.s32.totalorder %s201, %s202
      %p214 = scmp.eq.s32.totalorder %s35, 1
      %p215 = por %p213, %p214
      %p217 = scmp.ne.s32.totalorder %s202, %s216
      %p218 = scmp.eq.s32.totalorder %s35, 0
      %p219 = por %p217, %p218
      %s221 = sadd.s32 %s220, 1
      %p224 = scmp.eq.s32.totalorder %s29, 1
      %p225 = scmp.ne.s32.totalorder %s220, %s222
      %p226 = scmp.eq.s32.totalorder %s29, 0
      %p227 = por %p225, %p226
      %p228 = scmp.ne.s32.totalorder %s220, %s222
      %p229 = scmp.eq.s32.totalorder %s34, 1
      %p230 = por %p228, %p229
      %p231 = scmp.ne.s32.totalorder %s222, %s223
      %p232 = scmp.eq.s32.totalorder %s34, 0
      %p233 = por %p231, %p232
      %p234 = scmp.ne.s32.totalorder %s222, %s223
      %p235 = scmp.eq.s32.totalorder %s35, 1
      %p236 = por %p234, %p235
      %p238 = scmp.ne.s32.totalorder %s223, %s237
      %p239 = scmp.eq.s32.totalorder %s35, 0
      %p240 = por %p238, %p239
      %s242 = sadd.s32 %s241, 1
      %p245 = scmp.eq.s32.totalorder %s29, 1
      %p246 = scmp.ne.s32.totalorder %s241, %s243
      %p247 = scmp.eq.s32.totalorder %s29, 0
      %p248 = por %p246, %p247
      %p249 = scmp.ne.s32.totalorder %s241, %s243
      %p250 = scmp.eq.s32.totalorder %s34, 1
      %p251 = por %p249, %p250
      %p252 = scmp.ne.s32.totalorder %s243, %s244
      %p253 = scmp.eq.s32.totalorder %s34, 0
      %p254 = por %p252, %p253
      %p255 = scmp.ne.s32.totalorder %s243, %s244
      %p256 = scmp.eq.s32.totalorder %s35, 1
      %p257 = por %p255, %p256
      %p259 = scmp.ne.s32.totalorder %s244, %s258
      %p260 = scmp.eq.s32.totalorder %s35, 0
      %p261 = por %p259, %p260
      %s262 = ssub.s32 %s29, %s36
      %p263 = scmp.eq.s32.totalorder %s262, 0
      %s265 = sadd.s32 %s264, 1
      %s266 = scalar_select %p263, %s264, %s265
      %p269 = pneg %p263
      %p270 = scmp.eq.s32.totalorder %s29, 1
      %p271 = por %p269, %p270
      %p272 = scmp.ne.s32.totalorder %s264, %s267
      %p273 = scmp.eq.s32.totalorder %s29, 0
      %p274 = por %p272, %p273
      %p275 = scmp.ne.s32.totalorder %s264, %s267
      %p276 = scmp.eq.s32.totalorder %s34, 1
      %p277 = por %p275, %p276
      %p278 = scmp.ne.s32.totalorder %s267, %s268
      %p279 = scmp.eq.s32.totalorder %s34, 0
      %p280 = por %p278, %p279
      %p281 = scmp.ne.s32.totalorder %s267, %s268
      %p282 = scmp.eq.s32.totalorder %s35, 1
      %p283 = por %p281, %p282
      %p285 = scmp.ne.s32.totalorder %s268, %s284
      %p286 = scmp.eq.s32.totalorder %s35, 0
      %p287 = por %p285, %p286
      %p288 = scmp.le.s32.totalorder 1, %s29
      %p289 = scmp.lt.s32.totalorder %s29, 3
      %p290 = pnand %p288, %p289
      %p291 = pneg %p290
      // Predicated region
      $region9: #{tpu_custom_call.1} parent=5 // pred_check
        _
      $region10: #{tpu_custom_call.1} parent=5 // pred_check_branch
        %293 = sbr.rel (%p290) target = $region12
      $region11: #{tpu_custom_call.1} parent=5 // pred_region
        %s294 = ssub.s32 %s29, 1
        // Predicated region
        $region13: #{tpu_custom_call.1} parent=11 // pred_check
          %p295 = pneg %p128
        $region14: #{tpu_custom_call.1} parent=11 // pred_check_branch
          %297 = sbr.rel (%p295) target = $region16
        $region15: #{tpu_custom_call.1} parent=11 // pred_region
          %s299 = ssub.s32 32, 32
          %300 = vsyncadd [#allocation9], %s299
          %s302 = sshll.u32 [#allocation8], 4
          %s303 = int_to_ptr.vmem [resolvable:$true] %s302
          %305 = dma.hbm_to_vmem [thread:$0]  %s3, 32, %s303, [#allocation9]
        $region16: #{tpu_custom_call.1} parent=11 // pred_fallthru
          _
        // Predicated region
        $region17: #{tpu_custom_call.1} parent=11 // pred_check
          %p306 = pneg %p149
        $region18: #{tpu_custom_call.1} parent=11 // pred_check_branch
          %308 = sbr.rel (%p306) target = $region20
        $region19: #{tpu_custom_call.1} parent=11 // pred_region
          %s310 = ssub.s32 192, 192
          %311 = vsyncadd [#allocation9], %s310
          %s312 = sshll.u32 [#allocation10], 4
          %s313 = int_to_ptr.vmem [resolvable:$true] %s312
          %318 = dma.hbm_to_vmem [thread:$0]  %s4, 192, %s313, [#allocation9], 64, 64, 4
        $region20: #{tpu_custom_call.1} parent=11 // pred_fallthru
          _
        // Predicated region
        $region21: #{tpu_custom_call.1} parent=11 // pred_check
          %p319 = pneg %p170
        $region22: #{tpu_custom_call.1} parent=11 // pred_check_branch
          %321 = sbr.rel (%p319) target = $region24
        $region23: #{tpu_custom_call.1} parent=11 // pred_region
          %s323 = ssub.s32 16, 16
          %324 = vsyncadd [#allocation12], %s323
          %s326 = sshll.u32 [#allocation11], 4
          %s327 = int_to_ptr.vmem [resolvable:$true] %s326
          %329 = dma.hbm_to_vmem [thread:$0]  %s5, 16, %s327, [#allocation12]
        $region24: #{tpu_custom_call.1} parent=11 // pred_fallthru
          _
        // Predicated region
        $region25: #{tpu_custom_call.1} parent=11 // pred_check
          %p330 = pneg %p191
        $region26: #{tpu_custom_call.1} parent=11 // pred_check_branch
          %332 = sbr.rel (%p330) target = $region28
        $region27: #{tpu_custom_call.1} parent=11 // pred_region
          %s334 = ssub.s32 256, 256
          %335 = vsyncadd [#allocation12], %s334
          %s336 = sshll.u32 [#allocation13], 4
          %s337 = int_to_ptr.vmem [resolvable:$true] %s336
          %342 = dma.hbm_to_vmem [thread:$0]  %s6, 256, %s337, [#allocation12], 64, 64, 4
        $region28: #{tpu_custom_call.1} parent=11 // pred_fallthru
          _
        // Predicated region
        $region29: #{tpu_custom_call.1} parent=11 // pred_check
          %p343 = pneg %p212
        $region30: #{tpu_custom_call.1} parent=11 // pred_check_branch
          %345 = sbr.rel (%p343) target = $region32
        $region31: #{tpu_custom_call.1} parent=11 // pred_region
          %s347 = ssub.s32 16, 16
          %348 = vsyncadd [#allocation15], %s347
          %s350 = sshll.u32 [#allocation14], 4
          %s351 = int_to_ptr.vmem [resolvable:$true] %s350
          %353 = dma.hbm_to_vmem [thread:$0]  %s7, 16, %s351, [#allocation15]
        $region32: #{tpu_custom_call.1} parent=11 // pred_fallthru
          _
        // Predicated region
        $region33: #{tpu_custom_call.1} parent=11 // pred_check
          %p354 = pneg %p233
        $region34: #{tpu_custom_call.1} parent=11 // pred_check_branch
          %356 = sbr.rel (%p354) target = $region36
        $region35: #{tpu_custom_call.1} parent=11 // pred_region
          %s358 = ssub.s32 256, 256
          %359 = vsyncadd [#allocation15], %s358
          %s360 = sshll.u32 [#allocation16], 4
          %s361 = int_to_ptr.vmem [resolvable:$true] %s360
          %366 = dma.hbm_to_vmem [thread:$0]  %s8, 256, %s361, [#allocation15], 64, 64, 4
        $region36: #{tpu_custom_call.1} parent=11 // pred_fallthru
          _
        // Predicated region
        $region37: #{tpu_custom_call.1} parent=11 // pred_check
          %p367 = pneg %p254
        $region38: #{tpu_custom_call.1} parent=11 // pred_check_branch
          %369 = sbr.rel (%p367) target = $region40
        $region39: #{tpu_custom_call.1} parent=11 // pred_region
          %s371 = ssub.s32 16, 16
          %372 = vsyncadd [#allocation18], %s371
          %s374 = sshll.u32 [#allocation17], 4
          %s375 = int_to_ptr.vmem [resolvable:$true] %s374
          %377 = dma.hbm_to_vmem [thread:$0]  %s9, 16, %s375, [#allocation18]
        $region40: #{tpu_custom_call.1} parent=11 // pred_fallthru
          _
      $region12: #{tpu_custom_call.1} parent=5 // pred_fallthru
        _
      %p378 = scmp.lt.s32.totalorder %s29, 2
      // Predicated region
      $region41: #{tpu_custom_call.1} parent=5 // pred_check
        %p379 = pneg %p378
      $region42: #{tpu_custom_call.1} parent=5 // pred_check_branch
        %381 = sbr.rel (%p379) target = $region44
      $region43: #{tpu_custom_call.1} parent=5 // pred_region
        // Predicated region
        $region45: #{tpu_custom_call.1} parent=43 // pred_check
          %p382 = pneg %p49
        $region46: #{tpu_custom_call.1} parent=43 // pred_check_branch
          %384 = sbr.rel (%p382) target = $region48
        $region47: #{tpu_custom_call.1} parent=43 // pred_region
          %s385 = sand.u32 %s39, 1
          %s386 = scalar_lea.sflag [#allocation3], %s385
          %s387 = sand.u32 %s39, 1
          %s388 = smul.addr %s387, 8
          %s389 = scalar_lea.vmem [#allocation2], %s388
          %s390 = smul.u32 2, %s29
          %s392 = ssub.s32 128, 128
          %393 = vsyncadd %s386, %s392
          %s394 = smul.addr %s390, 64
          %s395 = scalar_lea.hbm %s0, %s394
          %s396 = sshll.u32 %s389, 4
          %s397 = int_to_ptr.vmem [resolvable:$true] %s396
          %402 = dma.hbm_to_vmem [thread:$0]  %s395, 128, %s397, %s386, 64, 64, 4
        $region48: #{tpu_custom_call.1} parent=43 // pred_fallthru
          _
        // Predicated region
        $region49: #{tpu_custom_call.1} parent=43 // pred_check
          %p403 = pneg %p75
        $region50: #{tpu_custom_call.1} parent=43 // pred_check_branch
          %405 = sbr.rel (%p403) target = $region52
        $region51: #{tpu_custom_call.1} parent=43 // pred_region
          %s406 = sand.u32 %s29, 1
          %s407 = scalar_lea.sflag [#allocation6], %s406
          %s408 = sand.u32 %s65, 1
          %s409 = smul.addr %s408, 64
          %s410 = scalar_lea.vmem [#allocation5], %s409
          %s411 = smul.u32 16, %s29
          %s413 = ssub.s32 1024, 1024
          %414 = vsyncadd %s407, %s413
          %s415 = smul.addr %s411, 64
          %s416 = scalar_lea.hbm %s1, %s415
          %s417 = sshll.u32 %s410, 4
          %s418 = int_to_ptr.vmem [resolvable:$true] %s417
          %423 = dma.hbm_to_vmem [thread:$0]  %s416, 1024, %s418, %s407, 64, 64, 4
        $region52: #{tpu_custom_call.1} parent=43 // pred_fallthru
          _
        // Predicated region
        $region53: #{tpu_custom_call.1} parent=43 // pred_check
          %p424 = pneg %p101
        $region54: #{tpu_custom_call.1} parent=43 // pred_check_branch
          %426 = sbr.rel (%p424) target = $region56
        $region55: #{tpu_custom_call.1} parent=43 // pred_region
          %s427 = sand.u32 %s29, 1
          %s428 = scalar_lea.sflag [#allocation6], %s427
          %s429 = sand.u32 %s91, 1
          %s430 = smul.addr %s429, 16
          %s431 = scalar_lea.vmem [#allocation7], %s430
          %s432 = smul.u32 2, %s29
          %s434 = ssub.s32 256, 256
          %435 = vsyncadd %s428, %s434
          %s436 = smul.addr %s432, 128
          %s437 = scalar_lea.hbm %s2, %s436
          %s438 = sshll.u32 %s431, 4
          %s439 = int_to_ptr.vmem [resolvable:$true] %s438
          %444 = dma.hbm_to_vmem [thread:$0]  %s437, 256, %s439, %s428, 128, 128, 8
        $region56: #{tpu_custom_call.1} parent=43 // pred_fallthru
          _
      $region44: #{tpu_custom_call.1} parent=5 // pred_fallthru
        _
      %p445 = scmp.le.s32.totalorder 1, %s29
      %p446 = scmp.lt.s32.totalorder %s29, 3
      %p447 = pnand %p445, %p446
      %p448 = pneg %p447
      // Predicated region
      $region57: #{tpu_custom_call.1} parent=5 // pred_check
        _
      $region58: #{tpu_custom_call.1} parent=5 // pred_check_branch
        %450 = sbr.rel (%p447) target = $region60
      $region59: #{tpu_custom_call.1} parent=5 // pred_region
        %s451 = ssub.s32 %s29, 1
        %s452 = sand.u32 %s42, 1
        %s453 = scalar_lea.sflag [#allocation3], %s452
        %s454 = sand.u32 %s42, 1
        %s455 = smul.addr %s454, 8
        %s456 = scalar_lea.vmem [#allocation2], %s455
        // Predicated region
        $region61: #{tpu_custom_call.1} parent=59 // pred_check
          %p457 = pneg %p55
        $region62: #{tpu_custom_call.1} parent=59 // pred_check_branch
          %459 = sbr.rel (%p457) target = $region64
        $region63: #{tpu_custom_call.1} parent=59 // pred_region
          %460 = dma.done %s453, 128
        $region64: #{tpu_custom_call.1} parent=59 // pred_fallthru
          _
        %s461 = sand.u32 %s34, 1
        %s462 = scalar_lea.sflag [#allocation6], %s461
        %s463 = sand.u32 %s68, 1
        %s464 = smul.addr %s463, 64
        %s465 = scalar_lea.vmem [#allocation5], %s464
        // Predicated region
        $region65: #{tpu_custom_call.1} parent=59 // pred_check
          %p466 = pneg %p81
        $region66: #{tpu_custom_call.1} parent=59 // pred_check_branch
          %468 = sbr.rel (%p466) target = $region68
        $region67: #{tpu_custom_call.1} parent=59 // pred_region
          %469 = dma.done %s462, 1024
        $region68: #{tpu_custom_call.1} parent=59 // pred_fallthru
          _
        %s470 = sand.u32 %s34, 1
        %s471 = scalar_lea.sflag [#allocation6], %s470
        %s472 = sand.u32 %s94, 1
        %s473 = smul.addr %s472, 16
        %s474 = scalar_lea.vmem [#allocation7], %s473
        // Predicated region
        $region69: #{tpu_custom_call.1} parent=59 // pred_check
          %p475 = pneg %p107
        $region70: #{tpu_custom_call.1} parent=59 // pred_check_branch
          %477 = sbr.rel (%p475) target = $region72
        $region71: #{tpu_custom_call.1} parent=59 // pred_region
          %478 = dma.done %s471, 256
        $region72: #{tpu_custom_call.1} parent=59 // pred_fallthru
          _
        // Predicated region
        $region73: #{tpu_custom_call.1} parent=59 // pred_check
          %p479 = pneg %p128
        $region74: #{tpu_custom_call.1} parent=59 // pred_check_branch
          %481 = sbr.rel (%p479) target = $region76
        $region75: #{tpu_custom_call.1} parent=59 // pred_region
          %482 = dma.done [#allocation9], 32
        $region76: #{tpu_custom_call.1} parent=59 // pred_fallthru
          _
        // Predicated region
        $region77: #{tpu_custom_call.1} parent=59 // pred_check
          %p483 = pneg %p149
        $region78: #{tpu_custom_call.1} parent=59 // pred_check_branch
          %485 = sbr.rel (%p483) target = $region80
        $region79: #{tpu_custom_call.1} parent=59 // pred_region
          %486 = dma.done [#allocation9], 192
        $region80: #{tpu_custom_call.1} parent=59 // pred_fallthru
          _
        // Predicated region
        $region81: #{tpu_custom_call.1} parent=59 // pred_check
          %p487 = pneg %p170
        $region82: #{tpu_custom_call.1} parent=59 // pred_check_branch
          %489 = sbr.rel (%p487) target = $region84
        $region83: #{tpu_custom_call.1} parent=59 // pred_region
          %490 = dma.done [#allocation12], 16
        $region84: #{tpu_custom_call.1} parent=59 // pred_fallthru
          _
        // Predicated region
        $region85: #{tpu_custom_call.1} parent=59 // pred_check
          %p491 = pneg %p191
        $region86: #{tpu_custom_call.1} parent=59 // pred_check_branch
          %493 = sbr.rel (%p491) target = $region88
        $region87: #{tpu_custom_call.1} parent=59 // pred_region
          %494 = dma.done [#allocation12], 256
        $region88: #{tpu_custom_call.1} parent=59 // pred_fallthru
          _
        // Predicated region
        $region89: #{tpu_custom_call.1} parent=59 // pred_check
          %p495 = pneg %p212
        $region90: #{tpu_custom_call.1} parent=59 // pred_check_branch
          %497 = sbr.rel (%p495) target = $region92
        $region91: #{tpu_custom_call.1} parent=59 // pred_region
          %498 = dma.done [#allocation15], 16
        $region92: #{tpu_custom_call.1} parent=59 // pred_fallthru
          _
        // Predicated region
        $region93: #{tpu_custom_call.1} parent=59 // pred_check
          %p499 = pneg %p233
        $region94: #{tpu_custom_call.1} parent=59 // pred_check_branch
          %501 = sbr.rel (%p499) target = $region96
        $region95: #{tpu_custom_call.1} parent=59 // pred_region
          %502 = dma.done [#allocation15], 256
        $region96: #{tpu_custom_call.1} parent=59 // pred_fallthru
          _
        // Predicated region
        $region97: #{tpu_custom_call.1} parent=59 // pred_check
          %p503 = pneg %p254
        $region98: #{tpu_custom_call.1} parent=59 // pred_check_branch
          %505 = sbr.rel (%p503) target = $region100
        $region99: #{tpu_custom_call.1} parent=59 // pred_region
          %506 = dma.done [#allocation18], 16
        $region100: #{tpu_custom_call.1} parent=59 // pred_fallthru
          _
        %s507 = sand.u32 %s42, 1
        %s508 = scalar_lea.sflag [#allocation3], %s507
        %s509 = sand.u32 %s42, 1
        %s510 = smul.addr %s509, 8
        %s511 = scalar_lea.vmem [#allocation2], %s510
        %p512 = pneg %p55
        %p513 = pneg %p52
        %s514 = sand.u32 %s34, 1
        %s515 = scalar_lea.sflag [#allocation6], %s514
        %s516 = sand.u32 %s68, 1
        %s517 = smul.addr %s516, 64
        %s518 = scalar_lea.vmem [#allocation5], %s517
        %p519 = pneg %p81
        %p520 = pneg %p78
        %s521 = sand.u32 %s34, 1
        %s522 = scalar_lea.sflag [#allocation6], %s521
        %s523 = sand.u32 %s94, 1
        %s524 = smul.addr %s523, 16
        %s525 = scalar_lea.vmem [#allocation7], %s524
        %p526 = pneg %p107
        %p527 = pneg %p104
        %p528 = pneg %p128
        %p529 = pneg %p125
        %p530 = pneg %p149
        %p531 = pneg %p146
        %p532 = pneg %p170
        %p533 = pneg %p167
        %p534 = pneg %p191
        %p535 = pneg %p188
        %p536 = pneg %p212
        %p537 = pneg %p209
        %p538 = pneg %p233
        %p539 = pneg %p230
        %p540 = pneg %p254
        %p541 = pneg %p251
        %p542 = pneg %p280
        %p543 = pneg %p277
        %s544 = sand.u32 %s267, 1
        %s545 = scalar_lea.sflag [#allocation4], %s544
        %s546 = sand.u32 %s267, 1
        %s547 = smul.addr %s546, 16
        %s548 = scalar_lea.vmem [#allocation19], %s547
        %s549 = smul.u32 2, %s34
        %s550 = smul.u32 16, %s34
        %s551 = smul.u32 2, %s34
        %s552 = smul.u32 2, %s34
        %v554 = vld [vmem:[%s456] sm:$0xf]
        %v555 = vld [vmem:[%s456 + $0x4] sm:$0xf]
        %v556 = vld [vmem:[#allocation10] sm:$0xf]
        %v557 = vld [vmem:[#allocation10 + $0x4] sm:$0xf]
        %v558 = vld [vmem:[#allocation10 + $0x8] sm:$0xf]
        %v559 = vld [vmem:[#allocation11] sm:$0x1]
        %v561 = vlaneseq
        %v562 = vshrl.u32 %v561, 7
        %v563 = vsub.s32 0, %v562
        %v564 = vrot.slane %v559, %v563
        %v568 = vunpack.c.l.b16 %v554
        %v569 = vunpack.c.l.b16 %v555
        %v570 = vpack.c.b16 %v569, %v568
        %v574 = vunpack.c.l.b16 %v556
        %v575 = vunpack.c.l.b16 %v557
        %v576 = vunpack.c.l.b16 %v558
        %v577 = vpack.c.b16 %v575, %v574
        %v578 = vpack.c.b16 %v576, %v576
        %vm580 = vcmask 195584
        %v582 = vsel %vm580, %v570, 0
        %vm584 = vcmask 1043456
        %v586 = vsel %vm584, %v578, 0
        %588 = vmatprep.subr.bf16.mxu0 0
        %589 = vmatpush1.bf16.msra.mxu0 %v577
        %590 = vmatprep.subr.bf16.mxu0 0
        %591 = vmatpush1.bf16.msra.mxu0 %v586
        %592 = vmatprep.subr.bf16.mxu0 0
        %593 = vmatpush1.bf16.msra.mxu0 0
        %594 = vmatprep.subr.bf16.mxu0 0
        %595 = vmatpush1.bf16.msra.mxu0 0
        %596 = vmatprep.subr.bf16.mxu0 0
        %597 = vmatpush1.bf16.msra.mxu0 0
        %598 = vmatprep.subr.bf16.mxu0 0
        %599 = vmatpush1.bf16.msra.mxu0 0
        %600 = vmatprep.subr.bf16.mxu0 0
        %601 = vmatpush1.bf16.msra.mxu0 0
        %602 = vmatprep.subr.bf16.mxu0 0
        %603 = vmatpush1.bf16.msra.mxu0 0
        %604 = vmatprep.subr.bf16.mxu0 0
        %605 = vmatpush1.bf16.msra.mxu0 0
        %606 = vmatprep.subr.bf16.mxu0 0
        %607 = vmatpush1.bf16.msra.mxu0 0
        %608 = vmatprep.subr.bf16.mxu0 0
        %609 = vmatpush1.bf16.msra.mxu0 0
        %610 = vmatprep.subr.bf16.mxu0 0
        %611 = vmatpush1.bf16.msra.mxu0 0
        %612 = vmatprep.subr.bf16.mxu0 0
        %613 = vmatpush1.bf16.msra.mxu0 0
        %614 = vmatprep.subr.bf16.mxu0 0
        %615 = vmatpush1.bf16.msra.mxu0 0
        %616 = vmatprep.subr.bf16.mxu0 0
        %617 = vmatpush1.bf16.msra.mxu0 0
        %618 = vmatprep.subr.bf16.mxu0 0
        %619 = vmatpush1.bf16.msra.mxu0 0
        %620 = vmatprep.mubr.bf16.mxu0 0
        %621 = vmatmul.mubr.bf16.gmra.mrb[0].mxu0 %v582
        %v622 = vpop.f32.mrb[0].mxu0
        %v623 = vadd.f32 %v564, %v622
        %v624 = vpop.f32.mrb[0].mxu0
        %v625 = vpop.f32.mrb[0].mxu0
        %v626 = vadd.f32 %v564, %v625
        %v627 = vpop.f32.mrb[0].mxu0
        %628 = vdwg.mxu0
        %v629 = vld [vmem:[%s465] sm:$0xf]
        %v630 = vld [vmem:[%s465 + $0x4] sm:$0xf]
        %v631 = vld [vmem:[%s465 + $0x8] sm:$0xf]
        %v632 = vld [vmem:[%s465 + $0xc] sm:$0xf]
        %v633 = vld [vmem:[%s465 + $0x10] sm:$0xf]
        %v634 = vld [vmem:[%s465 + $0x14] sm:$0xf]
        %v635 = vld [vmem:[%s465 + $0x18] sm:$0xf]
        %v636 = vld [vmem:[%s465 + $0x1c] sm:$0xf]
        %v637 = vld [vmem:[%s465 + $0x20] sm:$0xf]
        %v638 = vld [vmem:[%s465 + $0x24] sm:$0xf]
        %v639 = vld [vmem:[%s465 + $0x28] sm:$0xf]
        %v640 = vld [vmem:[%s465 + $0x2c] sm:$0xf]
        %v641 = vld [vmem:[%s465 + $0x30] sm:$0xf]
        %v642 = vld [vmem:[%s465 + $0x34] sm:$0xf]
        %v643 = vld [vmem:[%s465 + $0x38] sm:$0xf]
        %v644 = vld [vmem:[%s465 + $0x3c] sm:$0xf]
        %v645 = vld [vmem:[#allocation13] sm:$0xf]
        %v646 = vld [vmem:[#allocation13 + $0x4] sm:$0xf]
        %v647 = vld [vmem:[#allocation13 + $0x8] sm:$0xf]
        %v648 = vld [vmem:[#allocation13 + $0xc] sm:$0xf]
        %v649 = vld [vmem:[#allocation14] sm:$0x1]
        %v651 = vlaneseq
        %v652 = vshrl.u32 %v651, 7
        %v653 = vsub.s32 0, %v652
        %v654 = vrot.slane %v649, %v653
        %v672 = vunpack.c.l.b16 %v629
        %v673 = vunpack.c.l.b16 %v630
        %v674 = vunpack.c.l.b16 %v631
        %v675 = vunpack.c.l.b16 %v632
        %v676 = vunpack.c.l.b16 %v633
        %v677 = vunpack.c.l.b16 %v634
        %v678 = vunpack.c.l.b16 %v635
        %v679 = vunpack.c.l.b16 %v636
        %v680 = vunpack.c.l.b16 %v637
        %v681 = vunpack.c.l.b16 %v638
        %v682 = vunpack.c.l.b16 %v639
        %v683 = vunpack.c.l.b16 %v640
        %v684 = vunpack.c.l.b16 %v641
        %v685 = vunpack.c.l.b16 %v642
        %v686 = vunpack.c.l.b16 %v643
        %v687 = vunpack.c.l.b16 %v644
        %v688 = vpack.c.b16 %v673, %v672
        %v689 = vpack.c.b16 %v675, %v674
        %v690 = vpack.c.b16 %v677, %v676
        %v691 = vpack.c.b16 %v679, %v678
        %v692 = vpack.c.b16 %v681, %v680
        %v693 = vpack.c.b16 %v683, %v682
        %v694 = vpack.c.b16 %v685, %v684
        %v695 = vpack.c.b16 %v687, %v686
        %v700 = vunpack.c.l.b16 %v645
        %v701 = vunpack.c.l.b16 %v646
        %v702 = vunpack.c.l.b16 %v647
        %v703 = vunpack.c.l.b16 %v648
        %v704 = vpack.c.b16 %v701, %v700
        %v705 = vpack.c.b16 %v703, %v702
        %vm708 = vcmask 261120
        %v710 = vsel %vm708, %v688, 0
        %v713 = vsel %vm708, %v689, 0
        %v716 = vsel %vm708, %v690, 0
        %v719 = vsel %vm708, %v691, 0
        %v722 = vsel %vm708, %v692, 0
        %v725 = vsel %vm708, %v693, 0
        %v728 = vsel %vm708, %v694, 0
        %v731 = vsel %vm708, %v695, 0
        %733 = vmatprep.subr.bf16.mxu0 0
        %734 = vmatpush1.bf16.msra.mxu0 %v704
        %735 = vmatprep.subr.bf16.mxu0 0
        %736 = vmatpush1.bf16.msra.mxu0 %v705
        %737 = vmatprep.subr.bf16.mxu0 0
        %738 = vmatpush1.bf16.msra.mxu0 0
        %739 = vmatprep.subr.bf16.mxu0 0
        %740 = vmatpush1.bf16.msra.mxu0 0
        %741 = vmatprep.subr.bf16.mxu0 0
        %742 = vmatpush1.bf16.msra.mxu0 0
        %743 = vmatprep.subr.bf16.mxu0 0
        %744 = vmatpush1.bf16.msra.mxu0 0
        %745 = vmatprep.subr.bf16.mxu0 0
        %746 = vmatpush1.bf16.msra.mxu0 0
        %747 = vmatprep.subr.bf16.mxu0 0
        %748 = vmatpush1.bf16.msra.mxu0 0
        %749 = vmatprep.subr.bf16.mxu0 0
        %750 = vmatpush1.bf16.msra.mxu0 0
        %751 = vmatprep.subr.bf16.mxu0 0
        %752 = vmatpush1.bf16.msra.mxu0 0
        %753 = vmatprep.subr.bf16.mxu0 0
        %754 = vmatpush1.bf16.msra.mxu0 0
        %755 = vmatprep.subr.bf16.mxu0 0
        %756 = vmatpush1.bf16.msra.mxu0 0
        %757 = vmatprep.subr.bf16.mxu0 0
        %758 = vmatpush1.bf16.msra.mxu0 0
        %759 = vmatprep.subr.bf16.mxu0 0
        %760 = vmatpush1.bf16.msra.mxu0 0
        %761 = vmatprep.subr.bf16.mxu0 0
        %762 = vmatpush1.bf16.msra.mxu0 0
        %763 = vmatprep.subr.bf16.mxu0 0
        %764 = vmatpush1.bf16.msra.mxu0 0
        %765 = vmatprep.mubr.bf16.mxu0 0
        %766 = vmatmul.mubr.bf16.gmra.mrb[0].mxu0 %v710
        %v767 = vpop.f32.mrb[0].mxu0
        %v768 = vadd.f32 %v654, %v767
        %v769 = vpop.f32.mrb[0].mxu0
        %v770 = vpop.f32.mrb[0].mxu0
        %v771 = vadd.f32 %v654, %v770
        %v772 = vpop.f32.mrb[0].mxu0
        %773 = vmatprep.mubr.bf16.mxu0 0
        %774 = vmatmul.mubr.bf16.gmra.mrb[0].mxu0 %v713
        %v775 = vpop.f32.mrb[0].mxu0
        %v776 = vadd.f32 %v654, %v775
        %v777 = vpop.f32.mrb[0].mxu0
        %v778 = vpop.f32.mrb[0].mxu0
        %v779 = vadd.f32 %v654, %v778
        %v780 = vpop.f32.mrb[0].mxu0
        %781 = vmatprep.mubr.bf16.mxu0 0
        %782 = vmatmul.mubr.bf16.gmra.mrb[0].mxu0 %v716
        %v783 = vpop.f32.mrb[0].mxu0
        %v784 = vadd.f32 %v654, %v783
        %v785 = vpop.f32.mrb[0].mxu0
        %v786 = vpop.f32.mrb[0].mxu0
        %v787 = vadd.f32 %v654, %v786
        %v788 = vpop.f32.mrb[0].mxu0
        %789 = vmatprep.mubr.bf16.mxu0 0
        %790 = vmatmul.mubr.bf16.gmra.mrb[0].mxu0 %v719
        %v791 = vpop.f32.mrb[0].mxu0
        %v792 = vadd.f32 %v654, %v791
        %v793 = vpop.f32.mrb[0].mxu0
        %v794 = vpop.f32.mrb[0].mxu0
        %v795 = vadd.f32 %v654, %v794
        %v796 = vpop.f32.mrb[0].mxu0
        %797 = vmatprep.mubr.bf16.mxu0 0
        %798 = vmatmul.mubr.bf16.gmra.mrb[0].mxu0 %v722
        %v799 = vpop.f32.mrb[0].mxu0
        %v800 = vadd.f32 %v654, %v799
        %v801 = vpop.f32.mrb[0].mxu0
        %v802 = vpop.f32.mrb[0].mxu0
        %v803 = vadd.f32 %v654, %v802
        %v804 = vpop.f32.mrb[0].mxu0
        %805 = vmatprep.mubr.bf16.mxu0 0
        %806 = vmatmul.mubr.bf16.gmra.mrb[0].mxu0 %v725
        %v807 = vpop.f32.mrb[0].mxu0
        %v808 = vadd.f32 %v654, %v807
        %v809 = vpop.f32.mrb[0].mxu0
        %v810 = vpop.f32.mrb[0].mxu0
        %v811 = vadd.f32 %v654, %v810
        %v812 = vpop.f32.mrb[0].mxu0
        %813 = vmatprep.mubr.bf16.mxu0 0
        %814 = vmatmul.mubr.bf16.gmra.mrb[0].mxu0 %v728
        %v815 = vpop.f32.mrb[0].mxu0
        %v816 = vadd.f32 %v654, %v815
        %v817 = vpop.f32.mrb[0].mxu0
        %v818 = vpop.f32.mrb[0].mxu0
        %v819 = vadd.f32 %v654, %v818
        %v820 = vpop.f32.mrb[0].mxu0
        %821 = vmatprep.mubr.bf16.mxu0 0
        %822 = vmatmul.mubr.bf16.gmra.mrb[0].mxu0 %v731
        %v823 = vpop.f32.mrb[0].mxu0
        %v824 = vadd.f32 %v654, %v823
        %v825 = vpop.f32.mrb[0].mxu0
        %v826 = vpop.f32.mrb[0].mxu0
        %v827 = vadd.f32 %v654, %v826
        %v828 = vpop.f32.mrb[0].mxu0
        %829 = vdwg.mxu0
        %v830 = vld [vmem:[#allocation8] sm:$0x3]
        %v831 = vmul.f32 %v623, 0.25
        %v832 = vmul.f32 %v626, 0.25
        %v835 = vcombine.high %v831, %v831
        %v837 = vunpack.c.l.s4 1966171168
        %v838 = vunpack.c.0.s8 %v837
        %v839 = vlaneseq
        %v840 = vshrl.u32 %v839, 7
        %v841 = vsub.s32 %v838, %v840
        %v842 = vrot.slane %v831, %v841
        %v844 = vunpack.c.l.s4 1966171168
        %v845 = vunpack.c.0.s8 %v844
        %v846 = vlaneseq
        %v847 = vshrl.u32 %v846, 7
        %v848 = vsub.s32 %v845, %v847
        %v849 = vrot.slane %v835, %v848
        %v850 = vcombine.high %v842, %v842
        %v851 = vcombine.high %v849, %v849
        %v853 = vunpack.c.l.s4 1966171168
        %v854 = vunpack.c.0.s8 %v853
        %v855 = vlaneseq
        %v856 = vshrl.u32 %v855, 7
        %v857 = vsub.s32 %v854, %v856
        %v858 = vrot.slane %v842, %v857
        %v860 = vunpack.c.l.s4 1966171168
        %v861 = vunpack.c.0.s8 %v860
        %v862 = vlaneseq
        %v863 = vshrl.u32 %v862, 7
        %v864 = vsub.s32 %v861, %v863
        %v865 = vrot.slane %v849, %v864
        %v867 = vunpack.c.l.s4 1966171168
        %v868 = vunpack.c.0.s8 %v867
        %v869 = vlaneseq
        %v870 = vshrl.u32 %v869, 7
        %v871 = vsub.s32 %v868, %v870
        %v872 = vrot.slane %v850, %v871
        %v874 = vunpack.c.l.s4 1966171168
        %v875 = vunpack.c.0.s8 %v874
        %v876 = vlaneseq
        %v877 = vshrl.u32 %v876, 7
        %v878 = vsub.s32 %v875, %v877
        %v879 = vrot.slane %v851, %v878
        %v880 = vcombine.high %v858, %v858
        %v881 = vcombine.high %v865, %v865
        %v882 = vcombine.high %v872, %v872
        %v883 = vcombine.high %v879, %v879
        %v884 = vcombine.high %v832, %v832
        %v886 = vunpack.c.l.s4 1966171168
        %v887 = vunpack.c.0.s8 %v886
        %v888 = vlaneseq
        %v889 = vshrl.u32 %v888, 7
        %v890 = vsub.s32 %v887, %v889
        %v891 = vrot.slane %v832, %v890
        %v893 = vunpack.c.l.s4 1966171168
        %v894 = vunpack.c.0.s8 %v893
        %v895 = vlaneseq
        %v896 = vshrl.u32 %v895, 7
        %v897 = vsub.s32 %v894, %v896
        %v898 = vrot.slane %v884, %v897
        %v899 = vcombine.high %v891, %v891
        %v900 = vcombine.high %v898, %v898
        %v902 = vunpack.c.l.s4 1966171168
        %v903 = vunpack.c.0.s8 %v902
        %v904 = vlaneseq
        %v905 = vshrl.u32 %v904, 7
        %v906 = vsub.s32 %v903, %v905
        %v907 = vrot.slane %v891, %v906
        %v909 = vunpack.c.l.s4 1966171168
        %v910 = vunpack.c.0.s8 %v909
        %v911 = vlaneseq
        %v912 = vshrl.u32 %v911, 7
        %v913 = vsub.s32 %v910, %v912
        %v914 = vrot.slane %v898, %v913
        %v916 = vunpack.c.l.s4 1966171168
        %v917 = vunpack.c.0.s8 %v916
        %v918 = vlaneseq
        %v919 = vshrl.u32 %v918, 7
        %v920 = vsub.s32 %v917, %v919
        %v921 = vrot.slane %v899, %v920
        %v923 = vunpack.c.l.s4 1966171168
        %v924 = vunpack.c.0.s8 %v923
        %v925 = vlaneseq
        %v926 = vshrl.u32 %v925, 7
        %v927 = vsub.s32 %v924, %v926
        %v928 = vrot.slane %v900, %v927
        %v929 = vcombine.high %v907, %v907
        %v930 = vcombine.high %v914, %v914
        %v931 = vcombine.high %v921, %v921
        %v932 = vcombine.high %v928, %v928
        %v933 = vlaneseq
        %v934 = vshrl.u32 %v933, 7
        %v935 = vsub.s32 0, %v934
        %v936 = vrot.slane %v858, %v935
        %v937 = vlaneseq
        %v938 = vshrl.u32 %v937, 7
        %v939 = vsub.s32 0, %v938
        %v940 = vrot.slane %v872, %v939
        %v941 = vlaneseq
        %v942 = vshrl.u32 %v941, 7
        %v943 = vsub.s32 0, %v942
        %v944 = vrot.slane %v880, %v943
        %v945 = vlaneseq
        %v946 = vshrl.u32 %v945, 7
        %v947 = vsub.s32 0, %v946
        %v948 = vrot.slane %v882, %v947
        %v949 = vlaneseq
        %v950 = vshrl.u32 %v949, 7
        %v951 = vsub.s32 0, %v950
        %v952 = vrot.slane %v865, %v951
        %v953 = vlaneseq
        %v954 = vshrl.u32 %v953, 7
        %v955 = vsub.s32 0, %v954
        %v956 = vrot.slane %v879, %v955
        %v957 = vlaneseq
        %v958 = vshrl.u32 %v957, 7
        %v959 = vsub.s32 0, %v958
        %v960 = vrot.slane %v881, %v959
        %v961 = vlaneseq
        %v962 = vshrl.u32 %v961, 7
        %v963 = vsub.s32 0, %v962
        %v964 = vrot.slane %v883, %v963
        %v965 = vlaneseq
        %v966 = vshrl.u32 %v965, 7
        %v967 = vsub.s32 0, %v966
        %v968 = vrot.slane %v907, %v967
        %v969 = vlaneseq
        %v970 = vshrl.u32 %v969, 7
        %v971 = vsub.s32 0, %v970
        %v972 = vrot.slane %v921, %v971
        %v973 = vlaneseq
        %v974 = vshrl.u32 %v973, 7
        %v975 = vsub.s32 0, %v974
        %v976 = vrot.slane %v929, %v975
        %v977 = vlaneseq
        %v978 = vshrl.u32 %v977, 7
        %v979 = vsub.s32 0, %v978
        %v980 = vrot.slane %v931, %v979
        %v981 = vlaneseq
        %v982 = vshrl.u32 %v981, 7
        %v983 = vsub.s32 0, %v982
        %v984 = vrot.slane %v914, %v983
        %v985 = vlaneseq
        %v986 = vshrl.u32 %v985, 7
        %v987 = vsub.s32 0, %v986
        %v988 = vrot.slane %v928, %v987
        %v989 = vlaneseq
        %v990 = vshrl.u32 %v989, 7
        %v991 = vsub.s32 0, %v990
        %v992 = vrot.slane %v930, %v991
        %v993 = vlaneseq
        %v994 = vshrl.u32 %v993, 7
        %v995 = vsub.s32 0, %v994
        %v996 = vrot.slane %v932, %v995
        %v1013 = vmul.f32 %v936, %v830
        %v1014 = vmul.f32 %v940, %v830
        %v1015 = vmul.f32 %v944, %v830
        %v1016 = vmul.f32 %v948, %v830
        %v1017 = vmul.f32 %v952, %v830
        %v1018 = vmul.f32 %v956, %v830
        %v1019 = vmul.f32 %v960, %v830
        %v1020 = vmul.f32 %v964, %v830
        %v1021 = vmul.f32 %v968, %v830
        %v1022 = vmul.f32 %v972, %v830
        %v1023 = vmul.f32 %v976, %v830
        %v1024 = vmul.f32 %v980, %v830
        %v1025 = vmul.f32 %v984, %v830
        %v1026 = vmul.f32 %v988, %v830
        %v1027 = vmul.f32 %v992, %v830
        %v1028 = vmul.f32 %v996, %v830
        %v1030 = vsel %vm708, %v1013, 0
        %v1033 = vsel %vm708, %v768, 0
        %1035 = vmatprep.subr.mxu0 0.0
        %1036 = vmatpush1.xpose.msra.mxu0 %v1033
        %1037 = vmatprep.subr.mxu0 0.0
        %1038 = vmatpush1.xpose.msra.mxu0 0.0
        %1039 = vmatprep.subr.mxu0 0.0
        %1040 = vmatpush1.xpose.msra.mxu0 0.0
        %1041 = vmatprep.subr.mxu0 0.0
        %1042 = vmatpush1.xpose.msra.mxu0 0.0
        %1043 = vmatprep.subr.mxu0 0.0
        %1044 = vmatpush1.xpose.msra.mxu0 0.0
        %1045 = vmatprep.subr.mxu0 0.0
        %1046 = vmatpush1.xpose.msra.mxu0 0.0
        %1047 = vmatprep.subr.mxu0 0.0
        %1048 = vmatpush1.xpose.msra.mxu0 0.0
        %1049 = vmatprep.subr.mxu0 0.0
        %1050 = vmatpush1.xpose.msra.mxu0 0.0
        %1051 = vmatprep.subr.mxu0 0.0
        %1052 = vmatpush1.xpose.msra.mxu0 0.0
        %1053 = vmatprep.subr.mxu0 0.0
        %1054 = vmatpush1.xpose.msra.mxu0 0.0
        %1055 = vmatprep.subr.mxu0 0.0
        %1056 = vmatpush1.xpose.msra.mxu0 0.0
        %1057 = vmatprep.subr.mxu0 0.0
        %1058 = vmatpush1.xpose.msra.mxu0 0.0
        %1059 = vmatprep.subr.mxu0 0.0
        %1060 = vmatpush1.xpose.msra.mxu0 0.0
        %1061 = vmatprep.subr.mxu0 0.0
        %1062 = vmatpush1.xpose.msra.mxu0 0.0
        %1063 = vmatprep.subr.mxu0 0.0
        %1064 = vmatpush1.xpose.msra.mxu0 0.0
        %1065 = vmatprep.subr.mxu0 0.0
        %1066 = vmatpush1.xpose.msra.mxu0 0.0
        %1067 = vmatprep.subr.mxu0 0.0
        %1068 = vmatpush1.xpose.msra.mxu0 0.0
        %1069 = vmatprep.subr.mxu0 0.0
        %1070 = vmatpush1.xpose.msra.mxu0 0.0
        %1071 = vmatprep.subr.mxu0 0.0
        %1072 = vmatpush1.xpose.msra.mxu0 0.0
        %1073 = vmatprep.subr.mxu0 0.0
        %1074 = vmatpush1.xpose.msra.mxu0 0.0
        %1075 = vmatprep.subr.mxu0 0.0
        %1076 = vmatpush1.xpose.msra.mxu0 0.0
        %1077 = vmatprep.subr.mxu0 0.0
        %1078 = vmatpush1.xpose.msra.mxu0 0.0
        %1079 = vmatprep.subr.mxu0 0.0
        %1080 = vmatpush1.xpose.msra.mxu0 0.0
        %1081 = vmatprep.subr.mxu0 0.0
        %1082 = vmatpush1.xpose.msra.mxu0 0.0
        %1083 = vmatprep.subr.mxu0 0.0
        %1084 = vmatpush1.xpose.msra.mxu0 0.0
        %1085 = vmatprep.subr.mxu0 0.0
        %1086 = vmatpush1.xpose.msra.mxu0 0.0
        %1087 = vmatprep.subr.mxu0 0.0
        %1088 = vmatpush1.xpose.msra.mxu0 0.0
        %1089 = vmatprep.subr.mxu0 0.0
        %1090 = vmatpush1.xpose.msra.mxu0 0.0
        %1091 = vmatprep.subr.mxu0 0.0
        %1092 = vmatpush1.xpose.msra.mxu0 0.0
        %1093 = vmatprep.subr.mxu0 0.0
        %1094 = vmatpush1.xpose.msra.mxu0 0.0
        %1095 = vmatprep.subr.mxu0 0.0
        %1096 = vmatpush1.xpose.msra.mxu0 0.0
        %1097 = vmatprep.subr.mxu0 0.0
        %1098 = vmatpush1.xpose.msra.mxu0 0.0
        %1099 = vmatprep.mubr.f32.mxu0 0.0
        %1100 = vmatmul.mubr.f32.gmra.mrb[0].mxu0 %v1030
        %v1101 = vpop.f32.mrb[0].mxu0
        %v1102 = vadd.f32 0.0, %v1101
        %v1103 = vpop.f32.mrb[0].mxu0
        %1104 = vdwg.mxu0
        %v1106 = vsel %vm708, %v1014, 0
        %v1109 = vsel %vm708, %v771, 0
        %1111 = vmatprep.subr.mxu0 0.0
        %1112 = vmatpush1.xpose.msra.mxu0 %v1109
        %1113 = vmatprep.subr.mxu0 0.0
        %1114 = vmatpush1.xpose.msra.mxu0 0.0
        %1115 = vmatprep.subr.mxu0 0.0
        %1116 = vmatpush1.xpose.msra.mxu0 0.0
        %1117 = vmatprep.subr.mxu0 0.0
        %1118 = vmatpush1.xpose.msra.mxu0 0.0
        %1119 = vmatprep.subr.mxu0 0.0
        %1120 = vmatpush1.xpose.msra.mxu0 0.0
        %1121 = vmatprep.subr.mxu0 0.0
        %1122 = vmatpush1.xpose.msra.mxu0 0.0
        %1123 = vmatprep.subr.mxu0 0.0
        %1124 = vmatpush1.xpose.msra.mxu0 0.0
        %1125 = vmatprep.subr.mxu0 0.0
        %1126 = vmatpush1.xpose.msra.mxu0 0.0
        %1127 = vmatprep.subr.mxu0 0.0
        %1128 = vmatpush1.xpose.msra.mxu0 0.0
        %1129 = vmatprep.subr.mxu0 0.0
        %1130 = vmatpush1.xpose.msra.mxu0 0.0
        %1131 = vmatprep.subr.mxu0 0.0
        %1132 = vmatpush1.xpose.msra.mxu0 0.0
        %1133 = vmatprep.subr.mxu0 0.0
        %1134 = vmatpush1.xpose.msra.mxu0 0.0
        %1135 = vmatprep.subr.mxu0 0.0
        %1136 = vmatpush1.xpose.msra.mxu0 0.0
        %1137 = vmatprep.subr.mxu0 0.0
        %1138 = vmatpush1.xpose.msra.mxu0 0.0
        %1139 = vmatprep.subr.mxu0 0.0
        %1140 = vmatpush1.xpose.msra.mxu0 0.0
        %1141 = vmatprep.subr.mxu0 0.0
        %1142 = vmatpush1.xpose.msra.mxu0 0.0
        %1143 = vmatprep.subr.mxu0 0.0
        %1144 = vmatpush1.xpose.msra.mxu0 0.0
        %1145 = vmatprep.subr.mxu0 0.0
        %1146 = vmatpush1.xpose.msra.mxu0 0.0
        %1147 = vmatprep.subr.mxu0 0.0
        %1148 = vmatpush1.xpose.msra.mxu0 0.0
        %1149 = vmatprep.subr.mxu0 0.0
        %1150 = vmatpush1.xpose.msra.mxu0 0.0
        %1151 = vmatprep.subr.mxu0 0.0
        %1152 = vmatpush1.xpose.msra.mxu0 0.0
        %1153 = vmatprep.subr.mxu0 0.0
        %1154 = vmatpush1.xpose.msra.mxu0 0.0
        %1155 = vmatprep.subr.mxu0 0.0
        %1156 = vmatpush1.xpose.msra.mxu0 0.0
        %1157 = vmatprep.subr.mxu0 0.0
        %1158 = vmatpush1.xpose.msra.mxu0 0.0
        %1159 = vmatprep.subr.mxu0 0.0
        %1160 = vmatpush1.xpose.msra.mxu0 0.0
        %1161 = vmatprep.subr.mxu0 0.0
        %1162 = vmatpush1.xpose.msra.mxu0 0.0
        %1163 = vmatprep.subr.mxu0 0.0
        %1164 = vmatpush1.xpose.msra.mxu0 0.0
        %1165 = vmatprep.subr.mxu0 0.0
        %1166 = vmatpush1.xpose.msra.mxu0 0.0
        %1167 = vmatprep.subr.mxu0 0.0
        %1168 = vmatpush1.xpose.msra.mxu0 0.0
        %1169 = vmatprep.subr.mxu0 0.0
        %1170 = vmatpush1.xpose.msra.mxu0 0.0
        %1171 = vmatprep.subr.mxu0 0.0
        %1172 = vmatpush1.xpose.msra.mxu0 0.0
        %1173 = vmatprep.subr.mxu0 0.0
        %1174 = vmatpush1.xpose.msra.mxu0 0.0
        %1175 = vmatprep.mubr.f32.mxu0 0.0
        %1176 = vmatmul.mubr.f32.gmra.mrb[0].mxu0 %v1106
        %v1177 = vpop.f32.mrb[0].mxu0
        %v1178 = vadd.f32 0.0, %v1177
        %v1179 = vpop.f32.mrb[0].mxu0
        %1180 = vdwg.mxu0
        %v1182 = vsel %vm708, %v1015, 0
        %v1185 = vsel %vm708, %v776, 0
        %1187 = vmatprep.subr.mxu0 0.0
        %1188 = vmatpush1.xpose.msra.mxu0 %v1185
        %1189 = vmatprep.subr.mxu0 0.0
        %1190 = vmatpush1.xpose.msra.mxu0 0.0
        %1191 = vmatprep.subr.mxu0 0.0
        %1192 = vmatpush1.xpose.msra.mxu0 0.0
        %1193 = vmatprep.subr.mxu0 0.0
        %1194 = vmatpush1.xpose.msra.mxu0 0.0
        %1195 = vmatprep.subr.mxu0 0.0
        %1196 = vmatpush1.xpose.msra.mxu0 0.0
        %1197 = vmatprep.subr.mxu0 0.0
        %1198 = vmatpush1.xpose.msra.mxu0 0.0
        %1199 = vmatprep.subr.mxu0 0.0
        %1200 = vmatpush1.xpose.msra.mxu0 0.0
        %1201 = vmatprep.subr.mxu0 0.0
        %1202 = vmatpush1.xpose.msra.mxu0 0.0
        %1203 = vmatprep.subr.mxu0 0.0
        %1204 = vmatpush1.xpose.msra.mxu0 0.0
        %1205 = vmatprep.subr.mxu0 0.0
        %1206 = vmatpush1.xpose.msra.mxu0 0.0
        %1207 = vmatprep.subr.mxu0 0.0
        %1208 = vmatpush1.xpose.msra.mxu0 0.0
        %1209 = vmatprep.subr.mxu0 0.0
        %1210 = vmatpush1.xpose.msra.mxu0 0.0
        %1211 = vmatprep.subr.mxu0 0.0
        %1212 = vmatpush1.xpose.msra.mxu0 0.0
        %1213 = vmatprep.subr.mxu0 0.0
        %1214 = vmatpush1.xpose.msra.mxu0 0.0
        %1215 = vmatprep.subr.mxu0 0.0
        %1216 = vmatpush1.xpose.msra.mxu0 0.0
        %1217 = vmatprep.subr.mxu0 0.0
        %1218 = vmatpush1.xpose.msra.mxu0 0.0
        %1219 = vmatprep.subr.mxu0 0.0
        %1220 = vmatpush1.xpose.msra.mxu0 0.0
        %1221 = vmatprep.subr.mxu0 0.0
        %1222 = vmatpush1.xpose.msra.mxu0 0.0
        %1223 = vmatprep.subr.mxu0 0.0
        %1224 = vmatpush1.xpose.msra.mxu0 0.0
        %1225 = vmatprep.subr.mxu0 0.0
        %1226 = vmatpush1.xpose.msra.mxu0 0.0
        %1227 = vmatprep.subr.mxu0 0.0
        %1228 = vmatpush1.xpose.msra.mxu0 0.0
        %1229 = vmatprep.subr.mxu0 0.0
        %1230 = vmatpush1.xpose.msra.mxu0 0.0
        %1231 = vmatprep.subr.mxu0 0.0
        %1232 = vmatpush1.xpose.msra.mxu0 0.0
        %1233 = vmatprep.subr.mxu0 0.0
        %1234 = vmatpush1.xpose.msra.mxu0 0.0
        %1235 = vmatprep.subr.mxu0 0.0
        %1236 = vmatpush1.xpose.msra.mxu0 0.0
        %1237 = vmatprep.subr.mxu0 0.0
        %1238 = vmatpush1.xpose.msra.mxu0 0.0
        %1239 = vmatprep.subr.mxu0 0.0
        %1240 = vmatpush1.xpose.msra.mxu0 0.0
        %1241 = vmatprep.subr.mxu0 0.0
        %1242 = vmatpush1.xpose.msra.mxu0 0.0
        %1243 = vmatprep.subr.mxu0 0.0
        %1244 = vmatpush1.xpose.msra.mxu0 0.0
        %1245 = vmatprep.subr.mxu0 0.0
        %1246 = vmatpush1.xpose.msra.mxu0 0.0
        %1247 = vmatprep.subr.mxu0 0.0
        %1248 = vmatpush1.xpose.msra.mxu0 0.0
        %1249 = vmatprep.subr.mxu0 0.0
        %1250 = vmatpush1.xpose.msra.mxu0 0.0
        %1251 = vmatprep.mubr.f32.mxu0 0.0
        %1252 = vmatmul.mubr.f32.gmra.mrb[0].mxu0 %v1182
        %v1253 = vpop.f32.mrb[0].mxu0
        %v1254 = vadd.f32 0.0, %v1253
        %v1255 = vpop.f32.mrb[0].mxu0
        %1256 = vdwg.mxu0
        %v1258 = vsel %vm708, %v1016, 0
        %v1261 = vsel %vm708, %v779, 0
        %1263 = vmatprep.subr.mxu0 0.0
        %1264 = vmatpush1.xpose.msra.mxu0 %v1261
        %1265 = vmatprep.subr.mxu0 0.0
        %1266 = vmatpush1.xpose.msra.mxu0 0.0
        %1267 = vmatprep.subr.mxu0 0.0
        %1268 = vmatpush1.xpose.msra.mxu0 0.0
        %1269 = vmatprep.subr.mxu0 0.0
        %1270 = vmatpush1.xpose.msra.mxu0 0.0
        %1271 = vmatprep.subr.mxu0 0.0
        %1272 = vmatpush1.xpose.msra.mxu0 0.0
        %1273 = vmatprep.subr.mxu0 0.0
        %1274 = vmatpush1.xpose.msra.mxu0 0.0
        %1275 = vmatprep.subr.mxu0 0.0
        %1276 = vmatpush1.xpose.msra.mxu0 0.0
        %1277 = vmatprep.subr.mxu0 0.0
        %1278 = vmatpush1.xpose.msra.mxu0 0.0
        %1279 = vmatprep.subr.mxu0 0.0
        %1280 = vmatpush1.xpose.msra.mxu0 0.0
        %1281 = vmatprep.subr.mxu0 0.0
        %1282 = vmatpush1.xpose.msra.mxu0 0.0
        %1283 = vmatprep.subr.mxu0 0.0
        %1284 = vmatpush1.xpose.msra.mxu0 0.0
        %1285 = vmatprep.subr.mxu0 0.0
        %1286 = vmatpush1.xpose.msra.mxu0 0.0
        %1287 = vmatprep.subr.mxu0 0.0
        %1288 = vmatpush1.xpose.msra.mxu0 0.0
        %1289 = vmatprep.subr.mxu0 0.0
        %1290 = vmatpush1.xpose.msra.mxu0 0.0
        %1291 = vmatprep.subr.mxu0 0.0
        %1292 = vmatpush1.xpose.msra.mxu0 0.0
        %1293 = vmatprep.subr.mxu0 0.0
        %1294 = vmatpush1.xpose.msra.mxu0 0.0
        %1295 = vmatprep.subr.mxu0 0.0
        %1296 = vmatpush1.xpose.msra.mxu0 0.0
        %1297 = vmatprep.subr.mxu0 0.0
        %1298 = vmatpush1.xpose.msra.mxu0 0.0
        %1299 = vmatprep.subr.mxu0 0.0
        %1300 = vmatpush1.xpose.msra.mxu0 0.0
        %1301 = vmatprep.subr.mxu0 0.0
        %1302 = vmatpush1.xpose.msra.mxu0 0.0
        %1303 = vmatprep.subr.mxu0 0.0
        %1304 = vmatpush1.xpose.msra.mxu0 0.0
        %1305 = vmatprep.subr.mxu0 0.0
        %1306 = vmatpush1.xpose.msra.mxu0 0.0
        %1307 = vmatprep.subr.mxu0 0.0
        %1308 = vmatpush1.xpose.msra.mxu0 0.0
        %1309 = vmatprep.subr.mxu0 0.0
        %1310 = vmatpush1.xpose.msra.mxu0 0.0
        %1311 = vmatprep.subr.mxu0 0.0
        %1312 = vmatpush1.xpose.msra.mxu0 0.0
        %1313 = vmatprep.subr.mxu0 0.0
        %1314 = vmatpush1.xpose.msra.mxu0 0.0
        %1315 = vmatprep.subr.mxu0 0.0
        %1316 = vmatpush1.xpose.msra.mxu0 0.0
        %1317 = vmatprep.subr.mxu0 0.0
        %1318 = vmatpush1.xpose.msra.mxu0 0.0
        %1319 = vmatprep.subr.mxu0 0.0
        %1320 = vmatpush1.xpose.msra.mxu0 0.0
        %1321 = vmatprep.subr.mxu0 0.0
        %1322 = vmatpush1.xpose.msra.mxu0 0.0
        %1323 = vmatprep.subr.mxu0 0.0
        %1324 = vmatpush1.xpose.msra.mxu0 0.0
        %1325 = vmatprep.subr.mxu0 0.0
        %1326 = vmatpush1.xpose.msra.mxu0 0.0
        %1327 = vmatprep.mubr.f32.mxu0 0.0
        %1328 = vmatmul.mubr.f32.gmra.mrb[0].mxu0 %v1258
        %v1329 = vpop.f32.mrb[0].mxu0
        %v1330 = vadd.f32 0.0, %v1329
        %v1331 = vpop.f32.mrb[0].mxu0
        %1332 = vdwg.mxu0
        %v1334 = vsel %vm708, %v1017, 0
        %v1337 = vsel %vm708, %v784, 0
        %1339 = vmatprep.subr.mxu0 0.0
        %1340 = vmatpush1.xpose.msra.mxu0 %v1337
        %1341 = vmatprep.subr.mxu0 0.0
        %1342 = vmatpush1.xpose.msra.mxu0 0.0
        %1343 = vmatprep.subr.mxu0 0.0
        %1344 = vmatpush1.xpose.msra.mxu0 0.0
        %1345 = vmatprep.subr.mxu0 0.0
        %1346 = vmatpush1.xpose.msra.mxu0 0.0
        %1347 = vmatprep.subr.mxu0 0.0
        %1348 = vmatpush1.xpose.msra.mxu0 0.0
        %1349 = vmatprep.subr.mxu0 0.0
        %1350 = vmatpush1.xpose.msra.mxu0 0.0
        %1351 = vmatprep.subr.mxu0 0.0
        %1352 = vmatpush1.xpose.msra.mxu0 0.0
        %1353 = vmatprep.subr.mxu0 0.0
        %1354 = vmatpush1.xpose.msra.mxu0 0.0
        %1355 = vmatprep.subr.mxu0 0.0
        %1356 = vmatpush1.xpose.msra.mxu0 0.0
        %1357 = vmatprep.subr.mxu0 0.0
        %1358 = vmatpush1.xpose.msra.mxu0 0.0
        %1359 = vmatprep.subr.mxu0 0.0
        %1360 = vmatpush1.xpose.msra.mxu0 0.0
        %1361 = vmatprep.subr.mxu0 0.0
        %1362 = vmatpush1.xpose.msra.mxu0 0.0
        %1363 = vmatprep.subr.mxu0 0.0
        %1364 = vmatpush1.xpose.msra.mxu0 0.0
        %1365 = vmatprep.subr.mxu0 0.0
        %1366 = vmatpush1.xpose.msra.mxu0 0.0
        %1367 = vmatprep.subr.mxu0 0.0
        %1368 = vmatpush1.xpose.msra.mxu0 0.0
        %1369 = vmatprep.subr.mxu0 0.0
        %1370 = vmatpush1.xpose.msra.mxu0 0.0
        %1371 = vmatprep.subr.mxu0 0.0
        %1372 = vmatpush1.xpose.msra.mxu0 0.0
        %1373 = vmatprep.subr.mxu0 0.0
        %1374 = vmatpush1.xpose.msra.mxu0 0.0
        %1375 = vmatprep.subr.mxu0 0.0
        %1376 = vmatpush1.xpose.msra.mxu0 0.0
        %1377 = vmatprep.subr.mxu0 0.0
        %1378 = vmatpush1.xpose.msra.mxu0 0.0
        %1379 = vmatprep.subr.mxu0 0.0
        %1380 = vmatpush1.xpose.msra.mxu0 0.0
        %1381 = vmatprep.subr.mxu0 0.0
        %1382 = vmatpush1.xpose.msra.mxu0 0.0
        %1383 = vmatprep.subr.mxu0 0.0
        %1384 = vmatpush1.xpose.msra.mxu0 0.0
        %1385 = vmatprep.subr.mxu0 0.0
        %1386 = vmatpush1.xpose.msra.mxu0 0.0
        %1387 = vmatprep.subr.mxu0 0.0
        %1388 = vmatpush1.xpose.msra.mxu0 0.0
        %1389 = vmatprep.subr.mxu0 0.0
        %1390 = vmatpush1.xpose.msra.mxu0 0.0
        %1391 = vmatprep.subr.mxu0 0.0
        %1392 = vmatpush1.xpose.msra.mxu0 0.0
        %1393 = vmatprep.subr.mxu0 0.0
        %1394 = vmatpush1.xpose.msra.mxu0 0.0
        %1395 = vmatprep.subr.mxu0 0.0
        %1396 = vmatpush1.xpose.msra.mxu0 0.0
        %1397 = vmatprep.subr.mxu0 0.0
        %1398 = vmatpush1.xpose.msra.mxu0 0.0
        %1399 = vmatprep.subr.mxu0 0.0
        %1400 = vmatpush1.xpose.msra.mxu0 0.0
        %1401 = vmatprep.subr.mxu0 0.0
        %1402 = vmatpush1.xpose.msra.mxu0 0.0
        %1403 = vmatprep.mubr.f32.mxu0 0.0
        %1404 = vmatmul.mubr.f32.gmra.mrb[0].mxu0 %v1334
        %v1405 = vpop.f32.mrb[0].mxu0
        %v1406 = vadd.f32 0.0, %v1405
        %v1407 = vpop.f32.mrb[0].mxu0
        %1408 = vdwg.mxu0
        %v1410 = vsel %vm708, %v1018, 0
        %v1413 = vsel %vm708, %v787, 0
        %1415 = vmatprep.subr.mxu0 0.0
        %1416 = vmatpush1.xpose.msra.mxu0 %v1413
        %1417 = vmatprep.subr.mxu0 0.0
        %1418 = vmatpush1.xpose.msra.mxu0 0.0
        %1419 = vmatprep.subr.mxu0 0.0
        %1420 = vmatpush1.xpose.msra.mxu0 0.0
        %1421 = vmatprep.subr.mxu0 0.0
        %1422 = vmatpush1.xpose.msra.mxu0 0.0
        %1423 = vmatprep.subr.mxu0 0.0
        %1424 = vmatpush1.xpose.msra.mxu0 0.0
        %1425 = vmatprep.subr.mxu0 0.0
        %1426 = vmatpush1.xpose.msra.mxu0 0.0
        %1427 = vmatprep.subr.mxu0 0.0
        %1428 = vmatpush1.xpose.msra.mxu0 0.0
        %1429 = vmatprep.subr.mxu0 0.0
        %1430 = vmatpush1.xpose.msra.mxu0 0.0
        %1431 = vmatprep.subr.mxu0 0.0
        %1432 = vmatpush1.xpose.msra.mxu0 0.0
        %1433 = vmatprep.subr.mxu0 0.0
        %1434 = vmatpush1.xpose.msra.mxu0 0.0
        %1435 = vmatprep.subr.mxu0 0.0
        %1436 = vmatpush1.xpose.msra.mxu0 0.0
        %1437 = vmatprep.subr.mxu0 0.0
        %1438 = vmatpush1.xpose.msra.mxu0 0.0
        %1439 = vmatprep.subr.mxu0 0.0
        %1440 = vmatpush1.xpose.msra.mxu0 0.0
        %1441 = vmatprep.subr.mxu0 0.0
        %1442 = vmatpush1.xpose.msra.mxu0 0.0
        %1443 = vmatprep.subr.mxu0 0.0
        %1444 = vmatpush1.xpose.msra.mxu0 0.0
        %1445 = vmatprep.subr.mxu0 0.0
        %1446 = vmatpush1.xpose.msra.mxu0 0.0
        %1447 = vmatprep.subr.mxu0 0.0
        %1448 = vmatpush1.xpose.msra.mxu0 0.0
        %1449 = vmatprep.subr.mxu0 0.0
        %1450 = vmatpush1.xpose.msra.mxu0 0.0
        %1451 = vmatprep.subr.mxu0 0.0
        %1452 = vmatpush1.xpose.msra.mxu0 0.0
        %1453 = vmatprep.subr.mxu0 0.0
        %1454 = vmatpush1.xpose.msra.mxu0 0.0
        %1455 = vmatprep.subr.mxu0 0.0
        %1456 = vmatpush1.xpose.msra.mxu0 0.0
        %1457 = vmatprep.subr.mxu0 0.0
        %1458 = vmatpush1.xpose.msra.mxu0 0.0
        %1459 = vmatprep.subr.mxu0 0.0
        %1460 = vmatpush1.xpose.msra.mxu0 0.0
        %1461 = vmatprep.subr.mxu0 0.0
        %1462 = vmatpush1.xpose.msra.mxu0 0.0
        %1463 = vmatprep.subr.mxu0 0.0
        %1464 = vmatpush1.xpose.msra.mxu0 0.0
        %1465 = vmatprep.subr.mxu0 0.0
        %1466 = vmatpush1.xpose.msra.mxu0 0.0
        %1467 = vmatprep.subr.mxu0 0.0
        %1468 = vmatpush1.xpose.msra.mxu0 0.0
        %1469 = vmatprep.subr.mxu0 0.0
        %1470 = vmatpush1.xpose.msra.mxu0 0.0
        %1471 = vmatprep.subr.mxu0 0.0
        %1472 = vmatpush1.xpose.msra.mxu0 0.0
        %1473 = vmatprep.subr.mxu0 0.0
        %1474 = vmatpush1.xpose.msra.mxu0 0.0
        %1475 = vmatprep.subr.mxu0 0.0
        %1476 = vmatpush1.xpose.msra.mxu0 0.0
        %1477 = vmatprep.subr.mxu0 0.0
        %1478 = vmatpush1.xpose.msra.mxu0 0.0
        %1479 = vmatprep.mubr.f32.mxu0 0.0
        %1480 = vmatmul.mubr.f32.gmra.mrb[0].mxu0 %v1410
        %v1481 = vpop.f32.mrb[0].mxu0
        %v1482 = vadd.f32 0.0, %v1481
        %v1483 = vpop.f32.mrb[0].mxu0
        %1484 = vdwg.mxu0
        %v1486 = vsel %vm708, %v1019, 0
        %v1489 = vsel %vm708, %v792, 0
        %1491 = vmatprep.subr.mxu0 0.0
        %1492 = vmatpush1.xpose.msra.mxu0 %v1489
        %1493 = vmatprep.subr.mxu0 0.0
        %1494 = vmatpush1.xpose.msra.mxu0 0.0
        %1495 = vmatprep.subr.mxu0 0.0
        %1496 = vmatpush1.xpose.msra.mxu0 0.0
        %1497 = vmatprep.subr.mxu0 0.0
        %1498 = vmatpush1.xpose.msra.mxu0 0.0
        %1499 = vmatprep.subr.mxu0 0.0
        %1500 = vmatpush1.xpose.msra.mxu0 0.0
        %1501 = vmatprep.subr.mxu0 0.0
        %1502 = vmatpush1.xpose.msra.mxu0 0.0
        %1503 = vmatprep.subr.mxu0 0.0
        %1504 = vmatpush1.xpose.msra.mxu0 0.0
        %1505 = vmatprep.subr.mxu0 0.0
        %1506 = vmatpush1.xpose.msra.mxu0 0.0
        %1507 = vmatprep.subr.mxu0 0.0
        %1508 = vmatpush1.xpose.msra.mxu0 0.0
        %1509 = vmatprep.subr.mxu0 0.0
        %1510 = vmatpush1.xpose.msra.mxu0 0.0
        %1511 = vmatprep.subr.mxu0 0.0
        %1512 = vmatpush1.xpose.msra.mxu0 0.0
        %1513 = vmatprep.subr.mxu0 0.0
        %1514 = vmatpush1.xpose.msra.mxu0 0.0
        %1515 = vmatprep.subr.mxu0 0.0
        %1516 = vmatpush1.xpose.msra.mxu0 0.0
        %1517 = vmatprep.subr.mxu0 0.0
        %1518 = vmatpush1.xpose.msra.mxu0 0.0
        %1519 = vmatprep.subr.mxu0 0.0
        %1520 = vmatpush1.xpose.msra.mxu0 0.0
        %1521 = vmatprep.subr.mxu0 0.0
        %1522 = vmatpush1.xpose.msra.mxu0 0.0
        %1523 = vmatprep.subr.mxu0 0.0
        %1524 = vmatpush1.xpose.msra.mxu0 0.0
        %1525 = vmatprep.subr.mxu0 0.0
        %1526 = vmatpush1.xpose.msra.mxu0 0.0
        %1527 = vmatprep.subr.mxu0 0.0
        %1528 = vmatpush1.xpose.msra.mxu0 0.0
        %1529 = vmatprep.subr.mxu0 0.0
        %1530 = vmatpush1.xpose.msra.mxu0 0.0
        %1531 = vmatprep.subr.mxu0 0.0
        %1532 = vmatpush1.xpose.msra.mxu0 0.0
        %1533 = vmatprep.subr.mxu0 0.0
        %1534 = vmatpush1.xpose.msra.mxu0 0.0
        %1535 = vmatprep.subr.mxu0 0.0
        %1536 = vmatpush1.xpose.msra.mxu0 0.0
        %1537 = vmatprep.subr.mxu0 0.0
        %1538 = vmatpush1.xpose.msra.mxu0 0.0
        %1539 = vmatprep.subr.mxu0 0.0
        %1540 = vmatpush1.xpose.msra.mxu0 0.0
        %1541 = vmatprep.subr.mxu0 0.0
        %1542 = vmatpush1.xpose.msra.mxu0 0.0
        %1543 = vmatprep.subr.mxu0 0.0
        %1544 = vmatpush1.xpose.msra.mxu0 0.0
        %1545 = vmatprep.subr.mxu0 0.0
        %1546 = vmatpush1.xpose.msra.mxu0 0.0
        %1547 = vmatprep.subr.mxu0 0.0
        %1548 = vmatpush1.xpose.msra.mxu0 0.0
        %1549 = vmatprep.subr.mxu0 0.0
        %1550 = vmatpush1.xpose.msra.mxu0 0.0
        %1551 = vmatprep.subr.mxu0 0.0
        %1552 = vmatpush1.xpose.msra.mxu0 0.0
        %1553 = vmatprep.subr.mxu0 0.0
        %1554 = vmatpush1.xpose.msra.mxu0 0.0
        %1555 = vmatprep.mubr.f32.mxu0 0.0
        %1556 = vmatmul.mubr.f32.gmra.mrb[0].mxu0 %v1486
        %v1557 = vpop.f32.mrb[0].mxu0
        %v1558 = vadd.f32 0.0, %v1557
        %v1559 = vpop.f32.mrb[0].mxu0
        %1560 = vdwg.mxu0
        %v1562 = vsel %vm708, %v1020, 0
        %v1565 = vsel %vm708, %v795, 0
        %1567 = vmatprep.subr.mxu0 0.0
        %1568 = vmatpush1.xpose.msra.mxu0 %v1565
        %1569 = vmatprep.subr.mxu0 0.0
        %1570 = vmatpush1.xpose.msra.mxu0 0.0
        %1571 = vmatprep.subr.mxu0 0.0
        %1572 = vmatpush1.xpose.msra.mxu0 0.0
        %1573 = vmatprep.subr.mxu0 0.0
        %1574 = vmatpush1.xpose.msra.mxu0 0.0
        %1575 = vmatprep.subr.mxu0 0.0
        %1576 = vmatpush1.xpose.msra.mxu0 0.0
        %1577 = vmatprep.subr.mxu0 0.0
        %1578 = vmatpush1.xpose.msra.mxu0 0.0
        %1579 = vmatprep.subr.mxu0 0.0
        %1580 = vmatpush1.xpose.msra.mxu0 0.0
        %1581 = vmatprep.subr.mxu0 0.0
        %1582 = vmatpush1.xpose.msra.mxu0 0.0
        %1583 = vmatprep.subr.mxu0 0.0
        %1584 = vmatpush1.xpose.msra.mxu0 0.0
        %1585 = vmatprep.subr.mxu0 0.0
        %1586 = vmatpush1.xpose.msra.mxu0 0.0
        %1587 = vmatprep.subr.mxu0 0.0
        %1588 = vmatpush1.xpose.msra.mxu0 0.0
        %1589 = vmatprep.subr.mxu0 0.0
        %1590 = vmatpush1.xpose.msra.mxu0 0.0
        %1591 = vmatprep.subr.mxu0 0.0
        %1592 = vmatpush1.xpose.msra.mxu0 0.0
        %1593 = vmatprep.subr.mxu0 0.0
        %1594 = vmatpush1.xpose.msra.mxu0 0.0
        %1595 = vmatprep.subr.mxu0 0.0
        %1596 = vmatpush1.xpose.msra.mxu0 0.0
        %1597 = vmatprep.subr.mxu0 0.0
        %1598 = vmatpush1.xpose.msra.mxu0 0.0
        %1599 = vmatprep.subr.mxu0 0.0
        %1600 = vmatpush1.xpose.msra.mxu0 0.0
        %1601 = vmatprep.subr.mxu0 0.0
        %1602 = vmatpush1.xpose.msra.mxu0 0.0
        %1603 = vmatprep.subr.mxu0 0.0
        %1604 = vmatpush1.xpose.msra.mxu0 0.0
        %1605 = vmatprep.subr.mxu0 0.0
        %1606 = vmatpush1.xpose.msra.mxu0 0.0
        %1607 = vmatprep.subr.mxu0 0.0
        %1608 = vmatpush1.xpose.msra.mxu0 0.0
        %1609 = vmatprep.subr.mxu0 0.0
        %1610 = vmatpush1.xpose.msra.mxu0 0.0
        %1611 = vmatprep.subr.mxu0 0.0
        %1612 = vmatpush1.xpose.msra.mxu0 0.0
        %1613 = vmatprep.subr.mxu0 0.0
        %1614 = vmatpush1.xpose.msra.mxu0 0.0
        %1615 = vmatprep.subr.mxu0 0.0
        %1616 = vmatpush1.xpose.msra.mxu0 0.0
        %1617 = vmatprep.subr.mxu0 0.0
        %1618 = vmatpush1.xpose.msra.mxu0 0.0
        %1619 = vmatprep.subr.mxu0 0.0
        %1620 = vmatpush1.xpose.msra.mxu0 0.0
        %1621 = vmatprep.subr.mxu0 0.0
        %1622 = vmatpush1.xpose.msra.mxu0 0.0
        %1623 = vmatprep.subr.mxu0 0.0
        %1624 = vmatpush1.xpose.msra.mxu0 0.0
        %1625 = vmatprep.subr.mxu0 0.0
        %1626 = vmatpush1.xpose.msra.mxu0 0.0
        %1627 = vmatprep.subr.mxu0 0.0
        %1628 = vmatpush1.xpose.msra.mxu0 0.0
        %1629 = vmatprep.subr.mxu0 0.0
        %1630 = vmatpush1.xpose.msra.mxu0 0.0
        %1631 = vmatprep.mubr.f32.mxu0 0.0
        %1632 = vmatmul.mubr.f32.gmra.mrb[0].mxu0 %v1562
        %v1633 = vpop.f32.mrb[0].mxu0
        %v1634 = vadd.f32 0.0, %v1633
        %v1635 = vpop.f32.mrb[0].mxu0
        %1636 = vdwg.mxu0
        %v1638 = vsel %vm708, %v1021, 0
        %v1641 = vsel %vm708, %v800, 0
        %1643 = vmatprep.subr.mxu0 0.0
        %1644 = vmatpush1.xpose.msra.mxu0 %v1641
        %1645 = vmatprep.subr.mxu0 0.0
        %1646 = vmatpush1.xpose.msra.mxu0 0.0
        %1647 = vmatprep.subr.mxu0 0.0
        %1648 = vmatpush1.xpose.msra.mxu0 0.0
        %1649 = vmatprep.subr.mxu0 0.0
        %1650 = vmatpush1.xpose.msra.mxu0 0.0
        %1651 = vmatprep.subr.mxu0 0.0
        %1652 = vmatpush1.xpose.msra.mxu0 0.0
        %1653 = vmatprep.subr.mxu0 0.0
        %1654 = vmatpush1.xpose.msra.mxu0 0.0
        %1655 = vmatprep.subr.mxu0 0.0
        %1656 = vmatpush1.xpose.msra.mxu0 0.0
        %1657 = vmatprep.subr.mxu0 0.0
        %1658 = vmatpush1.xpose.msra.mxu0 0.0
        %1659 = vmatprep.subr.mxu0 0.0
        %1660 = vmatpush1.xpose.msra.mxu0 0.0
        %1661 = vmatprep.subr.mxu0 0.0
        %1662 = vmatpush1.xpose.msra.mxu0 0.0
        %1663 = vmatprep.subr.mxu0 0.0
        %1664 = vmatpush1.xpose.msra.mxu0 0.0
        %1665 = vmatprep.subr.mxu0 0.0
        %1666 = vmatpush1.xpose.msra.mxu0 0.0
        %1667 = vmatprep.subr.mxu0 0.0
        %1668 = vmatpush1.xpose.msra.mxu0 0.0
        %1669 = vmatprep.subr.mxu0 0.0
        %1670 = vmatpush1.xpose.msra.mxu0 0.0
        %1671 = vmatprep.subr.mxu0 0.0
        %1672 = vmatpush1.xpose.msra.mxu0 0.0
        %1673 = vmatprep.subr.mxu0 0.0
        %1674 = vmatpush1.xpose.msra.mxu0 0.0
        %1675 = vmatprep.subr.mxu0 0.0
        %1676 = vmatpush1.xpose.msra.mxu0 0.0
        %1677 = vmatprep.subr.mxu0 0.0
        %1678 = vmatpush1.xpose.msra.mxu0 0.0
        %1679 = vmatprep.subr.mxu0 0.0
        %1680 = vmatpush1.xpose.msra.mxu0 0.0
        %1681 = vmatprep.subr.mxu0 0.0
        %1682 = vmatpush1.xpose.msra.mxu0 0.0
        %1683 = vmatprep.subr.mxu0 0.0
        %1684 = vmatpush1.xpose.msra.mxu0 0.0
        %1685 = vmatprep.subr.mxu0 0.0
        %1686 = vmatpush1.xpose.msra.mxu0 0.0
        %1687 = vmatprep.subr.mxu0 0.0
        %1688 = vmatpush1.xpose.msra.mxu0 0.0
        %1689 = vmatprep.subr.mxu0 0.0
        %1690 = vmatpush1.xpose.msra.mxu0 0.0
        %1691 = vmatprep.subr.mxu0 0.0
        %1692 = vmatpush1.xpose.msra.mxu0 0.0
        %1693 = vmatprep.subr.mxu0 0.0
        %1694 = vmatpush1.xpose.msra.mxu0 0.0
        %1695 = vmatprep.subr.mxu0 0.0
        %1696 = vmatpush1.xpose.msra.mxu0 0.0
        %1697 = vmatprep.subr.mxu0 0.0
        %1698 = vmatpush1.xpose.msra.mxu0 0.0
        %1699 = vmatprep.subr.mxu0 0.0
        %1700 = vmatpush1.xpose.msra.mxu0 0.0
        %1701 = vmatprep.subr.mxu0 0.0
        %1702 = vmatpush1.xpose.msra.mxu0 0.0
        %1703 = vmatprep.subr.mxu0 0.0
        %1704 = vmatpush1.xpose.msra.mxu0 0.0
        %1705 = vmatprep.subr.mxu0 0.0
        %1706 = vmatpush1.xpose.msra.mxu0 0.0
        %1707 = vmatprep.mubr.f32.mxu0 0.0
        %1708 = vmatmul.mubr.f32.gmra.mrb[0].mxu0 %v1638
        %v1709 = vpop.f32.mrb[0].mxu0
        %v1710 = vadd.f32 0.0, %v1709
        %v1711 = vpop.f32.mrb[0].mxu0
        %1712 = vdwg.mxu0
        %v1714 = vsel %vm708, %v1022, 0
        %v1717 = vsel %vm708, %v803, 0
        %1719 = vmatprep.subr.mxu0 0.0
        %1720 = vmatpush1.xpose.msra.mxu0 %v1717
        %1721 = vmatprep.subr.mxu0 0.0
        %1722 = vmatpush1.xpose.msra.mxu0 0.0
        %1723 = vmatprep.subr.mxu0 0.0
        %1724 = vmatpush1.xpose.msra.mxu0 0.0
        %1725 = vmatprep.subr.mxu0 0.0
        %1726 = vmatpush1.xpose.msra.mxu0 0.0
        %1727 = vmatprep.subr.mxu0 0.0
        %1728 = vmatpush1.xpose.msra.mxu0 0.0
        %1729 = vmatprep.subr.mxu0 0.0
        %1730 = vmatpush1.xpose.msra.mxu0 0.0
        %1731 = vmatprep.subr.mxu0 0.0
        %1732 = vmatpush1.xpose.msra.mxu0 0.0
        %1733 = vmatprep.subr.mxu0 0.0
        %1734 = vmatpush1.xpose.msra.mxu0 0.0
        %1735 = vmatprep.subr.mxu0 0.0
        %1736 = vmatpush1.xpose.msra.mxu0 0.0
        %1737 = vmatprep.subr.mxu0 0.0
        %1738 = vmatpush1.xpose.msra.mxu0 0.0
        %1739 = vmatprep.subr.mxu0 0.0
        %1740 = vmatpush1.xpose.msra.mxu0 0.0
        %1741 = vmatprep.subr.mxu0 0.0
        %1742 = vmatpush1.xpose.msra.mxu0 0.0
        %1743 = vmatprep.subr.mxu0 0.0
        %1744 = vmatpush1.xpose.msra.mxu0 0.0
        %1745 = vmatprep.subr.mxu0 0.0
        %1746 = vmatpush1.xpose.msra.mxu0 0.0
        %1747 = vmatprep.subr.mxu0 0.0
        %1748 = vmatpush1.xpose.msra.mxu0 0.0
        %1749 = vmatprep.subr.mxu0 0.0
        %1750 = vmatpush1.xpose.msra.mxu0 0.0
        %1751 = vmatprep.subr.mxu0 0.0
        %1752 = vmatpush1.xpose.msra.mxu0 0.0
        %1753 = vmatprep.subr.mxu0 0.0
        %1754 = vmatpush1.xpose.msra.mxu0 0.0
        %1755 = vmatprep.subr.mxu0 0.0
        %1756 = vmatpush1.xpose.msra.mxu0 0.0
        %1757 = vmatprep.subr.mxu0 0.0
        %1758 = vmatpush1.xpose.msra.mxu0 0.0
        %1759 = vmatprep.subr.mxu0 0.0
        %1760 = vmatpush1.xpose.msra.mxu0 0.0
        %1761 = vmatprep.subr.mxu0 0.0
        %1762 = vmatpush1.xpose.msra.mxu0 0.0
        %1763 = vmatprep.subr.mxu0 0.0
        %1764 = vmatpush1.xpose.msra.mxu0 0.0
        %1765 = vmatprep.subr.mxu0 0.0
        %1766 = vmatpush1.xpose.msra.mxu0 0.0
        %1767 = vmatprep.subr.mxu0 0.0
        %1768 = vmatpush1.xpose.msra.mxu0 0.0
        %1769 = vmatprep.subr.mxu0 0.0
        %1770 = vmatpush1.xpose.msra.mxu0 0.0
        %1771 = vmatprep.subr.mxu0 0.0
        %1772 = vmatpush1.xpose.msra.mxu0 0.0
        %1773 = vmatprep.subr.mxu0 0.0
        %1774 = vmatpush1.xpose.msra.mxu0 0.0
        %1775 = vmatprep.subr.mxu0 0.0
        %1776 = vmatpush1.xpose.msra.mxu0 0.0
        %1777 = vmatprep.subr.mxu0 0.0
        %1778 = vmatpush1.xpose.msra.mxu0 0.0
        %1779 = vmatprep.subr.mxu0 0.0
        %1780 = vmatpush1.xpose.msra.mxu0 0.0
        %1781 = vmatprep.subr.mxu0 0.0
        %1782 = vmatpush1.xpose.msra.mxu0 0.0
        %1783 = vmatprep.mubr.f32.mxu0 0.0
        %1784 = vmatmul.mubr.f32.gmra.mrb[0].mxu0 %v1714
        %v1785 = vpop.f32.mrb[0].mxu0
        %v1786 = vadd.f32 0.0, %v1785
        %v1787 = vpop.f32.mrb[0].mxu0
        %1788 = vdwg.mxu0
        %v1790 = vsel %vm708, %v1023, 0
        %v1793 = vsel %vm708, %v808, 0
        %1795 = vmatprep.subr.mxu0 0.0
        %1796 = vmatpush1.xpose.msra.mxu0 %v1793
        %1797 = vmatprep.subr.mxu0 0.0
        %1798 = vmatpush1.xpose.msra.mxu0 0.0
        %1799 = vmatprep.subr.mxu0 0.0
        %1800 = vmatpush1.xpose.msra.mxu0 0.0
        %1801 = vmatprep.subr.mxu0 0.0
        %1802 = vmatpush1.xpose.msra.mxu0 0.0
        %1803 = vmatprep.subr.mxu0 0.0
        %1804 = vmatpush1.xpose.msra.mxu0 0.0
        %1805 = vmatprep.subr.mxu0 0.0
        %1806 = vmatpush1.xpose.msra.mxu0 0.0
        %1807 = vmatprep.subr.mxu0 0.0
        %1808 = vmatpush1.xpose.msra.mxu0 0.0
        %1809 = vmatprep.subr.mxu0 0.0
        %1810 = vmatpush1.xpose.msra.mxu0 0.0
        %1811 = vmatprep.subr.mxu0 0.0
        %1812 = vmatpush1.xpose.msra.mxu0 0.0
        %1813 = vmatprep.subr.mxu0 0.0
        %1814 = vmatpush1.xpose.msra.mxu0 0.0
        %1815 = vmatprep.subr.mxu0 0.0
        %1816 = vmatpush1.xpose.msra.mxu0 0.0
        %1817 = vmatprep.subr.mxu0 0.0
        %1818 = vmatpush1.xpose.msra.mxu0 0.0
        %1819 = vmatprep.subr.mxu0 0.0
        %1820 = vmatpush1.xpose.msra.mxu0 0.0
        %1821 = vmatprep.subr.mxu0 0.0
        %1822 = vmatpush1.xpose.msra.mxu0 0.0
        %1823 = vmatprep.subr.mxu0 0.0
        %1824 = vmatpush1.xpose.msra.mxu0 0.0
        %1825 = vmatprep.subr.mxu0 0.0
        %1826 = vmatpush1.xpose.msra.mxu0 0.0
        %1827 = vmatprep.subr.mxu0 0.0
        %1828 = vmatpush1.xpose.msra.mxu0 0.0
        %1829 = vmatprep.subr.mxu0 0.0
        %1830 = vmatpush1.xpose.msra.mxu0 0.0
        %1831 = vmatprep.subr.mxu0 0.0
        %1832 = vmatpush1.xpose.msra.mxu0 0.0
        %1833 = vmatprep.subr.mxu0 0.0
        %1834 = vmatpush1.xpose.msra.mxu0 0.0
        %1835 = vmatprep.subr.mxu0 0.0
        %1836 = vmatpush1.xpose.msra.mxu0 0.0
        %1837 = vmatprep.subr.mxu0 0.0
        %1838 = vmatpush1.xpose.msra.mxu0 0.0
        %1839 = vmatprep.subr.mxu0 0.0
        %1840 = vmatpush1.xpose.msra.mxu0 0.0
        %1841 = vmatprep.subr.mxu0 0.0
        %1842 = vmatpush1.xpose.msra.mxu0 0.0
        %1843 = vmatprep.subr.mxu0 0.0
        %1844 = vmatpush1.xpose.msra.mxu0 0.0
        %1845 = vmatprep.subr.mxu0 0.0
        %1846 = vmatpush1.xpose.msra.mxu0 0.0
        %1847 = vmatprep.subr.mxu0 0.0
        %1848 = vmatpush1.xpose.msra.mxu0 0.0
        %1849 = vmatprep.subr.mxu0 0.0
        %1850 = vmatpush1.xpose.msra.mxu0 0.0
        %1851 = vmatprep.subr.mxu0 0.0
        %1852 = vmatpush1.xpose.msra.mxu0 0.0
        %1853 = vmatprep.subr.mxu0 0.0
        %1854 = vmatpush1.xpose.msra.mxu0 0.0
        %1855 = vmatprep.subr.mxu0 0.0
        %1856 = vmatpush1.xpose.msra.mxu0 0.0
        %1857 = vmatprep.subr.mxu0 0.0
        %1858 = vmatpush1.xpose.msra.mxu0 0.0
        %1859 = vmatprep.mubr.f32.mxu0 0.0
        %1860 = vmatmul.mubr.f32.gmra.mrb[0].mxu0 %v1790
        %v1861 = vpop.f32.mrb[0].mxu0
        %v1862 = vadd.f32 0.0, %v1861
        %v1863 = vpop.f32.mrb[0].mxu0
        %1864 = vdwg.mxu0
        %v1866 = vsel %vm708, %v1024, 0
        %v1869 = vsel %vm708, %v811, 0
        %1871 = vmatprep.subr.mxu0 0.0
        %1872 = vmatpush1.xpose.msra.mxu0 %v1869
        %1873 = vmatprep.subr.mxu0 0.0
        %1874 = vmatpush1.xpose.msra.mxu0 0.0
        %1875 = vmatprep.subr.mxu0 0.0
        %1876 = vmatpush1.xpose.msra.mxu0 0.0
        %1877 = vmatprep.subr.mxu0 0.0
        %1878 = vmatpush1.xpose.msra.mxu0 0.0
        %1879 = vmatprep.subr.mxu0 0.0
        %1880 = vmatpush1.xpose.msra.mxu0 0.0
        %1881 = vmatprep.subr.mxu0 0.0
        %1882 = vmatpush1.xpose.msra.mxu0 0.0
        %1883 = vmatprep.subr.mxu0 0.0
        %1884 = vmatpush1.xpose.msra.mxu0 0.0
        %1885 = vmatprep.subr.mxu0 0.0
        %1886 = vmatpush1.xpose.msra.mxu0 0.0
        %1887 = vmatprep.subr.mxu0 0.0
        %1888 = vmatpush1.xpose.msra.mxu0 0.0
        %1889 = vmatprep.subr.mxu0 0.0
        %1890 = vmatpush1.xpose.msra.mxu0 0.0
        %1891 = vmatprep.subr.mxu0 0.0
        %1892 = vmatpush1.xpose.msra.mxu0 0.0
        %1893 = vmatprep.subr.mxu0 0.0
        %1894 = vmatpush1.xpose.msra.mxu0 0.0
        %1895 = vmatprep.subr.mxu0 0.0
        %1896 = vmatpush1.xpose.msra.mxu0 0.0
        %1897 = vmatprep.subr.mxu0 0.0
        %1898 = vmatpush1.xpose.msra.mxu0 0.0
        %1899 = vmatprep.subr.mxu0 0.0
        %1900 = vmatpush1.xpose.msra.mxu0 0.0
        %1901 = vmatprep.subr.mxu0 0.0
        %1902 = vmatpush1.xpose.msra.mxu0 0.0
        %1903 = vmatprep.subr.mxu0 0.0
        %1904 = vmatpush1.xpose.msra.mxu0 0.0
        %1905 = vmatprep.subr.mxu0 0.0
        %1906 = vmatpush1.xpose.msra.mxu0 0.0
        %1907 = vmatprep.subr.mxu0 0.0
        %1908 = vmatpush1.xpose.msra.mxu0 0.0
        %1909 = vmatprep.subr.mxu0 0.0
        %1910 = vmatpush1.xpose.msra.mxu0 0.0
        %1911 = vmatprep.subr.mxu0 0.0
        %1912 = vmatpush1.xpose.msra.mxu0 0.0
        %1913 = vmatprep.subr.mxu0 0.0
        %1914 = vmatpush1.xpose.msra.mxu0 0.0
        %1915 = vmatprep.subr.mxu0 0.0
        %1916 = vmatpush1.xpose.msra.mxu0 0.0
        %1917 = vmatprep.subr.mxu0 0.0
        %1918 = vmatpush1.xpose.msra.mxu0 0.0
        %1919 = vmatprep.subr.mxu0 0.0
        %1920 = vmatpush1.xpose.msra.mxu0 0.0
        %1921 = vmatprep.subr.mxu0 0.0
        %1922 = vmatpush1.xpose.msra.mxu0 0.0
        %1923 = vmatprep.subr.mxu0 0.0
        %1924 = vmatpush1.xpose.msra.mxu0 0.0
        %1925 = vmatprep.subr.mxu0 0.0
        %1926 = vmatpush1.xpose.msra.mxu0 0.0
        %1927 = vmatprep.subr.mxu0 0.0
        %1928 = vmatpush1.xpose.msra.mxu0 0.0
        %1929 = vmatprep.subr.mxu0 0.0
        %1930 = vmatpush1.xpose.msra.mxu0 0.0
        %1931 = vmatprep.subr.mxu0 0.0
        %1932 = vmatpush1.xpose.msra.mxu0 0.0
        %1933 = vmatprep.subr.mxu0 0.0
        %1934 = vmatpush1.xpose.msra.mxu0 0.0
        %1935 = vmatprep.mubr.f32.mxu0 0.0
        %1936 = vmatmul.mubr.f32.gmra.mrb[0].mxu0 %v1866
        %v1937 = vpop.f32.mrb[0].mxu0
        %v1938 = vadd.f32 0.0, %v1937
        %v1939 = vpop.f32.mrb[0].mxu0
        %1940 = vdwg.mxu0
        %v1942 = vsel %vm708, %v1025, 0
        %v1945 = vsel %vm708, %v816, 0
        %1947 = vmatprep.subr.mxu0 0.0
        %1948 = vmatpush1.xpose.msra.mxu0 %v1945
        %1949 = vmatprep.subr.mxu0 0.0
        %1950 = vmatpush1.xpose.msra.mxu0 0.0
        %1951 = vmatprep.subr.mxu0 0.0
        %1952 = vmatpush1.xpose.msra.mxu0 0.0
        %1953 = vmatprep.subr.mxu0 0.0
        %1954 = vmatpush1.xpose.msra.mxu0 0.0
        %1955 = vmatprep.subr.mxu0 0.0
        %1956 = vmatpush1.xpose.msra.mxu0 0.0
        %1957 = vmatprep.subr.mxu0 0.0
        %1958 = vmatpush1.xpose.msra.mxu0 0.0
        %1959 = vmatprep.subr.mxu0 0.0
        %1960 = vmatpush1.xpose.msra.mxu0 0.0
        %1961 = vmatprep.subr.mxu0 0.0
        %1962 = vmatpush1.xpose.msra.mxu0 0.0
        %1963 = vmatprep.subr.mxu0 0.0
        %1964 = vmatpush1.xpose.msra.mxu0 0.0
        %1965 = vmatprep.subr.mxu0 0.0
        %1966 = vmatpush1.xpose.msra.mxu0 0.0
        %1967 = vmatprep.subr.mxu0 0.0
        %1968 = vmatpush1.xpose.msra.mxu0 0.0
        %1969 = vmatprep.subr.mxu0 0.0
        %1970 = vmatpush1.xpose.msra.mxu0 0.0
        %1971 = vmatprep.subr.mxu0 0.0
        %1972 = vmatpush1.xpose.msra.mxu0 0.0
        %1973 = vmatprep.subr.mxu0 0.0
        %1974 = vmatpush1.xpose.msra.mxu0 0.0
        %1975 = vmatprep.subr.mxu0 0.0
        %1976 = vmatpush1.xpose.msra.mxu0 0.0
        %1977 = vmatprep.subr.mxu0 0.0
        %1978 = vmatpush1.xpose.msra.mxu0 0.0
        %1979 = vmatprep.subr.mxu0 0.0
        %1980 = vmatpush1.xpose.msra.mxu0 0.0
        %1981 = vmatprep.subr.mxu0 0.0
        %1982 = vmatpush1.xpose.msra.mxu0 0.0
        %1983 = vmatprep.subr.mxu0 0.0
        %1984 = vmatpush1.xpose.msra.mxu0 0.0
        %1985 = vmatprep.subr.mxu0 0.0
        %1986 = vmatpush1.xpose.msra.mxu0 0.0
        %1987 = vmatprep.subr.mxu0 0.0
        %1988 = vmatpush1.xpose.msra.mxu0 0.0
        %1989 = vmatprep.subr.mxu0 0.0
        %1990 = vmatpush1.xpose.msra.mxu0 0.0
        %1991 = vmatprep.subr.mxu0 0.0
        %1992 = vmatpush1.xpose.msra.mxu0 0.0
        %1993 = vmatprep.subr.mxu0 0.0
        %1994 = vmatpush1.xpose.msra.mxu0 0.0
        %1995 = vmatprep.subr.mxu0 0.0
        %1996 = vmatpush1.xpose.msra.mxu0 0.0
        %1997 = vmatprep.subr.mxu0 0.0
        %1998 = vmatpush1.xpose.msra.mxu0 0.0
        %1999 = vmatprep.subr.mxu0 0.0
        %2000 = vmatpush1.xpose.msra.mxu0 0.0
        %2001 = vmatprep.subr.mxu0 0.0
        %2002 = vmatpush1.xpose.msra.mxu0 0.0
        %2003 = vmatprep.subr.mxu0 0.0
        %2004 = vmatpush1.xpose.msra.mxu0 0.0
        %2005 = vmatprep.subr.mxu0 0.0
        %2006 = vmatpush1.xpose.msra.mxu0 0.0
        %2007 = vmatprep.subr.mxu0 0.0
        %2008 = vmatpush1.xpose.msra.mxu0 0.0
        %2009 = vmatprep.subr.mxu0 0.0
        %2010 = vmatpush1.xpose.msra.mxu0 0.0
        %2011 = vmatprep.mubr.f32.mxu0 0.0
        %2012 = vmatmul.mubr.f32.gmra.mrb[0].mxu0 %v1942
        %v2013 = vpop.f32.mrb[0].mxu0
        %v2014 = vadd.f32 0.0, %v2013
        %v2015 = vpop.f32.mrb[0].mxu0
        %2016 = vdwg.mxu0
        %v2018 = vsel %vm708, %v1026, 0
        %v2021 = vsel %vm708, %v819, 0
        %2023 = vmatprep.subr.mxu0 0.0
        %2024 = vmatpush1.xpose.msra.mxu0 %v2021
        %2025 = vmatprep.subr.mxu0 0.0
        %2026 = vmatpush1.xpose.msra.mxu0 0.0
        %2027 = vmatprep.subr.mxu0 0.0
        %2028 = vmatpush1.xpose.msra.mxu0 0.0
        %2029 = vmatprep.subr.mxu0 0.0
        %2030 = vmatpush1.xpose.msra.mxu0 0.0
        %2031 = vmatprep.subr.mxu0 0.0
        %2032 = vmatpush1.xpose.msra.mxu0 0.0
        %2033 = vmatprep.subr.mxu0 0.0
        %2034 = vmatpush1.xpose.msra.mxu0 0.0
        %2035 = vmatprep.subr.mxu0 0.0
        %2036 = vmatpush1.xpose.msra.mxu0 0.0
        %2037 = vmatprep.subr.mxu0 0.0
        %2038 = vmatpush1.xpose.msra.mxu0 0.0
        %2039 = vmatprep.subr.mxu0 0.0
        %2040 = vmatpush1.xpose.msra.mxu0 0.0
        %2041 = vmatprep.subr.mxu0 0.0
        %2042 = vmatpush1.xpose.msra.mxu0 0.0
        %2043 = vmatprep.subr.mxu0 0.0
        %2044 = vmatpush1.xpose.msra.mxu0 0.0
        %2045 = vmatprep.subr.mxu0 0.0
        %2046 = vmatpush1.xpose.msra.mxu0 0.0
        %2047 = vmatprep.subr.mxu0 0.0
        %2048 = vmatpush1.xpose.msra.mxu0 0.0
        %2049 = vmatprep.subr.mxu0 0.0
        %2050 = vmatpush1.xpose.msra.mxu0 0.0
        %2051 = vmatprep.subr.mxu0 0.0
        %2052 = vmatpush1.xpose.msra.mxu0 0.0
        %2053 = vmatprep.subr.mxu0 0.0
        %2054 = vmatpush1.xpose.msra.mxu0 0.0
        %2055 = vmatprep.subr.mxu0 0.0
        %2056 = vmatpush1.xpose.msra.mxu0 0.0
        %2057 = vmatprep.subr.mxu0 0.0
        %2058 = vmatpush1.xpose.msra.mxu0 0.0
        %2059 = vmatprep.subr.mxu0 0.0
        %2060 = vmatpush1.xpose.msra.mxu0 0.0
        %2061 = vmatprep.subr.mxu0 0.0
        %2062 = vmatpush1.xpose.msra.mxu0 0.0
        %2063 = vmatprep.subr.mxu0 0.0
        %2064 = vmatpush1.xpose.msra.mxu0 0.0
        %2065 = vmatprep.subr.mxu0 0.0
        %2066 = vmatpush1.xpose.msra.mxu0 0.0
        %2067 = vmatprep.subr.mxu0 0.0
        %2068 = vmatpush1.xpose.msra.mxu0 0.0
        %2069 = vmatprep.subr.mxu0 0.0
        %2070 = vmatpush1.xpose.msra.mxu0 0.0
        %2071 = vmatprep.subr.mxu0 0.0
        %2072 = vmatpush1.xpose.msra.mxu0 0.0
        %2073 = vmatprep.subr.mxu0 0.0
        %2074 = vmatpush1.xpose.msra.mxu0 0.0
        %2075 = vmatprep.subr.mxu0 0.0
        %2076 = vmatpush1.xpose.msra.mxu0 0.0
        %2077 = vmatprep.subr.mxu0 0.0
        %2078 = vmatpush1.xpose.msra.mxu0 0.0
        %2079 = vmatprep.subr.mxu0 0.0
        %2080 = vmatpush1.xpose.msra.mxu0 0.0
        %2081 = vmatprep.subr.mxu0 0.0
        %2082 = vmatpush1.xpose.msra.mxu0 0.0
        %2083 = vmatprep.subr.mxu0 0.0
        %2084 = vmatpush1.xpose.msra.mxu0 0.0
        %2085 = vmatprep.subr.mxu0 0.0
        %2086 = vmatpush1.xpose.msra.mxu0 0.0
        %2087 = vmatprep.mubr.f32.mxu0 0.0
        %2088 = vmatmul.mubr.f32.gmra.mrb[0].mxu0 %v2018
        %v2089 = vpop.f32.mrb[0].mxu0
        %v2090 = vadd.f32 0.0, %v2089
        %v2091 = vpop.f32.mrb[0].mxu0
        %2092 = vdwg.mxu0
        %v2094 = vsel %vm708, %v1027, 0
        %v2097 = vsel %vm708, %v824, 0
        %2099 = vmatprep.subr.mxu0 0.0
        %2100 = vmatpush1.xpose.msra.mxu0 %v2097
        %2101 = vmatprep.subr.mxu0 0.0
        %2102 = vmatpush1.xpose.msra.mxu0 0.0
        %2103 = vmatprep.subr.mxu0 0.0
        %2104 = vmatpush1.xpose.msra.mxu0 0.0
        %2105 = vmatprep.subr.mxu0 0.0
        %2106 = vmatpush1.xpose.msra.mxu0 0.0
        %2107 = vmatprep.subr.mxu0 0.0
        %2108 = vmatpush1.xpose.msra.mxu0 0.0
        %2109 = vmatprep.subr.mxu0 0.0
        %2110 = vmatpush1.xpose.msra.mxu0 0.0
        %2111 = vmatprep.subr.mxu0 0.0
        %2112 = vmatpush1.xpose.msra.mxu0 0.0
        %2113 = vmatprep.subr.mxu0 0.0
        %2114 = vmatpush1.xpose.msra.mxu0 0.0
        %2115 = vmatprep.subr.mxu0 0.0
        %2116 = vmatpush1.xpose.msra.mxu0 0.0
        %2117 = vmatprep.subr.mxu0 0.0
        %2118 = vmatpush1.xpose.msra.mxu0 0.0
        %2119 = vmatprep.subr.mxu0 0.0
        %2120 = vmatpush1.xpose.msra.mxu0 0.0
        %2121 = vmatprep.subr.mxu0 0.0
        %2122 = vmatpush1.xpose.msra.mxu0 0.0
        %2123 = vmatprep.subr.mxu0 0.0
        %2124 = vmatpush1.xpose.msra.mxu0 0.0
        %2125 = vmatprep.subr.mxu0 0.0
        %2126 = vmatpush1.xpose.msra.mxu0 0.0
        %2127 = vmatprep.subr.mxu0 0.0
        %2128 = vmatpush1.xpose.msra.mxu0 0.0
        %2129 = vmatprep.subr.mxu0 0.0
        %2130 = vmatpush1.xpose.msra.mxu0 0.0
        %2131 = vmatprep.subr.mxu0 0.0
        %2132 = vmatpush1.xpose.msra.mxu0 0.0
        %2133 = vmatprep.subr.mxu0 0.0
        %2134 = vmatpush1.xpose.msra.mxu0 0.0
        %2135 = vmatprep.subr.mxu0 0.0
        %2136 = vmatpush1.xpose.msra.mxu0 0.0
        %2137 = vmatprep.subr.mxu0 0.0
        %2138 = vmatpush1.xpose.msra.mxu0 0.0
        %2139 = vmatprep.subr.mxu0 0.0
        %2140 = vmatpush1.xpose.msra.mxu0 0.0
        %2141 = vmatprep.subr.mxu0 0.0
        %2142 = vmatpush1.xpose.msra.mxu0 0.0
        %2143 = vmatprep.subr.mxu0 0.0
        %2144 = vmatpush1.xpose.msra.mxu0 0.0
        %2145 = vmatprep.subr.mxu0 0.0
        %2146 = vmatpush1.xpose.msra.mxu0 0.0
        %2147 = vmatprep.subr.mxu0 0.0
        %2148 = vmatpush1.xpose.msra.mxu0 0.0
        %2149 = vmatprep.subr.mxu0 0.0
        %2150 = vmatpush1.xpose.msra.mxu0 0.0
        %2151 = vmatprep.subr.mxu0 0.0
        %2152 = vmatpush1.xpose.msra.mxu0 0.0
        %2153 = vmatprep.subr.mxu0 0.0
        %2154 = vmatpush1.xpose.msra.mxu0 0.0
        %2155 = vmatprep.subr.mxu0 0.0
        %2156 = vmatpush1.xpose.msra.mxu0 0.0
        %2157 = vmatprep.subr.mxu0 0.0
        %2158 = vmatpush1.xpose.msra.mxu0 0.0
        %2159 = vmatprep.subr.mxu0 0.0
        %2160 = vmatpush1.xpose.msra.mxu0 0.0
        %2161 = vmatprep.subr.mxu0 0.0
        %2162 = vmatpush1.xpose.msra.mxu0 0.0
        %2163 = vmatprep.mubr.f32.mxu0 0.0
        %2164 = vmatmul.mubr.f32.gmra.mrb[0].mxu0 %v2094
        %v2165 = vpop.f32.mrb[0].mxu0
        %v2166 = vadd.f32 0.0, %v2165
        %v2167 = vpop.f32.mrb[0].mxu0
        %2168 = vdwg.mxu0
        %v2170 = vsel %vm708, %v1028, 0
        %v2173 = vsel %vm708, %v827, 0
        %2175 = vmatprep.subr.mxu0 0.0
        %2176 = vmatpush1.xpose.msra.mxu0 %v2173
        %2177 = vmatprep.subr.mxu0 0.0
        %2178 = vmatpush1.xpose.msra.mxu0 0.0
        %2179 = vmatprep.subr.mxu0 0.0
        %2180 = vmatpush1.xpose.msra.mxu0 0.0
        %2181 = vmatprep.subr.mxu0 0.0
        %2182 = vmatpush1.xpose.msra.mxu0 0.0
        %2183 = vmatprep.subr.mxu0 0.0
        %2184 = vmatpush1.xpose.msra.mxu0 0.0
        %2185 = vmatprep.subr.mxu0 0.0
        %2186 = vmatpush1.xpose.msra.mxu0 0.0
        %2187 = vmatprep.subr.mxu0 0.0
        %2188 = vmatpush1.xpose.msra.mxu0 0.0
        %2189 = vmatprep.subr.mxu0 0.0
        %2190 = vmatpush1.xpose.msra.mxu0 0.0
        %2191 = vmatprep.subr.mxu0 0.0
        %2192 = vmatpush1.xpose.msra.mxu0 0.0
        %2193 = vmatprep.subr.mxu0 0.0
        %2194 = vmatpush1.xpose.msra.mxu0 0.0
        %2195 = vmatprep.subr.mxu0 0.0
        %2196 = vmatpush1.xpose.msra.mxu0 0.0
        %2197 = vmatprep.subr.mxu0 0.0
        %2198 = vmatpush1.xpose.msra.mxu0 0.0
        %2199 = vmatprep.subr.mxu0 0.0
        %2200 = vmatpush1.xpose.msra.mxu0 0.0
        %2201 = vmatprep.subr.mxu0 0.0
        %2202 = vmatpush1.xpose.msra.mxu0 0.0
        %2203 = vmatprep.subr.mxu0 0.0
        %2204 = vmatpush1.xpose.msra.mxu0 0.0
        %2205 = vmatprep.subr.mxu0 0.0
        %2206 = vmatpush1.xpose.msra.mxu0 0.0
        %2207 = vmatprep.subr.mxu0 0.0
        %2208 = vmatpush1.xpose.msra.mxu0 0.0
        %2209 = vmatprep.subr.mxu0 0.0
        %2210 = vmatpush1.xpose.msra.mxu0 0.0
        %2211 = vmatprep.subr.mxu0 0.0
        %2212 = vmatpush1.xpose.msra.mxu0 0.0
        %2213 = vmatprep.subr.mxu0 0.0
        %2214 = vmatpush1.xpose.msra.mxu0 0.0
        %2215 = vmatprep.subr.mxu0 0.0
        %2216 = vmatpush1.xpose.msra.mxu0 0.0
        %2217 = vmatprep.subr.mxu0 0.0
        %2218 = vmatpush1.xpose.msra.mxu0 0.0
        %2219 = vmatprep.subr.mxu0 0.0
        %2220 = vmatpush1.xpose.msra.mxu0 0.0
        %2221 = vmatprep.subr.mxu0 0.0
        %2222 = vmatpush1.xpose.msra.mxu0 0.0
        %2223 = vmatprep.subr.mxu0 0.0
        %2224 = vmatpush1.xpose.msra.mxu0 0.0
        %2225 = vmatprep.subr.mxu0 0.0
        %2226 = vmatpush1.xpose.msra.mxu0 0.0
        %2227 = vmatprep.subr.mxu0 0.0
        %2228 = vmatpush1.xpose.msra.mxu0 0.0
        %2229 = vmatprep.subr.mxu0 0.0
        %2230 = vmatpush1.xpose.msra.mxu0 0.0
        %2231 = vmatprep.subr.mxu0 0.0
        %2232 = vmatpush1.xpose.msra.mxu0 0.0
        %2233 = vmatprep.subr.mxu0 0.0
        %2234 = vmatpush1.xpose.msra.mxu0 0.0
        %2235 = vmatprep.subr.mxu0 0.0
        %2236 = vmatpush1.xpose.msra.mxu0 0.0
        %2237 = vmatprep.subr.mxu0 0.0
        %2238 = vmatpush1.xpose.msra.mxu0 0.0
        %2239 = vmatprep.mubr.f32.mxu0 0.0
        %2240 = vmatmul.mubr.f32.gmra.mrb[0].mxu0 %v2170
        %v2241 = vpop.f32.mrb[0].mxu0
        %v2242 = vadd.f32 0.0, %v2241
        %v2243 = vpop.f32.mrb[0].mxu0
        %2244 = vdwg.mxu0
        %v2245 = vld [vmem:[%s474] sm:$0xff]
        %v2246 = vld [vmem:[%s474 + $0x8] sm:$0xff]
        %v2249 = vcombine.high %v2245, %v2245
        %v2251 = vunpack.c.l.s4 1966171168
        %v2252 = vunpack.c.0.s8 %v2251
        %v2253 = vlaneseq
        %v2254 = vshrl.u32 %v2253, 7
        %v2255 = vsub.s32 %v2252, %v2254
        %v2256 = vrot.slane %v2245, %v2255
        %v2258 = vunpack.c.l.s4 1966171168
        %v2259 = vunpack.c.0.s8 %v2258
        %v2260 = vlaneseq
        %v2261 = vshrl.u32 %v2260, 7
        %v2262 = vsub.s32 %v2259, %v2261
        %v2263 = vrot.slane %v2249, %v2262
        %v2264 = vcombine.high %v2256, %v2256
        %v2265 = vcombine.high %v2263, %v2263
        %v2267 = vunpack.c.l.s4 1966171168
        %v2268 = vunpack.c.0.s8 %v2267
        %v2269 = vlaneseq
        %v2270 = vshrl.u32 %v2269, 7
        %v2271 = vsub.s32 %v2268, %v2270
        %v2272 = vrot.slane %v2256, %v2271
        %v2274 = vunpack.c.l.s4 1966171168
        %v2275 = vunpack.c.0.s8 %v2274
        %v2276 = vlaneseq
        %v2277 = vshrl.u32 %v2276, 7
        %v2278 = vsub.s32 %v2275, %v2277
        %v2279 = vrot.slane %v2263, %v2278
        %v2281 = vunpack.c.l.s4 1966171168
        %v2282 = vunpack.c.0.s8 %v2281
        %v2283 = vlaneseq
        %v2284 = vshrl.u32 %v2283, 7
        %v2285 = vsub.s32 %v2282, %v2284
        %v2286 = vrot.slane %v2264, %v2285
        %v2288 = vunpack.c.l.s4 1966171168
        %v2289 = vunpack.c.0.s8 %v2288
        %v2290 = vlaneseq
        %v2291 = vshrl.u32 %v2290, 7
        %v2292 = vsub.s32 %v2289, %v2291
        %v2293 = vrot.slane %v2265, %v2292
        %v2294 = vcombine.high %v2272, %v2272
        %v2295 = vcombine.high %v2279, %v2279
        %v2296 = vcombine.high %v2286, %v2286
        %v2297 = vcombine.high %v2293, %v2293
        %v2298 = vcombine.high %v2246, %v2246
        %v2300 = vunpack.c.l.s4 1966171168
        %v2301 = vunpack.c.0.s8 %v2300
        %v2302 = vlaneseq
        %v2303 = vshrl.u32 %v2302, 7
        %v2304 = vsub.s32 %v2301, %v2303
        %v2305 = vrot.slane %v2246, %v2304
        %v2307 = vunpack.c.l.s4 1966171168
        %v2308 = vunpack.c.0.s8 %v2307
        %v2309 = vlaneseq
        %v2310 = vshrl.u32 %v2309, 7
        %v2311 = vsub.s32 %v2308, %v2310
        %v2312 = vrot.slane %v2298, %v2311
        %v2313 = vcombine.high %v2305, %v2305
        %v2314 = vcombine.high %v2312, %v2312
        %v2316 = vunpack.c.l.s4 1966171168
        %v2317 = vunpack.c.0.s8 %v2316
        %v2318 = vlaneseq
        %v2319 = vshrl.u32 %v2318, 7
        %v2320 = vsub.s32 %v2317, %v2319
        %v2321 = vrot.slane %v2305, %v2320
        %v2323 = vunpack.c.l.s4 1966171168
        %v2324 = vunpack.c.0.s8 %v2323
        %v2325 = vlaneseq
        %v2326 = vshrl.u32 %v2325, 7
        %v2327 = vsub.s32 %v2324, %v2326
        %v2328 = vrot.slane %v2312, %v2327
        %v2330 = vunpack.c.l.s4 1966171168
        %v2331 = vunpack.c.0.s8 %v2330
        %v2332 = vlaneseq
        %v2333 = vshrl.u32 %v2332, 7
        %v2334 = vsub.s32 %v2331, %v2333
        %v2335 = vrot.slane %v2313, %v2334
        %v2337 = vunpack.c.l.s4 1966171168
        %v2338 = vunpack.c.0.s8 %v2337
        %v2339 = vlaneseq
        %v2340 = vshrl.u32 %v2339, 7
        %v2341 = vsub.s32 %v2338, %v2340
        %v2342 = vrot.slane %v2314, %v2341
        %v2343 = vcombine.high %v2321, %v2321
        %v2344 = vcombine.high %v2328, %v2328
        %v2345 = vcombine.high %v2335, %v2335
        %v2346 = vcombine.high %v2342, %v2342
        %vm2363 = vcmp.gt.f32.partialorder %v2272, 0.5
        %vm2364 = vcmp.gt.f32.partialorder %v2286, 0.5
        %vm2365 = vcmp.gt.f32.partialorder %v2294, 0.5
        %vm2366 = vcmp.gt.f32.partialorder %v2296, 0.5
        %vm2367 = vcmp.gt.f32.partialorder %v2279, 0.5
        %vm2368 = vcmp.gt.f32.partialorder %v2293, 0.5
        %vm2369 = vcmp.gt.f32.partialorder %v2295, 0.5
        %vm2370 = vcmp.gt.f32.partialorder %v2297, 0.5
        %vm2371 = vcmp.gt.f32.partialorder %v2321, 0.5
        %vm2372 = vcmp.gt.f32.partialorder %v2335, 0.5
        %vm2373 = vcmp.gt.f32.partialorder %v2343, 0.5
        %vm2374 = vcmp.gt.f32.partialorder %v2345, 0.5
        %vm2375 = vcmp.gt.f32.partialorder %v2328, 0.5
        %vm2376 = vcmp.gt.f32.partialorder %v2342, 0.5
        %vm2377 = vcmp.gt.f32.partialorder %v2344, 0.5
        %vm2378 = vcmp.gt.f32.partialorder %v2346, 0.5
        %v2379 = vsel %vm2363, 1, 0
        %v2380 = vsel %vm2364, 1, 0
        %v2381 = vsel %vm2365, 1, 0
        %v2382 = vsel %vm2366, 1, 0
        %v2383 = vsel %vm2367, 1, 0
        %v2384 = vsel %vm2368, 1, 0
        %v2385 = vsel %vm2369, 1, 0
        %v2386 = vsel %vm2370, 1, 0
        %v2387 = vsel %vm2371, 1, 0
        %v2388 = vsel %vm2372, 1, 0
        %v2389 = vsel %vm2373, 1, 0
        %v2390 = vsel %vm2374, 1, 0
        %v2391 = vsel %vm2375, 1, 0
        %v2392 = vsel %vm2376, 1, 0
        %v2393 = vsel %vm2377, 1, 0
        %v2394 = vsel %vm2378, 1, 0
        %v2395 = vlaneseq
        %v2396 = vshrl.u32 %v2395, 7
        %v2397 = vsub.s32 0, %v2396
        %v2398 = vrot.slane %v2379, %v2397
        %v2399 = vlaneseq
        %v2400 = vshrl.u32 %v2399, 7
        %v2401 = vsub.s32 0, %v2400
        %v2402 = vrot.slane %v2380, %v2401
        %v2403 = vlaneseq
        %v2404 = vshrl.u32 %v2403, 7
        %v2405 = vsub.s32 0, %v2404
        %v2406 = vrot.slane %v2381, %v2405
        %v2407 = vlaneseq
        %v2408 = vshrl.u32 %v2407, 7
        %v2409 = vsub.s32 0, %v2408
        %v2410 = vrot.slane %v2382, %v2409
        %v2411 = vlaneseq
        %v2412 = vshrl.u32 %v2411, 7
        %v2413 = vsub.s32 0, %v2412
        %v2414 = vrot.slane %v2383, %v2413
        %v2415 = vlaneseq
        %v2416 = vshrl.u32 %v2415, 7
        %v2417 = vsub.s32 0, %v2416
        %v2418 = vrot.slane %v2384, %v2417
        %v2419 = vlaneseq
        %v2420 = vshrl.u32 %v2419, 7
        %v2421 = vsub.s32 0, %v2420
        %v2422 = vrot.slane %v2385, %v2421
        %v2423 = vlaneseq
        %v2424 = vshrl.u32 %v2423, 7
        %v2425 = vsub.s32 0, %v2424
        %v2426 = vrot.slane %v2386, %v2425
        %v2427 = vlaneseq
        %v2428 = vshrl.u32 %v2427, 7
        %v2429 = vsub.s32 0, %v2428
        %v2430 = vrot.slane %v2387, %v2429
        %v2431 = vlaneseq
        %v2432 = vshrl.u32 %v2431, 7
        %v2433 = vsub.s32 0, %v2432
        %v2434 = vrot.slane %v2388, %v2433
        %v2435 = vlaneseq
        %v2436 = vshrl.u32 %v2435, 7
        %v2437 = vsub.s32 0, %v2436
        %v2438 = vrot.slane %v2389, %v2437
        %v2439 = vlaneseq
        %v2440 = vshrl.u32 %v2439, 7
        %v2441 = vsub.s32 0, %v2440
        %v2442 = vrot.slane %v2390, %v2441
        %v2443 = vlaneseq
        %v2444 = vshrl.u32 %v2443, 7
        %v2445 = vsub.s32 0, %v2444
        %v2446 = vrot.slane %v2391, %v2445
        %v2447 = vlaneseq
        %v2448 = vshrl.u32 %v2447, 7
        %v2449 = vsub.s32 0, %v2448
        %v2450 = vrot.slane %v2392, %v2449
        %v2451 = vlaneseq
        %v2452 = vshrl.u32 %v2451, 7
        %v2453 = vsub.s32 0, %v2452
        %v2454 = vrot.slane %v2393, %v2453
        %v2455 = vlaneseq
        %v2456 = vshrl.u32 %v2455, 7
        %v2457 = vsub.s32 0, %v2456
        %v2458 = vrot.slane %v2394, %v2457
        %vm2459 = vcmp.eq.s32.totalorder %v2398, 1
        %vm2460 = vcmp.eq.s32.totalorder %v2402, 1
        %vm2461 = vcmp.eq.s32.totalorder %v2406, 1
        %vm2462 = vcmp.eq.s32.totalorder %v2410, 1
        %vm2463 = vcmp.eq.s32.totalorder %v2414, 1
        %vm2464 = vcmp.eq.s32.totalorder %v2418, 1
        %vm2465 = vcmp.eq.s32.totalorder %v2422, 1
        %vm2466 = vcmp.eq.s32.totalorder %v2426, 1
        %vm2467 = vcmp.eq.s32.totalorder %v2430, 1
        %vm2468 = vcmp.eq.s32.totalorder %v2434, 1
        %vm2469 = vcmp.eq.s32.totalorder %v2438, 1
        %vm2470 = vcmp.eq.s32.totalorder %v2442, 1
        %vm2471 = vcmp.eq.s32.totalorder %v2446, 1
        %vm2472 = vcmp.eq.s32.totalorder %v2450, 1
        %vm2473 = vcmp.eq.s32.totalorder %v2454, 1
        %vm2474 = vcmp.eq.s32.totalorder %v2458, 1
        %v2475 = vsel %vm2459, %v1102, -1e+30
        %v2476 = vsel %vm2460, %v1178, -1e+30
        %v2477 = vsel %vm2461, %v1254, -1e+30
        %v2478 = vsel %vm2462, %v1330, -1e+30
        %v2479 = vsel %vm2463, %v1406, -1e+30
        %v2480 = vsel %vm2464, %v1482, -1e+30
        %v2481 = vsel %vm2465, %v1558, -1e+30
        %v2482 = vsel %vm2466, %v1634, -1e+30
        %v2483 = vsel %vm2467, %v1710, -1e+30
        %v2484 = vsel %vm2468, %v1786, -1e+30
        %v2485 = vsel %vm2469, %v1862, -1e+30
        %v2486 = vsel %vm2470, %v1938, -1e+30
        %v2487 = vsel %vm2471, %v2014, -1e+30
        %v2488 = vsel %vm2472, %v2090, -1e+30
        %v2489 = vsel %vm2473, %v2166, -1e+30
        %v2490 = vsel %vm2474, %v2242, -1e+30
        %vm2491 = vcmask 58368
        %v2492 = vsel %vm2491, %v2475, -inf
        %2493 = vmax.xlane.f32.xlu0 %v2492
        %v2494 = vpop.xlane.xlu0 %2493
        %v2495 = vsel %vm2491, %v2476, -inf
        %2496 = vmax.xlane.f32.xlu0 %v2495
        %v2497 = vpop.xlane.xlu0 %2496
        %v2498 = vsel %vm2491, %v2477, -inf
        %2499 = vmax.xlane.f32.xlu0 %v2498
        %v2500 = vpop.xlane.xlu0 %2499
        %v2501 = vsel %vm2491, %v2478, -inf
        %2502 = vmax.xlane.f32.xlu0 %v2501
        %v2503 = vpop.xlane.xlu0 %2502
        %v2504 = vsel %vm2491, %v2479, -inf
        %2505 = vmax.xlane.f32.xlu0 %v2504
        %v2506 = vpop.xlane.xlu0 %2505
        %v2507 = vsel %vm2491, %v2480, -inf
        %2508 = vmax.xlane.f32.xlu0 %v2507
        %v2509 = vpop.xlane.xlu0 %2508
        %v2510 = vsel %vm2491, %v2481, -inf
        %2511 = vmax.xlane.f32.xlu0 %v2510
        %v2512 = vpop.xlane.xlu0 %2511
        %v2513 = vsel %vm2491, %v2482, -inf
        %2514 = vmax.xlane.f32.xlu0 %v2513
        %v2515 = vpop.xlane.xlu0 %2514
        %v2516 = vsel %vm2491, %v2483, -inf
        %2517 = vmax.xlane.f32.xlu0 %v2516
        %v2518 = vpop.xlane.xlu0 %2517
        %v2519 = vsel %vm2491, %v2484, -inf
        %2520 = vmax.xlane.f32.xlu0 %v2519
        %v2521 = vpop.xlane.xlu0 %2520
        %v2522 = vsel %vm2491, %v2485, -inf
        %2523 = vmax.xlane.f32.xlu0 %v2522
        %v2524 = vpop.xlane.xlu0 %2523
        %v2525 = vsel %vm2491, %v2486, -inf
        %2526 = vmax.xlane.f32.xlu0 %v2525
        %v2527 = vpop.xlane.xlu0 %2526
        %v2528 = vsel %vm2491, %v2487, -inf
        %2529 = vmax.xlane.f32.xlu0 %v2528
        %v2530 = vpop.xlane.xlu0 %2529
        %v2531 = vsel %vm2491, %v2488, -inf
        %2532 = vmax.xlane.f32.xlu0 %v2531
        %v2533 = vpop.xlane.xlu0 %2532
        %v2534 = vsel %vm2491, %v2489, -inf
        %2535 = vmax.xlane.f32.xlu0 %v2534
        %v2536 = vpop.xlane.xlu0 %2535
        %v2537 = vsel %vm2491, %v2490, -inf
        %2538 = vmax.xlane.f32.xlu0 %v2537
        %v2539 = vpop.xlane.xlu0 %2538
        %v2540 = vsub.f32 %v2475, %v2494
        %v2541 = vsub.f32 %v2476, %v2497
        %v2542 = vsub.f32 %v2477, %v2500
        %v2543 = vsub.f32 %v2478, %v2503
        %v2544 = vsub.f32 %v2479, %v2506
        %v2545 = vsub.f32 %v2480, %v2509
        %v2546 = vsub.f32 %v2481, %v2512
        %v2547 = vsub.f32 %v2482, %v2515
        %v2548 = vsub.f32 %v2483, %v2518
        %v2549 = vsub.f32 %v2484, %v2521
        %v2550 = vsub.f32 %v2485, %v2524
        %v2551 = vsub.f32 %v2486, %v2527
        %v2552 = vsub.f32 %v2487, %v2530
        %v2553 = vsub.f32 %v2488, %v2533
        %v2554 = vsub.f32 %v2489, %v2536
        %v2555 = vsub.f32 %v2490, %v2539
        %v2556 = vmul.f32 %v2540, 1.442695
        %v2557 = vpow.pop %v2556
        %v2558 = vmul.f32 %v2541, 1.442695
        %v2559 = vpow.pop %v2558
        %v2560 = vmul.f32 %v2542, 1.442695
        %v2561 = vpow.pop %v2560
        %v2562 = vmul.f32 %v2543, 1.442695
        %v2563 = vpow.pop %v2562
        %v2564 = vmul.f32 %v2544, 1.442695
        %v2565 = vpow.pop %v2564
        %v2566 = vmul.f32 %v2545, 1.442695
        %v2567 = vpow.pop %v2566
        %v2568 = vmul.f32 %v2546, 1.442695
        %v2569 = vpow.pop %v2568
        %v2570 = vmul.f32 %v2547, 1.442695
        %v2571 = vpow.pop %v2570
        %v2572 = vmul.f32 %v2548, 1.442695
        %v2573 = vpow.pop %v2572
        %v2574 = vmul.f32 %v2549, 1.442695
        %v2575 = vpow.pop %v2574
        %v2576 = vmul.f32 %v2550, 1.442695
        %v2577 = vpow.pop %v2576
        %v2578 = vmul.f32 %v2551, 1.442695
        %v2579 = vpow.pop %v2578
        %v2580 = vmul.f32 %v2552, 1.442695
        %v2581 = vpow.pop %v2580
        %v2582 = vmul.f32 %v2553, 1.442695
        %v2583 = vpow.pop %v2582
        %v2584 = vmul.f32 %v2554, 1.442695
        %v2585 = vpow.pop %v2584
        %v2586 = vmul.f32 %v2555, 1.442695
        %v2587 = vpow.pop %v2586
        %v2588 = vsel %vm2491, %v2557, 0.0
        %2589 = vadd.xlane.f32.xlu0 %v2588
        %v2590 = vpop.xlane.xlu0 %2589
        %v2591 = vsel %vm2491, %v2559, 0.0
        %2592 = vadd.xlane.f32.xlu0 %v2591
        %v2593 = vpop.xlane.xlu0 %2592
        %v2594 = vsel %vm2491, %v2561, 0.0
        %2595 = vadd.xlane.f32.xlu0 %v2594
        %v2596 = vpop.xlane.xlu0 %2595
        %v2597 = vsel %vm2491, %v2563, 0.0
        %2598 = vadd.xlane.f32.xlu0 %v2597
        %v2599 = vpop.xlane.xlu0 %2598
        %v2600 = vsel %vm2491, %v2565, 0.0
        %2601 = vadd.xlane.f32.xlu0 %v2600
        %v2602 = vpop.xlane.xlu0 %2601
        %v2603 = vsel %vm2491, %v2567, 0.0
        %2604 = vadd.xlane.f32.xlu0 %v2603
        %v2605 = vpop.xlane.xlu0 %2604
        %v2606 = vsel %vm2491, %v2569, 0.0
        %2607 = vadd.xlane.f32.xlu0 %v2606
        %v2608 = vpop.xlane.xlu0 %2607
        %v2609 = vsel %vm2491, %v2571, 0.0
        %2610 = vadd.xlane.f32.xlu0 %v2609
        %v2611 = vpop.xlane.xlu0 %2610
        %v2612 = vsel %vm2491, %v2573, 0.0
        %2613 = vadd.xlane.f32.xlu0 %v2612
        %v2614 = vpop.xlane.xlu0 %2613
        %v2615 = vsel %vm2491, %v2575, 0.0
        %2616 = vadd.xlane.f32.xlu0 %v2615
        %v2617 = vpop.xlane.xlu0 %2616
        %v2618 = vsel %vm2491, %v2577, 0.0
        %2619 = vadd.xlane.f32.xlu0 %v2618
        %v2620 = vpop.xlane.xlu0 %2619
        %v2621 = vsel %vm2491, %v2579, 0.0
        %2622 = vadd.xlane.f32.xlu0 %v2621
        %v2623 = vpop.xlane.xlu0 %2622
        %v2624 = vsel %vm2491, %v2581, 0.0
        %2625 = vadd.xlane.f32.xlu0 %v2624
        %v2626 = vpop.xlane.xlu0 %2625
        %v2627 = vsel %vm2491, %v2583, 0.0
        %2628 = vadd.xlane.f32.xlu0 %v2627
        %v2629 = vpop.xlane.xlu0 %2628
        %v2630 = vsel %vm2491, %v2585, 0.0
        %2631 = vadd.xlane.f32.xlu0 %v2630
        %v2632 = vpop.xlane.xlu0 %2631
        %v2633 = vsel %vm2491, %v2587, 0.0
        %2634 = vadd.xlane.f32.xlu0 %v2633
        %v2635 = vpop.xlane.xlu0 %2634
        %v2636 = vrcp.pop %v2590
        %v2637 = vrcp.pop %v2593
        %v2638 = vrcp.pop %v2596
        %v2639 = vrcp.pop %v2599
        %v2640 = vrcp.pop %v2602
        %v2641 = vrcp.pop %v2605
        %v2642 = vrcp.pop %v2608
        %v2643 = vrcp.pop %v2611
        %v2644 = vrcp.pop %v2614
        %v2645 = vrcp.pop %v2617
        %v2646 = vrcp.pop %v2620
        %v2647 = vrcp.pop %v2623
        %v2648 = vrcp.pop %v2626
        %v2649 = vrcp.pop %v2629
        %v2650 = vrcp.pop %v2632
        %v2651 = vrcp.pop %v2635
        %v2652 = vmul.f32 %v2557, %v2636
        %v2653 = vmul.f32 %v2559, %v2637
        %v2654 = vmul.f32 %v2561, %v2638
        %v2655 = vmul.f32 %v2563, %v2639
        %v2656 = vmul.f32 %v2565, %v2640
        %v2657 = vmul.f32 %v2567, %v2641
        %v2658 = vmul.f32 %v2569, %v2642
        %v2659 = vmul.f32 %v2571, %v2643
        %v2660 = vmul.f32 %v2573, %v2644
        %v2661 = vmul.f32 %v2575, %v2645
        %v2662 = vmul.f32 %v2577, %v2646
        %v2663 = vmul.f32 %v2579, %v2647
        %v2664 = vmul.f32 %v2581, %v2648
        %v2665 = vmul.f32 %v2583, %v2649
        %v2666 = vmul.f32 %v2585, %v2650
        %v2667 = vmul.f32 %v2587, %v2651
        %2668 = vrot.lane.b32.xlu0 %v768, 96
        %v2669 = vpop.permute.xlu0 %2668
        %vm2671 = vcmask 64512
        %v2673 = vsel %vm2671, %v2652, 0
        %2675 = vmatprep.subr.mxu0 0.0
        %2676 = vmatpush1.msra.mxu0 %v2669
        %2677 = vmatprep.subr.mxu0 0.0
        %2678 = vmatpush1.msra.mxu0 0.0
        %2679 = vmatprep.subr.mxu0 0.0
        %2680 = vmatpush1.msra.mxu0 0.0
        %2681 = vmatprep.subr.mxu0 0.0
        %2682 = vmatpush1.msra.mxu0 0.0
        %2683 = vmatprep.subr.mxu0 0.0
        %2684 = vmatpush1.msra.mxu0 0.0
        %2685 = vmatprep.subr.mxu0 0.0
        %2686 = vmatpush1.msra.mxu0 0.0
        %2687 = vmatprep.subr.mxu0 0.0
        %2688 = vmatpush1.msra.mxu0 0.0
        %2689 = vmatprep.subr.mxu0 0.0
        %2690 = vmatpush1.msra.mxu0 0.0
        %2691 = vmatprep.subr.mxu0 0.0
        %2692 = vmatpush1.msra.mxu0 0.0
        %2693 = vmatprep.subr.mxu0 0.0
        %2694 = vmatpush1.msra.mxu0 0.0
        %2695 = vmatprep.subr.mxu0 0.0
        %2696 = vmatpush1.msra.mxu0 0.0
        %2697 = vmatprep.subr.mxu0 0.0
        %2698 = vmatpush1.msra.mxu0 0.0
        %2699 = vmatprep.subr.mxu0 0.0
        %2700 = vmatpush1.msra.mxu0 0.0
        %2701 = vmatprep.subr.mxu0 0.0
        %2702 = vmatpush1.msra.mxu0 0.0
        %2703 = vmatprep.subr.mxu0 0.0
        %2704 = vmatpush1.msra.mxu0 0.0
        %2705 = vmatprep.subr.mxu0 0.0
        %2706 = vmatpush1.msra.mxu0 0.0
        %2707 = vmatprep.subr.mxu0 0.0
        %2708 = vmatpush1.msra.mxu0 0.0
        %2709 = vmatprep.subr.mxu0 0.0
        %2710 = vmatpush1.msra.mxu0 0.0
        %2711 = vmatprep.subr.mxu0 0.0
        %2712 = vmatpush1.msra.mxu0 0.0
        %2713 = vmatprep.subr.mxu0 0.0
        %2714 = vmatpush1.msra.mxu0 0.0
        %2715 = vmatprep.subr.mxu0 0.0
        %2716 = vmatpush1.msra.mxu0 0.0
        %2717 = vmatprep.subr.mxu0 0.0
        %2718 = vmatpush1.msra.mxu0 0.0
        %2719 = vmatprep.subr.mxu0 0.0
        %2720 = vmatpush1.msra.mxu0 0.0
        %2721 = vmatprep.subr.mxu0 0.0
        %2722 = vmatpush1.msra.mxu0 0.0
        %2723 = vmatprep.subr.mxu0 0.0
        %2724 = vmatpush1.msra.mxu0 0.0
        %2725 = vmatprep.subr.mxu0 0.0
        %2726 = vmatpush1.msra.mxu0 0.0
        %2727 = vmatprep.subr.mxu0 0.0
        %2728 = vmatpush1.msra.mxu0 0.0
        %2729 = vmatprep.subr.mxu0 0.0
        %2730 = vmatpush1.msra.mxu0 0.0
        %2731 = vmatprep.subr.mxu0 0.0
        %2732 = vmatpush1.msra.mxu0 0.0
        %2733 = vmatprep.subr.mxu0 0.0
        %2734 = vmatpush1.msra.mxu0 0.0
        %2735 = vmatprep.subr.mxu0 0.0
        %2736 = vmatpush1.msra.mxu0 0.0
        %2737 = vmatprep.subr.mxu0 0.0
        %2738 = vmatpush1.msra.mxu0 0.0
        %2739 = vmatprep.mubr.f32.mxu0 0.0
        %2740 = vmatmul.mubr.f32.gmra.mrb[0].mxu0 %v2673
        %v2741 = vpop.f32.mrb[0].mxu0
        %v2742 = vadd.f32 0.0, %v2741
        %v2743 = vpop.f32.mrb[0].mxu0
        %2744 = vdwg.mxu0
        %2745 = vrot.lane.b32.xlu0 %v771, 96
        %v2746 = vpop.permute.xlu0 %2745
        %v2749 = vsel %vm2671, %v2653, 0
        %2751 = vmatprep.subr.mxu0 0.0
        %2752 = vmatpush1.msra.mxu0 %v2746
        %2753 = vmatprep.subr.mxu0 0.0
        %2754 = vmatpush1.msra.mxu0 0.0
        %2755 = vmatprep.subr.mxu0 0.0
        %2756 = vmatpush1.msra.mxu0 0.0
        %2757 = vmatprep.subr.mxu0 0.0
        %2758 = vmatpush1.msra.mxu0 0.0
        %2759 = vmatprep.subr.mxu0 0.0
        %2760 = vmatpush1.msra.mxu0 0.0
        %2761 = vmatprep.subr.mxu0 0.0
        %2762 = vmatpush1.msra.mxu0 0.0
        %2763 = vmatprep.subr.mxu0 0.0
        %2764 = vmatpush1.msra.mxu0 0.0
        %2765 = vmatprep.subr.mxu0 0.0
        %2766 = vmatpush1.msra.mxu0 0.0
        %2767 = vmatprep.subr.mxu0 0.0
        %2768 = vmatpush1.msra.mxu0 0.0
        %2769 = vmatprep.subr.mxu0 0.0
        %2770 = vmatpush1.msra.mxu0 0.0
        %2771 = vmatprep.subr.mxu0 0.0
        %2772 = vmatpush1.msra.mxu0 0.0
        %2773 = vmatprep.subr.mxu0 0.0
        %2774 = vmatpush1.msra.mxu0 0.0
        %2775 = vmatprep.subr.mxu0 0.0
        %2776 = vmatpush1.msra.mxu0 0.0
        %2777 = vmatprep.subr.mxu0 0.0
        %2778 = vmatpush1.msra.mxu0 0.0
        %2779 = vmatprep.subr.mxu0 0.0
        %2780 = vmatpush1.msra.mxu0 0.0
        %2781 = vmatprep.subr.mxu0 0.0
        %2782 = vmatpush1.msra.mxu0 0.0
        %2783 = vmatprep.subr.mxu0 0.0
        %2784 = vmatpush1.msra.mxu0 0.0
        %2785 = vmatprep.subr.mxu0 0.0
        %2786 = vmatpush1.msra.mxu0 0.0
        %2787 = vmatprep.subr.mxu0 0.0
        %2788 = vmatpush1.msra.mxu0 0.0
        %2789 = vmatprep.subr.mxu0 0.0
        %2790 = vmatpush1.msra.mxu0 0.0
        %2791 = vmatprep.subr.mxu0 0.0
        %2792 = vmatpush1.msra.mxu0 0.0
        %2793 = vmatprep.subr.mxu0 0.0
        %2794 = vmatpush1.msra.mxu0 0.0
        %2795 = vmatprep.subr.mxu0 0.0
        %2796 = vmatpush1.msra.mxu0 0.0
        %2797 = vmatprep.subr.mxu0 0.0
        %2798 = vmatpush1.msra.mxu0 0.0
        %2799 = vmatprep.subr.mxu0 0.0
        %2800 = vmatpush1.msra.mxu0 0.0
        %2801 = vmatprep.subr.mxu0 0.0
        %2802 = vmatpush1.msra.mxu0 0.0
        %2803 = vmatprep.subr.mxu0 0.0
        %2804 = vmatpush1.msra.mxu0 0.0
        %2805 = vmatprep.subr.mxu0 0.0
        %2806 = vmatpush1.msra.mxu0 0.0
        %2807 = vmatprep.subr.mxu0 0.0
        %2808 = vmatpush1.msra.mxu0 0.0
        %2809 = vmatprep.subr.mxu0 0.0
        %2810 = vmatpush1.msra.mxu0 0.0
        %2811 = vmatprep.subr.mxu0 0.0
        %2812 = vmatpush1.msra.mxu0 0.0
        %2813 = vmatprep.subr.mxu0 0.0
        %2814 = vmatpush1.msra.mxu0 0.0
        %2815 = vmatprep.mubr.f32.mxu0 0.0
        %2816 = vmatmul.mubr.f32.gmra.mrb[0].mxu0 %v2749
        %v2817 = vpop.f32.mrb[0].mxu0
        %v2818 = vadd.f32 0.0, %v2817
        %v2819 = vpop.f32.mrb[0].mxu0
        %2820 = vdwg.mxu0
        %2821 = vrot.lane.b32.xlu0 %v776, 96
        %v2822 = vpop.permute.xlu0 %2821
        %v2825 = vsel %vm2671, %v2654, 0
        %2827 = vmatprep.subr.mxu0 0.0
        %2828 = vmatpush1.msra.mxu0 %v2822
        %2829 = vmatprep.subr.mxu0 0.0
        %2830 = vmatpush1.msra.mxu0 0.0
        %2831 = vmatprep.subr.mxu0 0.0
        %2832 = vmatpush1.msra.mxu0 0.0
        %2833 = vmatprep.subr.mxu0 0.0
        %2834 = vmatpush1.msra.mxu0 0.0
        %2835 = vmatprep.subr.mxu0 0.0
        %2836 = vmatpush1.msra.mxu0 0.0
        %2837 = vmatprep.subr.mxu0 0.0
        %2838 = vmatpush1.msra.mxu0 0.0
        %2839 = vmatprep.subr.mxu0 0.0
        %2840 = vmatpush1.msra.mxu0 0.0
        %2841 = vmatprep.subr.mxu0 0.0
        %2842 = vmatpush1.msra.mxu0 0.0
        %2843 = vmatprep.subr.mxu0 0.0
        %2844 = vmatpush1.msra.mxu0 0.0
        %2845 = vmatprep.subr.mxu0 0.0
        %2846 = vmatpush1.msra.mxu0 0.0
        %2847 = vmatprep.subr.mxu0 0.0
        %2848 = vmatpush1.msra.mxu0 0.0
        %2849 = vmatprep.subr.mxu0 0.0
        %2850 = vmatpush1.msra.mxu0 0.0
        %2851 = vmatprep.subr.mxu0 0.0
        %2852 = vmatpush1.msra.mxu0 0.0
        %2853 = vmatprep.subr.mxu0 0.0
        %2854 = vmatpush1.msra.mxu0 0.0
        %2855 = vmatprep.subr.mxu0 0.0
        %2856 = vmatpush1.msra.mxu0 0.0
        %2857 = vmatprep.subr.mxu0 0.0
        %2858 = vmatpush1.msra.mxu0 0.0
        %2859 = vmatprep.subr.mxu0 0.0
        %2860 = vmatpush1.msra.mxu0 0.0
        %2861 = vmatprep.subr.mxu0 0.0
        %2862 = vmatpush1.msra.mxu0 0.0
        %2863 = vmatprep.subr.mxu0 0.0
        %2864 = vmatpush1.msra.mxu0 0.0
        %2865 = vmatprep.subr.mxu0 0.0
        %2866 = vmatpush1.msra.mxu0 0.0
        %2867 = vmatprep.subr.mxu0 0.0
        %2868 = vmatpush1.msra.mxu0 0.0
        %2869 = vmatprep.subr.mxu0 0.0
        %2870 = vmatpush1.msra.mxu0 0.0
        %2871 = vmatprep.subr.mxu0 0.0
        %2872 = vmatpush1.msra.mxu0 0.0
        %2873 = vmatprep.subr.mxu0 0.0
        %2874 = vmatpush1.msra.mxu0 0.0
        %2875 = vmatprep.subr.mxu0 0.0
        %2876 = vmatpush1.msra.mxu0 0.0
        %2877 = vmatprep.subr.mxu0 0.0
        %2878 = vmatpush1.msra.mxu0 0.0
        %2879 = vmatprep.subr.mxu0 0.0
        %2880 = vmatpush1.msra.mxu0 0.0
        %2881 = vmatprep.subr.mxu0 0.0
        %2882 = vmatpush1.msra.mxu0 0.0
        %2883 = vmatprep.subr.mxu0 0.0
        %2884 = vmatpush1.msra.mxu0 0.0
        %2885 = vmatprep.subr.mxu0 0.0
        %2886 = vmatpush1.msra.mxu0 0.0
        %2887 = vmatprep.subr.mxu0 0.0
        %2888 = vmatpush1.msra.mxu0 0.0
        %2889 = vmatprep.subr.mxu0 0.0
        %2890 = vmatpush1.msra.mxu0 0.0
        %2891 = vmatprep.mubr.f32.mxu0 0.0
        %2892 = vmatmul.mubr.f32.gmra.mrb[0].mxu0 %v2825
        %v2893 = vpop.f32.mrb[0].mxu0
        %v2894 = vadd.f32 0.0, %v2893
        %v2895 = vpop.f32.mrb[0].mxu0
        %2896 = vdwg.mxu0
        %2897 = vrot.lane.b32.xlu0 %v779, 96
        %v2898 = vpop.permute.xlu0 %2897
        %v2901 = vsel %vm2671, %v2655, 0
        %2903 = vmatprep.subr.mxu0 0.0
        %2904 = vmatpush1.msra.mxu0 %v2898
        %2905 = vmatprep.subr.mxu0 0.0
        %2906 = vmatpush1.msra.mxu0 0.0
        %2907 = vmatprep.subr.mxu0 0.0
        %2908 = vmatpush1.msra.mxu0 0.0
        %2909 = vmatprep.subr.mxu0 0.0
        %2910 = vmatpush1.msra.mxu0 0.0
        %2911 = vmatprep.subr.mxu0 0.0
        %2912 = vmatpush1.msra.mxu0 0.0
        %2913 = vmatprep.subr.mxu0 0.0
        %2914 = vmatpush1.msra.mxu0 0.0
        %2915 = vmatprep.subr.mxu0 0.0
        %2916 = vmatpush1.msra.mxu0 0.0
        %2917 = vmatprep.subr.mxu0 0.0
        %2918 = vmatpush1.msra.mxu0 0.0
        %2919 = vmatprep.subr.mxu0 0.0
        %2920 = vmatpush1.msra.mxu0 0.0
        %2921 = vmatprep.subr.mxu0 0.0
        %2922 = vmatpush1.msra.mxu0 0.0
        %2923 = vmatprep.subr.mxu0 0.0
        %2924 = vmatpush1.msra.mxu0 0.0
        %2925 = vmatprep.subr.mxu0 0.0
        %2926 = vmatpush1.msra.mxu0 0.0
        %2927 = vmatprep.subr.mxu0 0.0
        %2928 = vmatpush1.msra.mxu0 0.0
        %2929 = vmatprep.subr.mxu0 0.0
        %2930 = vmatpush1.msra.mxu0 0.0
        %2931 = vmatprep.subr.mxu0 0.0
        %2932 = vmatpush1.msra.mxu0 0.0
        %2933 = vmatprep.subr.mxu0 0.0
        %2934 = vmatpush1.msra.mxu0 0.0
        %2935 = vmatprep.subr.mxu0 0.0
        %2936 = vmatpush1.msra.mxu0 0.0
        %2937 = vmatprep.subr.mxu0 0.0
        %2938 = vmatpush1.msra.mxu0 0.0
        %2939 = vmatprep.subr.mxu0 0.0
        %2940 = vmatpush1.msra.mxu0 0.0
        %2941 = vmatprep.subr.mxu0 0.0
        %2942 = vmatpush1.msra.mxu0 0.0
        %2943 = vmatprep.subr.mxu0 0.0
        %2944 = vmatpush1.msra.mxu0 0.0
        %2945 = vmatprep.subr.mxu0 0.0
        %2946 = vmatpush1.msra.mxu0 0.0
        %2947 = vmatprep.subr.mxu0 0.0
        %2948 = vmatpush1.msra.mxu0 0.0
        %2949 = vmatprep.subr.mxu0 0.0
        %2950 = vmatpush1.msra.mxu0 0.0
        %2951 = vmatprep.subr.mxu0 0.0
        %2952 = vmatpush1.msra.mxu0 0.0
        %2953 = vmatprep.subr.mxu0 0.0
        %2954 = vmatpush1.msra.mxu0 0.0
        %2955 = vmatprep.subr.mxu0 0.0
        %2956 = vmatpush1.msra.mxu0 0.0
        %2957 = vmatprep.subr.mxu0 0.0
        %2958 = vmatpush1.msra.mxu0 0.0
        %2959 = vmatprep.subr.mxu0 0.0
        %2960 = vmatpush1.msra.mxu0 0.0
        %2961 = vmatprep.subr.mxu0 0.0
        %2962 = vmatpush1.msra.mxu0 0.0
        %2963 = vmatprep.subr.mxu0 0.0
        %2964 = vmatpush1.msra.mxu0 0.0
        %2965 = vmatprep.subr.mxu0 0.0
        %2966 = vmatpush1.msra.mxu0 0.0
        %2967 = vmatprep.mubr.f32.mxu0 0.0
        %2968 = vmatmul.mubr.f32.gmra.mrb[0].mxu0 %v2901
        %v2969 = vpop.f32.mrb[0].mxu0
        %v2970 = vadd.f32 0.0, %v2969
        %v2971 = vpop.f32.mrb[0].mxu0
        %2972 = vdwg.mxu0
        %2973 = vrot.lane.b32.xlu0 %v784, 96
        %v2974 = vpop.permute.xlu0 %2973
        %v2977 = vsel %vm2671, %v2656, 0
        %2979 = vmatprep.subr.mxu0 0.0
        %2980 = vmatpush1.msra.mxu0 %v2974
        %2981 = vmatprep.subr.mxu0 0.0
        %2982 = vmatpush1.msra.mxu0 0.0
        %2983 = vmatprep.subr.mxu0 0.0
        %2984 = vmatpush1.msra.mxu0 0.0
        %2985 = vmatprep.subr.mxu0 0.0
        %2986 = vmatpush1.msra.mxu0 0.0
        %2987 = vmatprep.subr.mxu0 0.0
        %2988 = vmatpush1.msra.mxu0 0.0
        %2989 = vmatprep.subr.mxu0 0.0
        %2990 = vmatpush1.msra.mxu0 0.0
        %2991 = vmatprep.subr.mxu0 0.0
        %2992 = vmatpush1.msra.mxu0 0.0
        %2993 = vmatprep.subr.mxu0 0.0
        %2994 = vmatpush1.msra.mxu0 0.0
        %2995 = vmatprep.subr.mxu0 0.0
        %2996 = vmatpush1.msra.mxu0 0.0
        %2997 = vmatprep.subr.mxu0 0.0
        %2998 = vmatpush1.msra.mxu0 0.0
        %2999 = vmatprep.subr.mxu0 0.0
        %3000 = vmatpush1.msra.mxu0 0.0
        %3001 = vmatprep.subr.mxu0 0.0
        %3002 = vmatpush1.msra.mxu0 0.0
        %3003 = vmatprep.subr.mxu0 0.0
        %3004 = vmatpush1.msra.mxu0 0.0
        %3005 = vmatprep.subr.mxu0 0.0
        %3006 = vmatpush1.msra.mxu0 0.0
        %3007 = vmatprep.subr.mxu0 0.0
        %3008 = vmatpush1.msra.mxu0 0.0
        %3009 = vmatprep.subr.mxu0 0.0
        %3010 = vmatpush1.msra.mxu0 0.0
        %3011 = vmatprep.subr.mxu0 0.0
        %3012 = vmatpush1.msra.mxu0 0.0
        %3013 = vmatprep.subr.mxu0 0.0
        %3014 = vmatpush1.msra.mxu0 0.0
        %3015 = vmatprep.subr.mxu0 0.0
        %3016 = vmatpush1.msra.mxu0 0.0
        %3017 = vmatprep.subr.mxu0 0.0
        %3018 = vmatpush1.msra.mxu0 0.0
        %3019 = vmatprep.subr.mxu0 0.0
        %3020 = vmatpush1.msra.mxu0 0.0
        %3021 = vmatprep.subr.mxu0 0.0
        %3022 = vmatpush1.msra.mxu0 0.0
        %3023 = vmatprep.subr.mxu0 0.0
        %3024 = vmatpush1.msra.mxu0 0.0
        %3025 = vmatprep.subr.mxu0 0.0
        %3026 = vmatpush1.msra.mxu0 0.0
        %3027 = vmatprep.subr.mxu0 0.0
        %3028 = vmatpush1.msra.mxu0 0.0
        %3029 = vmatprep.subr.mxu0 0.0
        %3030 = vmatpush1.msra.mxu0 0.0
        %3031 = vmatprep.subr.mxu0 0.0
        %3032 = vmatpush1.msra.mxu0 0.0
        %3033 = vmatprep.subr.mxu0 0.0
        %3034 = vmatpush1.msra.mxu0 0.0
        %3035 = vmatprep.subr.mxu0 0.0
        %3036 = vmatpush1.msra.mxu0 0.0
        %3037 = vmatprep.subr.mxu0 0.0
        %3038 = vmatpush1.msra.mxu0 0.0
        %3039 = vmatprep.subr.mxu0 0.0
        %3040 = vmatpush1.msra.mxu0 0.0
        %3041 = vmatprep.subr.mxu0 0.0
        %3042 = vmatpush1.msra.mxu0 0.0
        %3043 = vmatprep.mubr.f32.mxu0 0.0
        %3044 = vmatmul.mubr.f32.gmra.mrb[0].mxu0 %v2977
        %v3045 = vpop.f32.mrb[0].mxu0
        %v3046 = vadd.f32 0.0, %v3045
        %v3047 = vpop.f32.mrb[0].mxu0
        %3048 = vdwg.mxu0
        %3049 = vrot.lane.b32.xlu0 %v787, 96
        %v3050 = vpop.permute.xlu0 %3049
        %v3053 = vsel %vm2671, %v2657, 0
        %3055 = vmatprep.subr.mxu0 0.0
        %3056 = vmatpush1.msra.mxu0 %v3050
        %3057 = vmatprep.subr.mxu0 0.0
        %3058 = vmatpush1.msra.mxu0 0.0
        %3059 = vmatprep.subr.mxu0 0.0
        %3060 = vmatpush1.msra.mxu0 0.0
        %3061 = vmatprep.subr.mxu0 0.0
        %3062 = vmatpush1.msra.mxu0 0.0
        %3063 = vmatprep.subr.mxu0 0.0
        %3064 = vmatpush1.msra.mxu0 0.0
        %3065 = vmatprep.subr.mxu0 0.0
        %3066 = vmatpush1.msra.mxu0 0.0
        %3067 = vmatprep.subr.mxu0 0.0
        %3068 = vmatpush1.msra.mxu0 0.0
        %3069 = vmatprep.subr.mxu0 0.0
        %3070 = vmatpush1.msra.mxu0 0.0
        %3071 = vmatprep.subr.mxu0 0.0
        %3072 = vmatpush1.msra.mxu0 0.0
        %3073 = vmatprep.subr.mxu0 0.0
        %3074 = vmatpush1.msra.mxu0 0.0
        %3075 = vmatprep.subr.mxu0 0.0
        %3076 = vmatpush1.msra.mxu0 0.0
        %3077 = vmatprep.subr.mxu0 0.0
        %3078 = vmatpush1.msra.mxu0 0.0
        %3079 = vmatprep.subr.mxu0 0.0
        %3080 = vmatpush1.msra.mxu0 0.0
        %3081 = vmatprep.subr.mxu0 0.0
        %3082 = vmatpush1.msra.mxu0 0.0
        %3083 = vmatprep.subr.mxu0 0.0
        %3084 = vmatpush1.msra.mxu0 0.0
        %3085 = vmatprep.subr.mxu0 0.0
        %3086 = vmatpush1.msra.mxu0 0.0
        %3087 = vmatprep.subr.mxu0 0.0
        %3088 = vmatpush1.msra.mxu0 0.0
        %3089 = vmatprep.subr.mxu0 0.0
        %3090 = vmatpush1.msra.mxu0 0.0
        %3091 = vmatprep.subr.mxu0 0.0
        %3092 = vmatpush1.msra.mxu0 0.0
        %3093 = vmatprep.subr.mxu0 0.0
        %3094 = vmatpush1.msra.mxu0 0.0
        %3095 = vmatprep.subr.mxu0 0.0
        %3096 = vmatpush1.msra.mxu0 0.0
        %3097 = vmatprep.subr.mxu0 0.0
        %3098 = vmatpush1.msra.mxu0 0.0
        %3099 = vmatprep.subr.mxu0 0.0
        %3100 = vmatpush1.msra.mxu0 0.0
        %3101 = vmatprep.subr.mxu0 0.0
        %3102 = vmatpush1.msra.mxu0 0.0
        %3103 = vmatprep.subr.mxu0 0.0
        %3104 = vmatpush1.msra.mxu0 0.0
        %3105 = vmatprep.subr.mxu0 0.0
        %3106 = vmatpush1.msra.mxu0 0.0
        %3107 = vmatprep.subr.mxu0 0.0
        %3108 = vmatpush1.msra.mxu0 0.0
        %3109 = vmatprep.subr.mxu0 0.0
        %3110 = vmatpush1.msra.mxu0 0.0
        %3111 = vmatprep.subr.mxu0 0.0
        %3112 = vmatpush1.msra.mxu0 0.0
        %3113 = vmatprep.subr.mxu0 0.0
        %3114 = vmatpush1.msra.mxu0 0.0
        %3115 = vmatprep.subr.mxu0 0.0
        %3116 = vmatpush1.msra.mxu0 0.0
        %3117 = vmatprep.subr.mxu0 0.0
        %3118 = vmatpush1.msra.mxu0 0.0
        %3119 = vmatprep.mubr.f32.mxu0 0.0
        %3120 = vmatmul.mubr.f32.gmra.mrb[0].mxu0 %v3053
        %v3121 = vpop.f32.mrb[0].mxu0
        %v3122 = vadd.f32 0.0, %v3121
        %v3123 = vpop.f32.mrb[0].mxu0
        %3124 = vdwg.mxu0
        %3125 = vrot.lane.b32.xlu0 %v792, 96
        %v3126 = vpop.permute.xlu0 %3125
        %v3129 = vsel %vm2671, %v2658, 0
        %3131 = vmatprep.subr.mxu0 0.0
        %3132 = vmatpush1.msra.mxu0 %v3126
        %3133 = vmatprep.subr.mxu0 0.0
        %3134 = vmatpush1.msra.mxu0 0.0
        %3135 = vmatprep.subr.mxu0 0.0
        %3136 = vmatpush1.msra.mxu0 0.0
        %3137 = vmatprep.subr.mxu0 0.0
        %3138 = vmatpush1.msra.mxu0 0.0
        %3139 = vmatprep.subr.mxu0 0.0
        %3140 = vmatpush1.msra.mxu0 0.0
        %3141 = vmatprep.subr.mxu0 0.0
        %3142 = vmatpush1.msra.mxu0 0.0
        %3143 = vmatprep.subr.mxu0 0.0
        %3144 = vmatpush1.msra.mxu0 0.0
        %3145 = vmatprep.subr.mxu0 0.0
        %3146 = vmatpush1.msra.mxu0 0.0
        %3147 = vmatprep.subr.mxu0 0.0
        %3148 = vmatpush1.msra.mxu0 0.0
        %3149 = vmatprep.subr.mxu0 0.0
        %3150 = vmatpush1.msra.mxu0 0.0
        %3151 = vmatprep.subr.mxu0 0.0
        %3152 = vmatpush1.msra.mxu0 0.0
        %3153 = vmatprep.subr.mxu0 0.0
        %3154 = vmatpush1.msra.mxu0 0.0
        %3155 = vmatprep.subr.mxu0 0.0
        %3156 = vmatpush1.msra.mxu0 0.0
        %3157 = vmatprep.subr.mxu0 0.0
        %3158 = vmatpush1.msra.mxu0 0.0
        %3159 = vmatprep.subr.mxu0 0.0
        %3160 = vmatpush1.msra.mxu0 0.0
        %3161 = vmatprep.subr.mxu0 0.0
        %3162 = vmatpush1.msra.mxu0 0.0
        %3163 = vmatprep.subr.mxu0 0.0
        %3164 = vmatpush1.msra.mxu0 0.0
        %3165 = vmatprep.subr.mxu0 0.0
        %3166 = vmatpush1.msra.mxu0 0.0
        %3167 = vmatprep.subr.mxu0 0.0
        %3168 = vmatpush1.msra.mxu0 0.0
        %3169 = vmatprep.subr.mxu0 0.0
        %3170 = vmatpush1.msra.mxu0 0.0
        %3171 = vmatprep.subr.mxu0 0.0
        %3172 = vmatpush1.msra.mxu0 0.0
        %3173 = vmatprep.subr.mxu0 0.0
        %3174 = vmatpush1.msra.mxu0 0.0
        %3175 = vmatprep.subr.mxu0 0.0
        %3176 = vmatpush1.msra.mxu0 0.0
        %3177 = vmatprep.subr.mxu0 0.0
        %3178 = vmatpush1.msra.mxu0 0.0
        %3179 = vmatprep.subr.mxu0 0.0
        %3180 = vmatpush1.msra.mxu0 0.0
        %3181 = vmatprep.subr.mxu0 0.0
        %3182 = vmatpush1.msra.mxu0 0.0
        %3183 = vmatprep.subr.mxu0 0.0
        %3184 = vmatpush1.msra.mxu0 0.0
        %3185 = vmatprep.subr.mxu0 0.0
        %3186 = vmatpush1.msra.mxu0 0.0
        %3187 = vmatprep.subr.mxu0 0.0
        %3188 = vmatpush1.msra.mxu0 0.0
        %3189 = vmatprep.subr.mxu0 0.0
        %3190 = vmatpush1.msra.mxu0 0.0
        %3191 = vmatprep.subr.mxu0 0.0
        %3192 = vmatpush1.msra.mxu0 0.0
        %3193 = vmatprep.subr.mxu0 0.0
        %3194 = vmatpush1.msra.mxu0 0.0
        %3195 = vmatprep.mubr.f32.mxu0 0.0
        %3196 = vmatmul.mubr.f32.gmra.mrb[0].mxu0 %v3129
        %v3197 = vpop.f32.mrb[0].mxu0
        %v3198 = vadd.f32 0.0, %v3197
        %v3199 = vpop.f32.mrb[0].mxu0
        %3200 = vdwg.mxu0
        %3201 = vrot.lane.b32.xlu0 %v795, 96
        %v3202 = vpop.permute.xlu0 %3201
        %v3205 = vsel %vm2671, %v2659, 0
        %3207 = vmatprep.subr.mxu0 0.0
        %3208 = vmatpush1.msra.mxu0 %v3202
        %3209 = vmatprep.subr.mxu0 0.0
        %3210 = vmatpush1.msra.mxu0 0.0
        %3211 = vmatprep.subr.mxu0 0.0
        %3212 = vmatpush1.msra.mxu0 0.0
        %3213 = vmatprep.subr.mxu0 0.0
        %3214 = vmatpush1.msra.mxu0 0.0
        %3215 = vmatprep.subr.mxu0 0.0
        %3216 = vmatpush1.msra.mxu0 0.0
        %3217 = vmatprep.subr.mxu0 0.0
        %3218 = vmatpush1.msra.mxu0 0.0
        %3219 = vmatprep.subr.mxu0 0.0
        %3220 = vmatpush1.msra.mxu0 0.0
        %3221 = vmatprep.subr.mxu0 0.0
        %3222 = vmatpush1.msra.mxu0 0.0
        %3223 = vmatprep.subr.mxu0 0.0
        %3224 = vmatpush1.msra.mxu0 0.0
        %3225 = vmatprep.subr.mxu0 0.0
        %3226 = vmatpush1.msra.mxu0 0.0
        %3227 = vmatprep.subr.mxu0 0.0
        %3228 = vmatpush1.msra.mxu0 0.0
        %3229 = vmatprep.subr.mxu0 0.0
        %3230 = vmatpush1.msra.mxu0 0.0
        %3231 = vmatprep.subr.mxu0 0.0
        %3232 = vmatpush1.msra.mxu0 0.0
        %3233 = vmatprep.subr.mxu0 0.0
        %3234 = vmatpush1.msra.mxu0 0.0
        %3235 = vmatprep.subr.mxu0 0.0
        %3236 = vmatpush1.msra.mxu0 0.0
        %3237 = vmatprep.subr.mxu0 0.0
        %3238 = vmatpush1.msra.mxu0 0.0
        %3239 = vmatprep.subr.mxu0 0.0
        %3240 = vmatpush1.msra.mxu0 0.0
        %3241 = vmatprep.subr.mxu0 0.0
        %3242 = vmatpush1.msra.mxu0 0.0
        %3243 = vmatprep.subr.mxu0 0.0
        %3244 = vmatpush1.msra.mxu0 0.0
        %3245 = vmatprep.subr.mxu0 0.0
        %3246 = vmatpush1.msra.mxu0 0.0
        %3247 = vmatprep.subr.mxu0 0.0
        %3248 = vmatpush1.msra.mxu0 0.0
        %3249 = vmatprep.subr.mxu0 0.0
        %3250 = vmatpush1.msra.mxu0 0.0
        %3251 = vmatprep.subr.mxu0 0.0
        %3252 = vmatpush1.msra.mxu0 0.0
        %3253 = vmatprep.subr.mxu0 0.0
        %3254 = vmatpush1.msra.mxu0 0.0
        %3255 = vmatprep.subr.mxu0 0.0
        %3256 = vmatpush1.msra.mxu0 0.0
        %3257 = vmatprep.subr.mxu0 0.0
        %3258 = vmatpush1.msra.mxu0 0.0
        %3259 = vmatprep.subr.mxu0 0.0
        %3260 = vmatpush1.msra.mxu0 0.0
        %3261 = vmatprep.subr.mxu0 0.0
        %3262 = vmatpush1.msra.mxu0 0.0
        %3263 = vmatprep.subr.mxu0 0.0
        %3264 = vmatpush1.msra.mxu0 0.0
        %3265 = vmatprep.subr.mxu0 0.0
        %3266 = vmatpush1.msra.mxu0 0.0
        %3267 = vmatprep.subr.mxu0 0.0
        %3268 = vmatpush1.msra.mxu0 0.0
        %3269 = vmatprep.subr.mxu0 0.0
        %3270 = vmatpush1.msra.mxu0 0.0
        %3271 = vmatprep.mubr.f32.mxu0 0.0
        %3272 = vmatmul.mubr.f32.gmra.mrb[0].mxu0 %v3205
        %v3273 = vpop.f32.mrb[0].mxu0
        %v3274 = vadd.f32 0.0, %v3273
        %v3275 = vpop.f32.mrb[0].mxu0
        %3276 = vdwg.mxu0
        %3277 = vrot.lane.b32.xlu0 %v800, 96
        %v3278 = vpop.permute.xlu0 %3277
        %v3281 = vsel %vm2671, %v2660, 0
        %3283 = vmatprep.subr.mxu0 0.0
        %3284 = vmatpush1.msra.mxu0 %v3278
        %3285 = vmatprep.subr.mxu0 0.0
        %3286 = vmatpush1.msra.mxu0 0.0
        %3287 = vmatprep.subr.mxu0 0.0
        %3288 = vmatpush1.msra.mxu0 0.0
        %3289 = vmatprep.subr.mxu0 0.0
        %3290 = vmatpush1.msra.mxu0 0.0
        %3291 = vmatprep.subr.mxu0 0.0
        %3292 = vmatpush1.msra.mxu0 0.0
        %3293 = vmatprep.subr.mxu0 0.0
        %3294 = vmatpush1.msra.mxu0 0.0
        %3295 = vmatprep.subr.mxu0 0.0
        %3296 = vmatpush1.msra.mxu0 0.0
        %3297 = vmatprep.subr.mxu0 0.0
        %3298 = vmatpush1.msra.mxu0 0.0
        %3299 = vmatprep.subr.mxu0 0.0
        %3300 = vmatpush1.msra.mxu0 0.0
        %3301 = vmatprep.subr.mxu0 0.0
        %3302 = vmatpush1.msra.mxu0 0.0
        %3303 = vmatprep.subr.mxu0 0.0
        %3304 = vmatpush1.msra.mxu0 0.0
        %3305 = vmatprep.subr.mxu0 0.0
        %3306 = vmatpush1.msra.mxu0 0.0
        %3307 = vmatprep.subr.mxu0 0.0
        %3308 = vmatpush1.msra.mxu0 0.0
        %3309 = vmatprep.subr.mxu0 0.0
        %3310 = vmatpush1.msra.mxu0 0.0
        %3311 = vmatprep.subr.mxu0 0.0
        %3312 = vmatpush1.msra.mxu0 0.0
        %3313 = vmatprep.subr.mxu0 0.0
        %3314 = vmatpush1.msra.mxu0 0.0
        %3315 = vmatprep.subr.mxu0 0.0
        %3316 = vmatpush1.msra.mxu0 0.0
        %3317 = vmatprep.subr.mxu0 0.0
        %3318 = vmatpush1.msra.mxu0 0.0
        %3319 = vmatprep.subr.mxu0 0.0
        %3320 = vmatpush1.msra.mxu0 0.0
        %3321 = vmatprep.subr.mxu0 0.0
        %3322 = vmatpush1.msra.mxu0 0.0
        %3323 = vmatprep.subr.mxu0 0.0
        %3324 = vmatpush1.msra.mxu0 0.0
        %3325 = vmatprep.subr.mxu0 0.0
        %3326 = vmatpush1.msra.mxu0 0.0
        %3327 = vmatprep.subr.mxu0 0.0
        %3328 = vmatpush1.msra.mxu0 0.0
        %3329 = vmatprep.subr.mxu0 0.0
        %3330 = vmatpush1.msra.mxu0 0.0
        %3331 = vmatprep.subr.mxu0 0.0
        %3332 = vmatpush1.msra.mxu0 0.0
        %3333 = vmatprep.subr.mxu0 0.0
        %3334 = vmatpush1.msra.mxu0 0.0
        %3335 = vmatprep.subr.mxu0 0.0
        %3336 = vmatpush1.msra.mxu0 0.0
        %3337 = vmatprep.subr.mxu0 0.0
        %3338 = vmatpush1.msra.mxu0 0.0
        %3339 = vmatprep.subr.mxu0 0.0
        %3340 = vmatpush1.msra.mxu0 0.0
        %3341 = vmatprep.subr.mxu0 0.0
        %3342 = vmatpush1.msra.mxu0 0.0
        %3343 = vmatprep.subr.mxu0 0.0
        %3344 = vmatpush1.msra.mxu0 0.0
        %3345 = vmatprep.subr.mxu0 0.0
        %3346 = vmatpush1.msra.mxu0 0.0
        %3347 = vmatprep.mubr.f32.mxu0 0.0
        %3348 = vmatmul.mubr.f32.gmra.mrb[0].mxu0 %v3281
        %v3349 = vpop.f32.mrb[0].mxu0
        %v3350 = vadd.f32 0.0, %v3349
        %v3351 = vpop.f32.mrb[0].mxu0
        %3352 = vdwg.mxu0
        %3353 = vrot.lane.b32.xlu0 %v803, 96
        %v3354 = vpop.permute.xlu0 %3353
        %v3357 = vsel %vm2671, %v2661, 0
        %3359 = vmatprep.subr.mxu0 0.0
        %3360 = vmatpush1.msra.mxu0 %v3354
        %3361 = vmatprep.subr.mxu0 0.0
        %3362 = vmatpush1.msra.mxu0 0.0
        %3363 = vmatprep.subr.mxu0 0.0
        %3364 = vmatpush1.msra.mxu0 0.0
        %3365 = vmatprep.subr.mxu0 0.0
        %3366 = vmatpush1.msra.mxu0 0.0
        %3367 = vmatprep.subr.mxu0 0.0
        %3368 = vmatpush1.msra.mxu0 0.0
        %3369 = vmatprep.subr.mxu0 0.0
        %3370 = vmatpush1.msra.mxu0 0.0
        %3371 = vmatprep.subr.mxu0 0.0
        %3372 = vmatpush1.msra.mxu0 0.0
        %3373 = vmatprep.subr.mxu0 0.0
        %3374 = vmatpush1.msra.mxu0 0.0
        %3375 = vmatprep.subr.mxu0 0.0
        %3376 = vmatpush1.msra.mxu0 0.0
        %3377 = vmatprep.subr.mxu0 0.0
        %3378 = vmatpush1.msra.mxu0 0.0
        %3379 = vmatprep.subr.mxu0 0.0
        %3380 = vmatpush1.msra.mxu0 0.0
        %3381 = vmatprep.subr.mxu0 0.0
        %3382 = vmatpush1.msra.mxu0 0.0
        %3383 = vmatprep.subr.mxu0 0.0
        %3384 = vmatpush1.msra.mxu0 0.0
        %3385 = vmatprep.subr.mxu0 0.0
        %3386 = vmatpush1.msra.mxu0 0.0
        %3387 = vmatprep.subr.mxu0 0.0
        %3388 = vmatpush1.msra.mxu0 0.0
        %3389 = vmatprep.subr.mxu0 0.0
        %3390 = vmatpush1.msra.mxu0 0.0
        %3391 = vmatprep.subr.mxu0 0.0
        %3392 = vmatpush1.msra.mxu0 0.0
        %3393 = vmatprep.subr.mxu0 0.0
        %3394 = vmatpush1.msra.mxu0 0.0
        %3395 = vmatprep.subr.mxu0 0.0
        %3396 = vmatpush1.msra.mxu0 0.0
        %3397 = vmatprep.subr.mxu0 0.0
        %3398 = vmatpush1.msra.mxu0 0.0
        %3399 = vmatprep.subr.mxu0 0.0
        %3400 = vmatpush1.msra.mxu0 0.0
        %3401 = vmatprep.subr.mxu0 0.0
        %3402 = vmatpush1.msra.mxu0 0.0
        %3403 = vmatprep.subr.mxu0 0.0
        %3404 = vmatpush1.msra.mxu0 0.0
        %3405 = vmatprep.subr.mxu0 0.0
        %3406 = vmatpush1.msra.mxu0 0.0
        %3407 = vmatprep.subr.mxu0 0.0
        %3408 = vmatpush1.msra.mxu0 0.0
        %3409 = vmatprep.subr.mxu0 0.0
        %3410 = vmatpush1.msra.mxu0 0.0
        %3411 = vmatprep.subr.mxu0 0.0
        %3412 = vmatpush1.msra.mxu0 0.0
        %3413 = vmatprep.subr.mxu0 0.0
        %3414 = vmatpush1.msra.mxu0 0.0
        %3415 = vmatprep.subr.mxu0 0.0
        %3416 = vmatpush1.msra.mxu0 0.0
        %3417 = vmatprep.subr.mxu0 0.0
        %3418 = vmatpush1.msra.mxu0 0.0
        %3419 = vmatprep.subr.mxu0 0.0
        %3420 = vmatpush1.msra.mxu0 0.0
        %3421 = vmatprep.subr.mxu0 0.0
        %3422 = vmatpush1.msra.mxu0 0.0
        %3423 = vmatprep.mubr.f32.mxu0 0.0
        %3424 = vmatmul.mubr.f32.gmra.mrb[0].mxu0 %v3357
        %v3425 = vpop.f32.mrb[0].mxu0
        %v3426 = vadd.f32 0.0, %v3425
        %v3427 = vpop.f32.mrb[0].mxu0
        %3428 = vdwg.mxu0
        %3429 = vrot.lane.b32.xlu0 %v808, 96
        %v3430 = vpop.permute.xlu0 %3429
        %v3433 = vsel %vm2671, %v2662, 0
        %3435 = vmatprep.subr.mxu0 0.0
        %3436 = vmatpush1.msra.mxu0 %v3430
        %3437 = vmatprep.subr.mxu0 0.0
        %3438 = vmatpush1.msra.mxu0 0.0
        %3439 = vmatprep.subr.mxu0 0.0
        %3440 = vmatpush1.msra.mxu0 0.0
        %3441 = vmatprep.subr.mxu0 0.0
        %3442 = vmatpush1.msra.mxu0 0.0
        %3443 = vmatprep.subr.mxu0 0.0
        %3444 = vmatpush1.msra.mxu0 0.0
        %3445 = vmatprep.subr.mxu0 0.0
        %3446 = vmatpush1.msra.mxu0 0.0
        %3447 = vmatprep.subr.mxu0 0.0
        %3448 = vmatpush1.msra.mxu0 0.0
        %3449 = vmatprep.subr.mxu0 0.0
        %3450 = vmatpush1.msra.mxu0 0.0
        %3451 = vmatprep.subr.mxu0 0.0
        %3452 = vmatpush1.msra.mxu0 0.0
        %3453 = vmatprep.subr.mxu0 0.0
        %3454 = vmatpush1.msra.mxu0 0.0
        %3455 = vmatprep.subr.mxu0 0.0
        %3456 = vmatpush1.msra.mxu0 0.0
        %3457 = vmatprep.subr.mxu0 0.0
        %3458 = vmatpush1.msra.mxu0 0.0
        %3459 = vmatprep.subr.mxu0 0.0
        %3460 = vmatpush1.msra.mxu0 0.0
        %3461 = vmatprep.subr.mxu0 0.0
        %3462 = vmatpush1.msra.mxu0 0.0
        %3463 = vmatprep.subr.mxu0 0.0
        %3464 = vmatpush1.msra.mxu0 0.0
        %3465 = vmatprep.subr.mxu0 0.0
        %3466 = vmatpush1.msra.mxu0 0.0
        %3467 = vmatprep.subr.mxu0 0.0
        %3468 = vmatpush1.msra.mxu0 0.0
        %3469 = vmatprep.subr.mxu0 0.0
        %3470 = vmatpush1.msra.mxu0 0.0
        %3471 = vmatprep.subr.mxu0 0.0
        %3472 = vmatpush1.msra.mxu0 0.0
        %3473 = vmatprep.subr.mxu0 0.0
        %3474 = vmatpush1.msra.mxu0 0.0
        %3475 = vmatprep.subr.mxu0 0.0
        %3476 = vmatpush1.msra.mxu0 0.0
        %3477 = vmatprep.subr.mxu0 0.0
        %3478 = vmatpush1.msra.mxu0 0.0
        %3479 = vmatprep.subr.mxu0 0.0
        %3480 = vmatpush1.msra.mxu0 0.0
        %3481 = vmatprep.subr.mxu0 0.0
        %3482 = vmatpush1.msra.mxu0 0.0
        %3483 = vmatprep.subr.mxu0 0.0
        %3484 = vmatpush1.msra.mxu0 0.0
        %3485 = vmatprep.subr.mxu0 0.0
        %3486 = vmatpush1.msra.mxu0 0.0
        %3487 = vmatprep.subr.mxu0 0.0
        %3488 = vmatpush1.msra.mxu0 0.0
        %3489 = vmatprep.subr.mxu0 0.0
        %3490 = vmatpush1.msra.mxu0 0.0
        %3491 = vmatprep.subr.mxu0 0.0
        %3492 = vmatpush1.msra.mxu0 0.0
        %3493 = vmatprep.subr.mxu0 0.0
        %3494 = vmatpush1.msra.mxu0 0.0
        %3495 = vmatprep.subr.mxu0 0.0
        %3496 = vmatpush1.msra.mxu0 0.0
        %3497 = vmatprep.subr.mxu0 0.0
        %3498 = vmatpush1.msra.mxu0 0.0
        %3499 = vmatprep.mubr.f32.mxu0 0.0
        %3500 = vmatmul.mubr.f32.gmra.mrb[0].mxu0 %v3433
        %v3501 = vpop.f32.mrb[0].mxu0
        %v3502 = vadd.f32 0.0, %v3501
        %v3503 = vpop.f32.mrb[0].mxu0
        %3504 = vdwg.mxu0
        %3505 = vrot.lane.b32.xlu0 %v811, 96
        %v3506 = vpop.permute.xlu0 %3505
        %v3509 = vsel %vm2671, %v2663, 0
        %3511 = vmatprep.subr.mxu0 0.0
        %3512 = vmatpush1.msra.mxu0 %v3506
        %3513 = vmatprep.subr.mxu0 0.0
        %3514 = vmatpush1.msra.mxu0 0.0
        %3515 = vmatprep.subr.mxu0 0.0
        %3516 = vmatpush1.msra.mxu0 0.0
        %3517 = vmatprep.subr.mxu0 0.0
        %3518 = vmatpush1.msra.mxu0 0.0
        %3519 = vmatprep.subr.mxu0 0.0
        %3520 = vmatpush1.msra.mxu0 0.0
        %3521 = vmatprep.subr.mxu0 0.0
        %3522 = vmatpush1.msra.mxu0 0.0
        %3523 = vmatprep.subr.mxu0 0.0
        %3524 = vmatpush1.msra.mxu0 0.0
        %3525 = vmatprep.subr.mxu0 0.0
        %3526 = vmatpush1.msra.mxu0 0.0
        %3527 = vmatprep.subr.mxu0 0.0
        %3528 = vmatpush1.msra.mxu0 0.0
        %3529 = vmatprep.subr.mxu0 0.0
        %3530 = vmatpush1.msra.mxu0 0.0
        %3531 = vmatprep.subr.mxu0 0.0
        %3532 = vmatpush1.msra.mxu0 0.0
        %3533 = vmatprep.subr.mxu0 0.0
        %3534 = vmatpush1.msra.mxu0 0.0
        %3535 = vmatprep.subr.mxu0 0.0
        %3536 = vmatpush1.msra.mxu0 0.0
        %3537 = vmatprep.subr.mxu0 0.0
        %3538 = vmatpush1.msra.mxu0 0.0
        %3539 = vmatprep.subr.mxu0 0.0
        %3540 = vmatpush1.msra.mxu0 0.0
        %3541 = vmatprep.subr.mxu0 0.0
        %3542 = vmatpush1.msra.mxu0 0.0
        %3543 = vmatprep.subr.mxu0 0.0
        %3544 = vmatpush1.msra.mxu0 0.0
        %3545 = vmatprep.subr.mxu0 0.0
        %3546 = vmatpush1.msra.mxu0 0.0
        %3547 = vmatprep.subr.mxu0 0.0
        %3548 = vmatpush1.msra.mxu0 0.0
        %3549 = vmatprep.subr.mxu0 0.0
        %3550 = vmatpush1.msra.mxu0 0.0
        %3551 = vmatprep.subr.mxu0 0.0
        %3552 = vmatpush1.msra.mxu0 0.0
        %3553 = vmatprep.subr.mxu0 0.0
        %3554 = vmatpush1.msra.mxu0 0.0
        %3555 = vmatprep.subr.mxu0 0.0
        %3556 = vmatpush1.msra.mxu0 0.0
        %3557 = vmatprep.subr.mxu0 0.0
        %3558 = vmatpush1.msra.mxu0 0.0
        %3559 = vmatprep.subr.mxu0 0.0
        %3560 = vmatpush1.msra.mxu0 0.0
        %3561 = vmatprep.subr.mxu0 0.0
        %3562 = vmatpush1.msra.mxu0 0.0
        %3563 = vmatprep.subr.mxu0 0.0
        %3564 = vmatpush1.msra.mxu0 0.0
        %3565 = vmatprep.subr.mxu0 0.0
        %3566 = vmatpush1.msra.mxu0 0.0
        %3567 = vmatprep.subr.mxu0 0.0
        %3568 = vmatpush1.msra.mxu0 0.0
        %3569 = vmatprep.subr.mxu0 0.0
        %3570 = vmatpush1.msra.mxu0 0.0
        %3571 = vmatprep.subr.mxu0 0.0
        %3572 = vmatpush1.msra.mxu0 0.0
        %3573 = vmatprep.subr.mxu0 0.0
        %3574 = vmatpush1.msra.mxu0 0.0
        %3575 = vmatprep.mubr.f32.mxu0 0.0
        %3576 = vmatmul.mubr.f32.gmra.mrb[0].mxu0 %v3509
        %v3577 = vpop.f32.mrb[0].mxu0
        %v3578 = vadd.f32 0.0, %v3577
        %v3579 = vpop.f32.mrb[0].mxu0
        %3580 = vdwg.mxu0
        %3581 = vrot.lane.b32.xlu0 %v816, 96
        %v3582 = vpop.permute.xlu0 %3581
        %v3585 = vsel %vm2671, %v2664, 0
        %3587 = vmatprep.subr.mxu0 0.0
        %3588 = vmatpush1.msra.mxu0 %v3582
        %3589 = vmatprep.subr.mxu0 0.0
        %3590 = vmatpush1.msra.mxu0 0.0
        %3591 = vmatprep.subr.mxu0 0.0
        %3592 = vmatpush1.msra.mxu0 0.0
        %3593 = vmatprep.subr.mxu0 0.0
        %3594 = vmatpush1.msra.mxu0 0.0
        %3595 = vmatprep.subr.mxu0 0.0
        %3596 = vmatpush1.msra.mxu0 0.0
        %3597 = vmatprep.subr.mxu0 0.0
        %3598 = vmatpush1.msra.mxu0 0.0
        %3599 = vmatprep.subr.mxu0 0.0
        %3600 = vmatpush1.msra.mxu0 0.0
        %3601 = vmatprep.subr.mxu0 0.0
        %3602 = vmatpush1.msra.mxu0 0.0
        %3603 = vmatprep.subr.mxu0 0.0
        %3604 = vmatpush1.msra.mxu0 0.0
        %3605 = vmatprep.subr.mxu0 0.0
        %3606 = vmatpush1.msra.mxu0 0.0
        %3607 = vmatprep.subr.mxu0 0.0
        %3608 = vmatpush1.msra.mxu0 0.0
        %3609 = vmatprep.subr.mxu0 0.0
        %3610 = vmatpush1.msra.mxu0 0.0
        %3611 = vmatprep.subr.mxu0 0.0
        %3612 = vmatpush1.msra.mxu0 0.0
        %3613 = vmatprep.subr.mxu0 0.0
        %3614 = vmatpush1.msra.mxu0 0.0
        %3615 = vmatprep.subr.mxu0 0.0
        %3616 = vmatpush1.msra.mxu0 0.0
        %3617 = vmatprep.subr.mxu0 0.0
        %3618 = vmatpush1.msra.mxu0 0.0
        %3619 = vmatprep.subr.mxu0 0.0
        %3620 = vmatpush1.msra.mxu0 0.0
        %3621 = vmatprep.subr.mxu0 0.0
        %3622 = vmatpush1.msra.mxu0 0.0
        %3623 = vmatprep.subr.mxu0 0.0
        %3624 = vmatpush1.msra.mxu0 0.0
        %3625 = vmatprep.subr.mxu0 0.0
        %3626 = vmatpush1.msra.mxu0 0.0
        %3627 = vmatprep.subr.mxu0 0.0
        %3628 = vmatpush1.msra.mxu0 0.0
        %3629 = vmatprep.subr.mxu0 0.0
        %3630 = vmatpush1.msra.mxu0 0.0
        %3631 = vmatprep.subr.mxu0 0.0
        %3632 = vmatpush1.msra.mxu0 0.0
        %3633 = vmatprep.subr.mxu0 0.0
        %3634 = vmatpush1.msra.mxu0 0.0
        %3635 = vmatprep.subr.mxu0 0.0
        %3636 = vmatpush1.msra.mxu0 0.0
        %3637 = vmatprep.subr.mxu0 0.0
        %3638 = vmatpush1.msra.mxu0 0.0
        %3639 = vmatprep.subr.mxu0 0.0
        %3640 = vmatpush1.msra.mxu0 0.0
        %3641 = vmatprep.subr.mxu0 0.0
        %3642 = vmatpush1.msra.mxu0 0.0
        %3643 = vmatprep.subr.mxu0 0.0
        %3644 = vmatpush1.msra.mxu0 0.0
        %3645 = vmatprep.subr.mxu0 0.0
        %3646 = vmatpush1.msra.mxu0 0.0
        %3647 = vmatprep.subr.mxu0 0.0
        %3648 = vmatpush1.msra.mxu0 0.0
        %3649 = vmatprep.subr.mxu0 0.0
        %3650 = vmatpush1.msra.mxu0 0.0
        %3651 = vmatprep.mubr.f32.mxu0 0.0
        %3652 = vmatmul.mubr.f32.gmra.mrb[0].mxu0 %v3585
        %v3653 = vpop.f32.mrb[0].mxu0
        %v3654 = vadd.f32 0.0, %v3653
        %v3655 = vpop.f32.mrb[0].mxu0
        %3656 = vdwg.mxu0
        %3657 = vrot.lane.b32.xlu0 %v819, 96
        %v3658 = vpop.permute.xlu0 %3657
        %v3661 = vsel %vm2671, %v2665, 0
        %3663 = vmatprep.subr.mxu0 0.0
        %3664 = vmatpush1.msra.mxu0 %v3658
        %3665 = vmatprep.subr.mxu0 0.0
        %3666 = vmatpush1.msra.mxu0 0.0
        %3667 = vmatprep.subr.mxu0 0.0
        %3668 = vmatpush1.msra.mxu0 0.0
        %3669 = vmatprep.subr.mxu0 0.0
        %3670 = vmatpush1.msra.mxu0 0.0
        %3671 = vmatprep.subr.mxu0 0.0
        %3672 = vmatpush1.msra.mxu0 0.0
        %3673 = vmatprep.subr.mxu0 0.0
        %3674 = vmatpush1.msra.mxu0 0.0
        %3675 = vmatprep.subr.mxu0 0.0
        %3676 = vmatpush1.msra.mxu0 0.0
        %3677 = vmatprep.subr.mxu0 0.0
        %3678 = vmatpush1.msra.mxu0 0.0
        %3679 = vmatprep.subr.mxu0 0.0
        %3680 = vmatpush1.msra.mxu0 0.0
        %3681 = vmatprep.subr.mxu0 0.0
        %3682 = vmatpush1.msra.mxu0 0.0
        %3683 = vmatprep.subr.mxu0 0.0
        %3684 = vmatpush1.msra.mxu0 0.0
        %3685 = vmatprep.subr.mxu0 0.0
        %3686 = vmatpush1.msra.mxu0 0.0
        %3687 = vmatprep.subr.mxu0 0.0
        %3688 = vmatpush1.msra.mxu0 0.0
        %3689 = vmatprep.subr.mxu0 0.0
        %3690 = vmatpush1.msra.mxu0 0.0
        %3691 = vmatprep.subr.mxu0 0.0
        %3692 = vmatpush1.msra.mxu0 0.0
        %3693 = vmatprep.subr.mxu0 0.0
        %3694 = vmatpush1.msra.mxu0 0.0
        %3695 = vmatprep.subr.mxu0 0.0
        %3696 = vmatpush1.msra.mxu0 0.0
        %3697 = vmatprep.subr.mxu0 0.0
        %3698 = vmatpush1.msra.mxu0 0.0
        %3699 = vmatprep.subr.mxu0 0.0
        %3700 = vmatpush1.msra.mxu0 0.0
        %3701 = vmatprep.subr.mxu0 0.0
        %3702 = vmatpush1.msra.mxu0 0.0
        %3703 = vmatprep.subr.mxu0 0.0
        %3704 = vmatpush1.msra.mxu0 0.0
        %3705 = vmatprep.subr.mxu0 0.0
        %3706 = vmatpush1.msra.mxu0 0.0
        %3707 = vmatprep.subr.mxu0 0.0
        %3708 = vmatpush1.msra.mxu0 0.0
        %3709 = vmatprep.subr.mxu0 0.0
        %3710 = vmatpush1.msra.mxu0 0.0
        %3711 = vmatprep.subr.mxu0 0.0
        %3712 = vmatpush1.msra.mxu0 0.0
        %3713 = vmatprep.subr.mxu0 0.0
        %3714 = vmatpush1.msra.mxu0 0.0
        %3715 = vmatprep.subr.mxu0 0.0
        %3716 = vmatpush1.msra.mxu0 0.0
        %3717 = vmatprep.subr.mxu0 0.0
        %3718 = vmatpush1.msra.mxu0 0.0
        %3719 = vmatprep.subr.mxu0 0.0
        %3720 = vmatpush1.msra.mxu0 0.0
        %3721 = vmatprep.subr.mxu0 0.0
        %3722 = vmatpush1.msra.mxu0 0.0
        %3723 = vmatprep.subr.mxu0 0.0
        %3724 = vmatpush1.msra.mxu0 0.0
        %3725 = vmatprep.subr.mxu0 0.0
        %3726 = vmatpush1.msra.mxu0 0.0
        %3727 = vmatprep.mubr.f32.mxu0 0.0
        %3728 = vmatmul.mubr.f32.gmra.mrb[0].mxu0 %v3661
        %v3729 = vpop.f32.mrb[0].mxu0
        %v3730 = vadd.f32 0.0, %v3729
        %v3731 = vpop.f32.mrb[0].mxu0
        %3732 = vdwg.mxu0
        %3733 = vrot.lane.b32.xlu0 %v824, 96
        %v3734 = vpop.permute.xlu0 %3733
        %v3737 = vsel %vm2671, %v2666, 0
        %3739 = vmatprep.subr.mxu0 0.0
        %3740 = vmatpush1.msra.mxu0 %v3734
        %3741 = vmatprep.subr.mxu0 0.0
        %3742 = vmatpush1.msra.mxu0 0.0
        %3743 = vmatprep.subr.mxu0 0.0
        %3744 = vmatpush1.msra.mxu0 0.0
        %3745 = vmatprep.subr.mxu0 0.0
        %3746 = vmatpush1.msra.mxu0 0.0
        %3747 = vmatprep.subr.mxu0 0.0
        %3748 = vmatpush1.msra.mxu0 0.0
        %3749 = vmatprep.subr.mxu0 0.0
        %3750 = vmatpush1.msra.mxu0 0.0
        %3751 = vmatprep.subr.mxu0 0.0
        %3752 = vmatpush1.msra.mxu0 0.0
        %3753 = vmatprep.subr.mxu0 0.0
        %3754 = vmatpush1.msra.mxu0 0.0
        %3755 = vmatprep.subr.mxu0 0.0
        %3756 = vmatpush1.msra.mxu0 0.0
        %3757 = vmatprep.subr.mxu0 0.0
        %3758 = vmatpush1.msra.mxu0 0.0
        %3759 = vmatprep.subr.mxu0 0.0
        %3760 = vmatpush1.msra.mxu0 0.0
        %3761 = vmatprep.subr.mxu0 0.0
        %3762 = vmatpush1.msra.mxu0 0.0
        %3763 = vmatprep.subr.mxu0 0.0
        %3764 = vmatpush1.msra.mxu0 0.0
        %3765 = vmatprep.subr.mxu0 0.0
        %3766 = vmatpush1.msra.mxu0 0.0
        %3767 = vmatprep.subr.mxu0 0.0
        %3768 = vmatpush1.msra.mxu0 0.0
        %3769 = vmatprep.subr.mxu0 0.0
        %3770 = vmatpush1.msra.mxu0 0.0
        %3771 = vmatprep.subr.mxu0 0.0
        %3772 = vmatpush1.msra.mxu0 0.0
        %3773 = vmatprep.subr.mxu0 0.0
        %3774 = vmatpush1.msra.mxu0 0.0
        %3775 = vmatprep.subr.mxu0 0.0
        %3776 = vmatpush1.msra.mxu0 0.0
        %3777 = vmatprep.subr.mxu0 0.0
        %3778 = vmatpush1.msra.mxu0 0.0
        %3779 = vmatprep.subr.mxu0 0.0
        %3780 = vmatpush1.msra.mxu0 0.0
        %3781 = vmatprep.subr.mxu0 0.0
        %3782 = vmatpush1.msra.mxu0 0.0
        %3783 = vmatprep.subr.mxu0 0.0
        %3784 = vmatpush1.msra.mxu0 0.0
        %3785 = vmatprep.subr.mxu0 0.0
        %3786 = vmatpush1.msra.mxu0 0.0
        %3787 = vmatprep.subr.mxu0 0.0
        %3788 = vmatpush1.msra.mxu0 0.0
        %3789 = vmatprep.subr.mxu0 0.0
        %3790 = vmatpush1.msra.mxu0 0.0
        %3791 = vmatprep.subr.mxu0 0.0
        %3792 = vmatpush1.msra.mxu0 0.0
        %3793 = vmatprep.subr.mxu0 0.0
        %3794 = vmatpush1.msra.mxu0 0.0
        %3795 = vmatprep.subr.mxu0 0.0
        %3796 = vmatpush1.msra.mxu0 0.0
        %3797 = vmatprep.subr.mxu0 0.0
        %3798 = vmatpush1.msra.mxu0 0.0
        %3799 = vmatprep.subr.mxu0 0.0
        %3800 = vmatpush1.msra.mxu0 0.0
        %3801 = vmatprep.subr.mxu0 0.0
        %3802 = vmatpush1.msra.mxu0 0.0
        %3803 = vmatprep.mubr.f32.mxu0 0.0
        %3804 = vmatmul.mubr.f32.gmra.mrb[0].mxu0 %v3737
        %v3805 = vpop.f32.mrb[0].mxu0
        %v3806 = vadd.f32 0.0, %v3805
        %v3807 = vpop.f32.mrb[0].mxu0
        %3808 = vdwg.mxu0
        %3809 = vrot.lane.b32.xlu0 %v827, 96
        %v3810 = vpop.permute.xlu0 %3809
        %v3813 = vsel %vm2671, %v2667, 0
        %3815 = vmatprep.subr.mxu0 0.0
        %3816 = vmatpush1.msra.mxu0 %v3810
        %3817 = vmatprep.subr.mxu0 0.0
        %3818 = vmatpush1.msra.mxu0 0.0
        %3819 = vmatprep.subr.mxu0 0.0
        %3820 = vmatpush1.msra.mxu0 0.0
        %3821 = vmatprep.subr.mxu0 0.0
        %3822 = vmatpush1.msra.mxu0 0.0
        %3823 = vmatprep.subr.mxu0 0.0
        %3824 = vmatpush1.msra.mxu0 0.0
        %3825 = vmatprep.subr.mxu0 0.0
        %3826 = vmatpush1.msra.mxu0 0.0
        %3827 = vmatprep.subr.mxu0 0.0
        %3828 = vmatpush1.msra.mxu0 0.0
        %3829 = vmatprep.subr.mxu0 0.0
        %3830 = vmatpush1.msra.mxu0 0.0
        %3831 = vmatprep.subr.mxu0 0.0
        %3832 = vmatpush1.msra.mxu0 0.0
        %3833 = vmatprep.subr.mxu0 0.0
        %3834 = vmatpush1.msra.mxu0 0.0
        %3835 = vmatprep.subr.mxu0 0.0
        %3836 = vmatpush1.msra.mxu0 0.0
        %3837 = vmatprep.subr.mxu0 0.0
        %3838 = vmatpush1.msra.mxu0 0.0
        %3839 = vmatprep.subr.mxu0 0.0
        %3840 = vmatpush1.msra.mxu0 0.0
        %3841 = vmatprep.subr.mxu0 0.0
        %3842 = vmatpush1.msra.mxu0 0.0
        %3843 = vmatprep.subr.mxu0 0.0
        %3844 = vmatpush1.msra.mxu0 0.0
        %3845 = vmatprep.subr.mxu0 0.0
        %3846 = vmatpush1.msra.mxu0 0.0
        %3847 = vmatprep.subr.mxu0 0.0
        %3848 = vmatpush1.msra.mxu0 0.0
        %3849 = vmatprep.subr.mxu0 0.0
        %3850 = vmatpush1.msra.mxu0 0.0
        %3851 = vmatprep.subr.mxu0 0.0
        %3852 = vmatpush1.msra.mxu0 0.0
        %3853 = vmatprep.subr.mxu0 0.0
        %3854 = vmatpush1.msra.mxu0 0.0
        %3855 = vmatprep.subr.mxu0 0.0
        %3856 = vmatpush1.msra.mxu0 0.0
        %3857 = vmatprep.subr.mxu0 0.0
        %3858 = vmatpush1.msra.mxu0 0.0
        %3859 = vmatprep.subr.mxu0 0.0
        %3860 = vmatpush1.msra.mxu0 0.0
        %3861 = vmatprep.subr.mxu0 0.0
        %3862 = vmatpush1.msra.mxu0 0.0
        %3863 = vmatprep.subr.mxu0 0.0
        %3864 = vmatpush1.msra.mxu0 0.0
        %3865 = vmatprep.subr.mxu0 0.0
        %3866 = vmatpush1.msra.mxu0 0.0
        %3867 = vmatprep.subr.mxu0 0.0
        %3868 = vmatpush1.msra.mxu0 0.0
        %3869 = vmatprep.subr.mxu0 0.0
        %3870 = vmatpush1.msra.mxu0 0.0
        %3871 = vmatprep.subr.mxu0 0.0
        %3872 = vmatpush1.msra.mxu0 0.0
        %3873 = vmatprep.subr.mxu0 0.0
        %3874 = vmatpush1.msra.mxu0 0.0
        %3875 = vmatprep.subr.mxu0 0.0
        %3876 = vmatpush1.msra.mxu0 0.0
        %3877 = vmatprep.subr.mxu0 0.0
        %3878 = vmatpush1.msra.mxu0 0.0
        %3879 = vmatprep.mubr.f32.mxu0 0.0
        %3880 = vmatmul.mubr.f32.gmra.mrb[0].mxu0 %v3813
        %v3881 = vpop.f32.mrb[0].mxu0
        %v3882 = vadd.f32 0.0, %v3881
        %v3883 = vpop.f32.mrb[0].mxu0
        %3884 = vdwg.mxu0
        %v3885 = vmul.f32 %v2742, %v830
        %v3886 = vmul.f32 %v2818, %v830
        %v3887 = vmul.f32 %v2894, %v830
        %v3888 = vmul.f32 %v2970, %v830
        %v3889 = vmul.f32 %v3046, %v830
        %v3890 = vmul.f32 %v3122, %v830
        %v3891 = vmul.f32 %v3198, %v830
        %v3892 = vmul.f32 %v3274, %v830
        %v3893 = vmul.f32 %v3350, %v830
        %v3894 = vmul.f32 %v3426, %v830
        %v3895 = vmul.f32 %v3502, %v830
        %v3896 = vmul.f32 %v3578, %v830
        %v3897 = vmul.f32 %v3654, %v830
        %v3898 = vmul.f32 %v3730, %v830
        %v3899 = vmul.f32 %v3806, %v830
        %v3900 = vmul.f32 %v3882, %v830
        %vm3901 = vcmask 254976
        %v3902 = vsel %vm3901, %v3885, 0.0
        %v3903 = vrot.slane %v3902, 4
        %v3904 = vadd.f32 %v3902, %v3903
        %v3905 = vrot.slane %v3904, 2
        %v3906 = vadd.f32 %v3904, %v3905
        %v3907 = vrot.slane %v3906, 1
        %v3908 = vadd.f32 %v3906, %v3907
        %v3909 = vsel %vm3901, %v3886, 0.0
        %v3910 = vrot.slane %v3909, 4
        %v3911 = vadd.f32 %v3909, %v3910
        %v3912 = vrot.slane %v3911, 2
        %v3913 = vadd.f32 %v3911, %v3912
        %v3914 = vrot.slane %v3913, 1
        %v3915 = vadd.f32 %v3913, %v3914
        %v3916 = vsel %vm3901, %v3887, 0.0
        %v3917 = vrot.slane %v3916, 4
        %v3918 = vadd.f32 %v3916, %v3917
        %v3919 = vrot.slane %v3918, 2
        %v3920 = vadd.f32 %v3918, %v3919
        %v3921 = vrot.slane %v3920, 1
        %v3922 = vadd.f32 %v3920, %v3921
        %v3923 = vsel %vm3901, %v3888, 0.0
        %v3924 = vrot.slane %v3923, 4
        %v3925 = vadd.f32 %v3923, %v3924
        %v3926 = vrot.slane %v3925, 2
        %v3927 = vadd.f32 %v3925, %v3926
        %v3928 = vrot.slane %v3927, 1
        %v3929 = vadd.f32 %v3927, %v3928
        %v3930 = vsel %vm3901, %v3889, 0.0
        %v3931 = vrot.slane %v3930, 4
        %v3932 = vadd.f32 %v3930, %v3931
        %v3933 = vrot.slane %v3932, 2
        %v3934 = vadd.f32 %v3932, %v3933
        %v3935 = vrot.slane %v3934, 1
        %v3936 = vadd.f32 %v3934, %v3935
        %v3937 = vsel %vm3901, %v3890, 0.0
        %v3938 = vrot.slane %v3937, 4
        %v3939 = vadd.f32 %v3937, %v3938
        %v3940 = vrot.slane %v3939, 2
        %v3941 = vadd.f32 %v3939, %v3940
        %v3942 = vrot.slane %v3941, 1
        %v3943 = vadd.f32 %v3941, %v3942
        %v3944 = vsel %vm3901, %v3891, 0.0
        %v3945 = vrot.slane %v3944, 4
        %v3946 = vadd.f32 %v3944, %v3945
        %v3947 = vrot.slane %v3946, 2
        %v3948 = vadd.f32 %v3946, %v3947
        %v3949 = vrot.slane %v3948, 1
        %v3950 = vadd.f32 %v3948, %v3949
        %v3951 = vsel %vm3901, %v3892, 0.0
        %v3952 = vrot.slane %v3951, 4
        %v3953 = vadd.f32 %v3951, %v3952
        %v3954 = vrot.slane %v3953, 2
        %v3955 = vadd.f32 %v3953, %v3954
        %v3956 = vrot.slane %v3955, 1
        %v3957 = vadd.f32 %v3955, %v3956
        %v3958 = vsel %vm3901, %v3893, 0.0
        %v3959 = vrot.slane %v3958, 4
        %v3960 = vadd.f32 %v3958, %v3959
        %v3961 = vrot.slane %v3960, 2
        %v3962 = vadd.f32 %v3960, %v3961
        %v3963 = vrot.slane %v3962, 1
        %v3964 = vadd.f32 %v3962, %v3963
        %v3965 = vsel %vm3901, %v3894, 0.0
        %v3966 = vrot.slane %v3965, 4
        %v3967 = vadd.f32 %v3965, %v3966
        %v3968 = vrot.slane %v3967, 2
        %v3969 = vadd.f32 %v3967, %v3968
        %v3970 = vrot.slane %v3969, 1
        %v3971 = vadd.f32 %v3969, %v3970
        %v3972 = vsel %vm3901, %v3895, 0.0
        %v3973 = vrot.slane %v3972, 4
        %v3974 = vadd.f32 %v3972, %v3973
        %v3975 = vrot.slane %v3974, 2
        %v3976 = vadd.f32 %v3974, %v3975
        %v3977 = vrot.slane %v3976, 1
        %v3978 = vadd.f32 %v3976, %v3977
        %v3979 = vsel %vm3901, %v3896, 0.0
        %v3980 = vrot.slane %v3979, 4
        %v3981 = vadd.f32 %v3979, %v3980
        %v3982 = vrot.slane %v3981, 2
        %v3983 = vadd.f32 %v3981, %v3982
        %v3984 = vrot.slane %v3983, 1
        %v3985 = vadd.f32 %v3983, %v3984
        %v3986 = vsel %vm3901, %v3897, 0.0
        %v3987 = vrot.slane %v3986, 4
        %v3988 = vadd.f32 %v3986, %v3987
        %v3989 = vrot.slane %v3988, 2
        %v3990 = vadd.f32 %v3988, %v3989
        %v3991 = vrot.slane %v3990, 1
        %v3992 = vadd.f32 %v3990, %v3991
        %v3993 = vsel %vm3901, %v3898, 0.0
        %v3994 = vrot.slane %v3993, 4
        %v3995 = vadd.f32 %v3993, %v3994
        %v3996 = vrot.slane %v3995, 2
        %v3997 = vadd.f32 %v3995, %v3996
        %v3998 = vrot.slane %v3997, 1
        %v3999 = vadd.f32 %v3997, %v3998
        %v4000 = vsel %vm3901, %v3899, 0.0
        %v4001 = vrot.slane %v4000, 4
        %v4002 = vadd.f32 %v4000, %v4001
        %v4003 = vrot.slane %v4002, 2
        %v4004 = vadd.f32 %v4002, %v4003
        %v4005 = vrot.slane %v4004, 1
        %v4006 = vadd.f32 %v4004, %v4005
        %v4007 = vsel %vm3901, %v3900, 0.0
        %v4008 = vrot.slane %v4007, 4
        %v4009 = vadd.f32 %v4007, %v4008
        %v4010 = vrot.slane %v4009, 2
        %v4011 = vadd.f32 %v4009, %v4010
        %v4012 = vrot.slane %v4011, 1
        %v4013 = vadd.f32 %v4011, %v4012
        %v4014 = vpack.c.bf16 %v3908, %v3908
        %v4015 = vpack.c.bf16 %v3915, %v3915
        %v4016 = vpack.c.bf16 %v3922, %v3922
        %v4017 = vpack.c.bf16 %v3929, %v3929
        %v4018 = vpack.c.bf16 %v3936, %v3936
        %v4019 = vpack.c.bf16 %v3943, %v3943
        %v4020 = vpack.c.bf16 %v3950, %v3950
        %v4021 = vpack.c.bf16 %v3957, %v3957
        %v4022 = vpack.c.bf16 %v3964, %v3964
        %v4023 = vpack.c.bf16 %v3971, %v3971
        %v4024 = vpack.c.bf16 %v3978, %v3978
        %v4025 = vpack.c.bf16 %v3985, %v3985
        %v4026 = vpack.c.bf16 %v3992, %v3992
        %v4027 = vpack.c.bf16 %v3999, %v3999
        %v4028 = vpack.c.bf16 %v4006, %v4006
        %v4029 = vpack.c.bf16 %v4013, %v4013
        %v4030 = vld [vmem:[#allocation16] sm:$0xf]
        %v4031 = vld [vmem:[#allocation16 + $0x4] sm:$0xf]
        %v4032 = vld [vmem:[#allocation16 + $0x8] sm:$0xf]
        %v4033 = vld [vmem:[#allocation16 + $0xc] sm:$0xf]
        %v4034 = vld [vmem:[#allocation17] sm:$0x1]
        %v4036 = vlaneseq
        %v4037 = vshrl.u32 %v4036, 7
        %v4038 = vsub.s32 0, %v4037
        %v4039 = vrot.slane %v4034, %v4038
        %v4057 = vunpack.c.l.b16 %v4014
        %v4058 = vunpack.c.l.b16 %v4015
        %v4059 = vunpack.c.l.b16 %v4016
        %v4060 = vunpack.c.l.b16 %v4017
        %v4061 = vunpack.c.l.b16 %v4018
        %v4062 = vunpack.c.l.b16 %v4019
        %v4063 = vunpack.c.l.b16 %v4020
        %v4064 = vunpack.c.l.b16 %v4021
        %v4065 = vunpack.c.l.b16 %v4022
        %v4066 = vunpack.c.l.b16 %v4023
        %v4067 = vunpack.c.l.b16 %v4024
        %v4068 = vunpack.c.l.b16 %v4025
        %v4069 = vunpack.c.l.b16 %v4026
        %v4070 = vunpack.c.l.b16 %v4027
        %v4071 = vunpack.c.l.b16 %v4028
        %v4072 = vunpack.c.l.b16 %v4029
        %vm4073 = vcmask 1041409
        %v4074 = vsel %vm4073, %v4058, %v4057
        %vm4075 = vcmask 1042434
        %v4076 = vsel %vm4075, %v4059, %v4074
        %vm4077 = vcmask 1043459
        %v4078 = vsel %vm4077, %v4060, %v4076
        %vm4079 = vcmask 1044484
        %v4080 = vsel %vm4079, %v4061, %v4078
        %vm4081 = vcmask 1045509
        %v4082 = vsel %vm4081, %v4062, %v4080
        %vm4083 = vcmask 1046534
        %v4084 = vsel %vm4083, %v4063, %v4082
        %vm4085 = vcmask 1047559
        %v4086 = vsel %vm4085, %v4064, %v4084
        %v4087 = vsel %vm4073, %v4066, %v4065
        %v4088 = vsel %vm4075, %v4067, %v4087
        %v4089 = vsel %vm4077, %v4068, %v4088
        %v4090 = vsel %vm4079, %v4069, %v4089
        %v4091 = vsel %vm4081, %v4070, %v4090
        %v4092 = vsel %vm4083, %v4071, %v4091
        %v4093 = vsel %vm4085, %v4072, %v4092
        %v4094 = vpack.c.b16 %v4093, %v4086
        %v4099 = vunpack.c.l.b16 %v4030
        %v4100 = vunpack.c.l.b16 %v4031
        %v4101 = vunpack.c.l.b16 %v4032
        %v4102 = vunpack.c.l.b16 %v4033
        %v4103 = vpack.c.b16 %v4100, %v4099
        %v4104 = vpack.c.b16 %v4102, %v4101
        %v4108 = vsel %vm708, %v4094, 0
        %4110 = vmatprep.subr.bf16.mxu0 0
        %4111 = vmatpush1.bf16.msra.mxu0 %v4103
        %4112 = vmatprep.subr.bf16.mxu0 0
        %4113 = vmatpush1.bf16.msra.mxu0 %v4104
        %4114 = vmatprep.subr.bf16.mxu0 0
        %4115 = vmatpush1.bf16.msra.mxu0 0
        %4116 = vmatprep.subr.bf16.mxu0 0
        %4117 = vmatpush1.bf16.msra.mxu0 0
        %4118 = vmatprep.subr.bf16.mxu0 0
        %4119 = vmatpush1.bf16.msra.mxu0 0
        %4120 = vmatprep.subr.bf16.mxu0 0
        %4121 = vmatpush1.bf16.msra.mxu0 0
        %4122 = vmatprep.subr.bf16.mxu0 0
        %4123 = vmatpush1.bf16.msra.mxu0 0
        %4124 = vmatprep.subr.bf16.mxu0 0
        %4125 = vmatpush1.bf16.msra.mxu0 0
        %4126 = vmatprep.subr.bf16.mxu0 0
        %4127 = vmatpush1.bf16.msra.mxu0 0
        %4128 = vmatprep.subr.bf16.mxu0 0
        %4129 = vmatpush1.bf16.msra.mxu0 0
        %4130 = vmatprep.subr.bf16.mxu0 0
        %4131 = vmatpush1.bf16.msra.mxu0 0
        %4132 = vmatprep.subr.bf16.mxu0 0
        %4133 = vmatpush1.bf16.msra.mxu0 0
        %4134 = vmatprep.subr.bf16.mxu0 0
        %4135 = vmatpush1.bf16.msra.mxu0 0
        %4136 = vmatprep.subr.bf16.mxu0 0
        %4137 = vmatpush1.bf16.msra.mxu0 0
        %4138 = vmatprep.subr.bf16.mxu0 0
        %4139 = vmatpush1.bf16.msra.mxu0 0
        %4140 = vmatprep.subr.bf16.mxu0 0
        %4141 = vmatpush1.bf16.msra.mxu0 0
        %4142 = vmatprep.mubr.bf16.mxu0 0
        %4143 = vmatmul.mubr.bf16.gmra.mrb[0].mxu0 %v4108
        %v4144 = vpop.f32.mrb[0].mxu0
        %v4145 = vadd.f32 %v4039, %v4144
        %v4146 = vpop.f32.mrb[0].mxu0
        %v4147 = vpop.f32.mrb[0].mxu0
        %v4148 = vadd.f32 %v4039, %v4147
        %v4149 = vpop.f32.mrb[0].mxu0
        %4150 = vdwg.mxu0
        %4151 = vst [vmem:[%s548] sm:$0xff] %v4145
        %4152 = vst [vmem:[%s548 + $0x8] sm:$0xff] %v4148
        %s4153 = sand.u32 %s267, 1
        %s4154 = scalar_lea.sflag [#allocation4], %s4153
        %s4155 = sand.u32 %s267, 1
        %s4156 = smul.addr %s4155, 16
        %s4157 = scalar_lea.vmem [#allocation19], %s4156
        // Predicated region
        $region101: #{tpu_custom_call.1} parent=59 // pred_check
          %p4158 = pneg %p277
        $region102: #{tpu_custom_call.1} parent=59 // pred_check_branch
          %4160 = sbr.rel (%p4158) target = $region104
        $region103: #{tpu_custom_call.1} parent=59 // pred_region
          %s4161 = smul.u32 2, %s34
          %s4163 = ssub.s32 256, 256
          %4164 = vsyncadd %s4154, %s4163
          %s4165 = smul.addr %s4161, 128
          %s4166 = scalar_lea.hbm %s10, %s4165
          %s4167 = sshll.u32 %s4157, 4
          %s4168 = int_to_ptr.vmem [resolvable:$true] %s4167
          %4173 = dma.vmem_to_hbm [thread:$0]  %s4168, 256, %s4166, %s4154, 128, 128, 8
        $region104: #{tpu_custom_call.1} parent=59 // pred_fallthru
          _
      $region60: #{tpu_custom_call.1} parent=5 // pred_fallthru
        _
      %p4174 = scmp.le.s32.totalorder 2, %s29
      // Predicated region
      $region105: #{tpu_custom_call.1} parent=5 // pred_check
        %p4175 = pneg %p4174
      $region106: #{tpu_custom_call.1} parent=5 // pred_check_branch
        %4177 = sbr.rel (%p4175) target = $region108
      $region107: #{tpu_custom_call.1} parent=5 // pred_region
        %s4178 = ssub.s32 %s29, 2
        // Predicated region
        $region109: #{tpu_custom_call.1} parent=107 // pred_check
          %p4179 = pneg %p283
        $region110: #{tpu_custom_call.1} parent=107 // pred_check_branch
          %4181 = sbr.rel (%p4179) target = $region112
        $region111: #{tpu_custom_call.1} parent=107 // pred_region
          %s4182 = sand.u32 %s268, 1
          %s4183 = scalar_lea.sflag [#allocation4], %s4182
          %s4184 = sand.u32 %s268, 1
          %s4185 = smul.addr %s4184, 16
          %s4186 = scalar_lea.vmem [#allocation19], %s4185
          %4187 = dma.done %s4183, 256
        $region112: #{tpu_custom_call.1} parent=107 // pred_fallthru
          _
      $region108: #{tpu_custom_call.1} parent=5 // pred_fallthru
        _
    $region6: #{tpu_custom_call.1} parent=1 // loop_footer
      %s33 = sadd.s32 1, %s29
    $region7: #{tpu_custom_call.1} parent=1 // loop_footer_branch
      %28 = sbr.rel target = $region3
    $region8: #{tpu_custom_call.1} parent=1 // loop_exit
      _
    %4188 = vsyncpa [#allocation3], 1
    %s4189 = scalar_lea.sflag [#allocation3], 1
    %4190 = vsyncpa %s4189, 1
    %4191 = vsyncpa [#allocation6], 1
    %s4192 = scalar_lea.sflag [#allocation6], 1
    %4193 = vsyncpa %s4192, 1
    %4194 = vsyncpa [#allocation9], 1
    %4195 = vsyncpa [#allocation12], 1
    %4196 = vsyncpa [#allocation15], 1
    %4197 = vsyncpa [#allocation18], 1
    %4198 = vsyncpa [#allocation4], 1
    %s4199 = scalar_lea.sflag [#allocation4], 1
    %4200 = vsyncpa %s4199, 1

</llo_original>
